<compile_context>
chip_gen: v7x
topology: tpu7x:2x2x1
jax: 0.10.0
libtpu: 0.0.40
codegen_flags: <defaults>
</compile_context>

<pallas_src>
import jax
import jax.numpy as jnp
from jax.experimental import pallas as pl
from jax.experimental.pallas import tpu as pltpu

CLAMP = 0.8           # clamp from InvBlock.__init__
CHANNELS = 3          # in_channels of InvertibleConv1x1 -> channel_num = 3
SPLIT1 = 1            # channel_split_num
SPLIT2 = CHANNELS - SPLIT1
HIDDEN = 32           # hidden width of the synthetic subnet

LANES = 128
SUBLANES = 8
MAX_ROWS_PER_TILE = 256   # 256 rows x 128 lanes x 3ch x 4B = 384 KiB per operand block
CHUNK_ROWS = 32           # in-kernel row chunk: caps live vregs at ~32/64
MIN_GRID_STEPS = 8        # feed both v7x TensorCores + the DMA pipeline


def _build_offsets():
    """Flat offsets of every parameter inside the packed SMEM theta vector."""
    sizes = (
        ("winv", CHANNELS * CHANNELS),
        ("wf1", HIDDEN * SPLIT2), ("bf1", HIDDEN), ("wf2", SPLIT1 * HIDDEN), ("bf2", SPLIT1),
        ("wg1", HIDDEN * SPLIT1), ("bg1", HIDDEN), ("wg2", SPLIT2 * HIDDEN), ("bg2", SPLIT2),
        ("wh1", HIDDEN * SPLIT1), ("bh1", HIDDEN), ("wh2", SPLIT2 * HIDDEN), ("bh2", SPLIT2),
    )
    off, cur = {}, 0
    for name, sz in sizes:
        off[name] = cur
        cur += sz
    return off, cur


OFF, THETA_SIZE = _build_offsets()


def _make_kernel(r_tile, chunk):
    """Kernel for one (batch, row-tile) grid step; tile is walked in row chunks."""
    n_chunks = r_tile // chunk

    ow = OFF["winv"]
    owf1, obf1, owf2, obf2 = OFF["wf1"], OFF["bf1"], OFF["wf2"], OFF["bf2"]
    owg1, obg1, owg2, obg2 = OFF["wg1"], OFF["bg1"], OFF["wg2"], OFF["bg2"]
    owh1, obh1, owh2, obh2 = OFF["wh1"], OFF["bh1"], OFF["wh2"], OFF["bh2"]

    def kernel(theta_ref, x_ref, out_ref):
        def t(i):                      # scalar read from the SMEM theta vector
            return theta_ref[i]

        def chunk_body(r0):
            rows = pl.ds(r0, chunk)
            x0 = x_ref[0, 0, rows, :]
            x1 = x_ref[0, 1, rows, :]
            x2 = x_ref[0, 2, rows, :]

            # Invertible 1x1 conv (flow permutation): z = W_inv @ x over channels.
            z0 = t(ow + 0) * x0 + t(ow + 1) * x1 + t(ow + 2) * x2
            z1 = t(ow + 3) * x0 + t(ow + 4) * x1 + t(ow + 5) * x2
            z2 = t(ow + 6) * x0 + t(ow + 7) * x1 + t(ow + 8) * x2

            # y1 = z0 + F(z1, z2);   F: 2 -> HIDDEN -> 1 (1x1 conv, ReLU, 1x1 conv).
            f_acc = jnp.full_like(z0, t(obf2))
            for k in range(HIDDEN):
                h = jnp.maximum(
                    t(owf1 + 2 * k) * z1 + t(owf1 + 2 * k + 1) * z2 + t(obf1 + k), 0.0)
                f_acc = f_acc + t(owf2 + k) * h
            y1 = z0 + f_acc
            out_ref[0, 0, rows, :] = y1.astype(out_ref.dtype)

            # H: 1 -> HIDDEN -> 2.  wh2/bh2 were pre-scaled by 0.5 host-side, so
            # clamp*(2*sigmoid(H(y1)) - 1) == clamp*tanh(h_out).
            h_out0 = jnp.full_like(y1, t(obh2 + 0))
            h_out1 = jnp.full_like(y1, t(obh2 + 1))
            for k in range(HIDDEN):
                th = jnp.maximum(t(owh1 + k) * y1 + t(obh1 + k), 0.0)
                h_out0 = h_out0 + t(owh2 + k) * th             # 0.5 * wh2[0, k]
                h_out1 = h_out1 + t(owh2 + HIDDEN + k) * th    # 0.5 * wh2[1, k]
            # Fold z1/z2 into y2 now so z1, z2, h_out* are dead before the G phase
            # (keeps the live set ~8 arrays -> no vreg spills).
            y2a = z1 * jnp.exp(CLAMP * jnp.tanh(h_out0))
            y2b = z2 * jnp.exp(CLAMP * jnp.tanh(h_out1))

            # G: 1 -> HIDDEN -> 2.
            g_out0 = jnp.full_like(y1, t(obg2 + 0))
            g_out1 = jnp.full_like(y1, t(obg2 + 1))
            for k in range(HIDDEN):
                tg = jnp.maximum(t(owg1 + k) * y1 + t(obg1 + k), 0.0)
                g_out0 = g_out0 + t(owg2 + k) * tg             # wg2[0, k]
                g_out1 = g_out1 + t(owg2 + HIDDEN + k) * tg    # wg2[1, k]

            # Lane-dense (128-wide) per-channel stores.
            out_ref[0, 1, rows, :] = (y2a + g_out0).astype(out_ref.dtype)
            out_ref[0, 2, rows, :] = (y2b + g_out1).astype(out_ref.dtype)

        if n_chunks == 1:
            chunk_body(0)                       # static slice, no loop overhead
        else:
            @pl.loop(0, n_chunks)
            def _(ci):
                chunk_body(pl.multiple_of(ci * chunk, chunk))

    return kernel


def _choose_row_tile(n_batch, r_total):
    """Row tile: multiple of 8 dividing r_total (or small full extent), <= MAX."""
    if r_total <= MAX_ROWS_PER_TILE and r_total % SUBLANES != 0:
        return r_total                                    # small full-extent block
    cands = [d for d in range(SUBLANES, min(r_total, MAX_ROWS_PER_TILE) + 1, SUBLANES)
             if r_total % d == 0]
    # If even maximal splitting cannot feed the pipeline/megacore, minimize
    # per-step overhead with the largest tile instead.
    if n_batch * (r_total // cands[0]) < MIN_GRID_STEPS:
        return cands[-1]
    for d in reversed(cands):
        if n_batch * (r_total // d) >= MIN_GRID_STEPS:
            return d
    return cands[0]


def _chunk_rows(r_tile):
    for c in (CHUNK_ROWS, 16, 8):
        if r_tile >= c and r_tile % c == 0:
            return c
    return r_tile


def _plan_tiling(n_batch, hw):
    """Returns (hw_pad, r_total, r_tile); pads pixels so tiles stay bounded."""
    r_total = pl.cdiv(hw, LANES)
    if r_total > MAX_ROWS_PER_TILE and r_total % 64 != 0:
        # Big images: pad rows to a multiple of 64 so a large bounded tile divides.
        r_total = pl.cdiv(r_total, 64) * 64
    hw_pad = r_total * LANES
    return hw_pad, r_total, _choose_row_tile(n_batch, r_total)


def flatten_params(params):
    """Pack all weights/biases into one flat f32 vector (order matches OFF).

    The 0.5 of the identity 2*sigmoid(v) - 1 == tanh(v/2) is folded into H's
    output layer (wh2, bh2), so the kernel evaluates clamp * tanh(h_out) directly.
    """
    (winv, wf1, bf1, wf2, bf2, wg1, bg1, wg2, bg2, wh1, bh1, wh2, bh2) = params
    packed = (winv, wf1, bf1, wf2, bf2, wg1, bg1, wg2, bg2,
              wh1, bh1, 0.5 * wh2, 0.5 * bh2)
    theta = jnp.concatenate([jnp.ravel(p).astype(jnp.float32) for p in packed])
    assert theta.shape[0] == THETA_SIZE
    return theta


def invblock_forward(x_nchw, params):
    N, C, H, W = x_nchw.shape
    assert C == CHANNELS, "InvertibleConv1x1 in the reference module is 3-channel"
    hw = H * W
    hw_pad, r_total, r_tile = _plan_tiling(N, hw)
    chunk = _chunk_rows(r_tile)

    xf = x_nchw.reshape(N, C, hw)                  # free reshape (contiguous NCHW)
    if hw_pad != hw:
        xf = jnp.pad(xf, ((0, 0), (0, 0), (0, hw_pad - hw)))
    x4 = xf.reshape(N, C, r_total, LANES)
    theta = flatten_params(params)

    grid = (N, r_total // r_tile)
    blk = pl.BlockSpec((1, C, r_tile, LANES), lambda n, r, theta_ref: (n, 0, r, 0))

    out4 = pl.pallas_call(
        _make_kernel(r_tile, chunk),
        out_shape=jax.ShapeDtypeStruct((N, C, r_total, LANES), jnp.float32),
        grid_spec=pltpu.PrefetchScalarGridSpec(
            num_scalar_prefetch=1,          # theta resident in SMEM for the whole grid
            grid=grid,
            in_specs=[blk],
            out_specs=blk,
        ),
        compiler_params=pltpu.CompilerParams(
            dimension_semantics=("parallel", "parallel")),
    )(theta, x4)

    out = out4.reshape(N, C, hw_pad)
    if hw_pad != hw:
        out = out[:, :, :hw]
    return out.reshape(N, C, H, W)


def make_params(key):
    """Deterministic parameter construction (shapes implied by __init__)."""
    keys = jax.random.split(key, 8)

    # InvertibleConv1x1 with LU parameterization: W = P (L + I) (U + diag(sign_s*exp(log_s)))
    w0 = jax.random.normal(keys[0], (CHANNELS, CHANNELS), jnp.float32)
    q, _ = jnp.linalg.qr(w0)                       # random orthogonal init
    p, l, u = jax.scipy.linalg.lu(q)
    s_diag = jnp.diag(u)
    sign_s = jnp.sign(s_diag)
    log_s = jnp.log(jnp.abs(s_diag))
    upper = jnp.triu(u, 1)
    l_mask = jnp.tril(jnp.ones((CHANNELS, CHANNELS), jnp.float32), -1)
    winv = p @ (l * l_mask + jnp.eye(CHANNELS)) @ (upper + jnp.diag(sign_s * jnp.exp(log_s)))
    winv = winv.astype(jnp.float32)

    def subnet_params(k, cin, cout):
        k1, k2, k3, k4 = jax.random.split(k, 4)
        w1 = 0.1 * jax.random.normal(k1, (HIDDEN, cin), jnp.float32)
        b1 = 0.05 * jax.random.normal(k2, (HIDDEN, 1), jnp.float32)
        w2 = 0.1 * jax.random.normal(k3, (cout, HIDDEN), jnp.float32)
        b2 = 0.05 * jax.random.normal(k4, (cout, 1), jnp.float32)
        return w1, b1, w2, b2

    wf1, bf1, wf2, bf2 = subnet_params(keys[1], SPLIT2, SPLIT1)   # F: 2 -> 1
    wg1, bg1, wg2, bg2 = subnet_params(keys[2], SPLIT1, SPLIT2)   # G: 1 -> 2
    wh1, bh1, wh2, bh2 = subnet_params(keys[3], SPLIT1, SPLIT2)   # H: 1 -> 2
    return (winv, wf1, bf1, wf2, bf2, wg1, bg1, wg2, bg2, wh1, bh1, wh2, bh2)


def invblock_reference(x_nchw, params):
    """Pure-JAX reference mirroring the PyTorch forward (rev=False)."""
    (winv, wf1, bf1, wf2, bf2, wg1, bg1, wg2, bg2, wh1, bh1, wh2, bh2) = params

    def conv1x1(w, t):                      # NCHW 1x1 conv == channel matmul
        return jnp.einsum('oc,nchw->nohw', w, t)

    def subnet(w1, b1, w2, b2, t):
        h = conv1x1(w1, t) + b1[:, 0][None, :, None, None]
        h = jnp.maximum(h, 0.0)
        return conv1x1(w2, h) + b2[:, 0][None, :, None, None]

    z = conv1x1(winv, x_nchw)
    x1, x2 = z[:, :SPLIT1], z[:, SPLIT1:]
    y1 = x1 + subnet(wf1, bf1, wf2, bf2, x2)
    s = CLAMP * (jax.nn.sigmoid(subnet(wh1, bh1, wh2, bh2, y1)) * 2.0 - 1.0)
    y2 = x2 * jnp.exp(s) + subnet(wg1, bg1, wg2, bg2, y1)
    return jnp.concatenate([y1, y2], axis=1)


if __name__ == "__main__":
    key = jax.random.PRNGKey(0)
    k_x, k_p = jax.random.split(key)
    params = make_params(k_p)

    # Primary small test (NCHW, 3 channels as implied by InvertibleConv1x1(3)).
    x = jax.random.normal(k_x, (2, 3, 16, 16), jnp.float32)
    out = jax.block_until_ready(invblock_forward(x, params))
    ref = invblock_reference(x, params)
    assert out.shape == (2, 3, 16, 16)
    assert jnp.allclose(out, ref, atol=1e-4, rtol=1e-4), "kernel/reference mismatch"

    # Exercise (a) the odd-size zero-padding path and (b) the multi-chunk pl.loop path.
    for shp in ((1, 3, 17, 19), (1, 3, 256, 256)):
        xi = jax.random.normal(jax.random.PRNGKey(1), shp, jnp.float32)
        oi = jax.block_until_ready(invblock_forward(xi, params))
        ri = invblock_reference(xi, params)
        assert jnp.allclose(oi, ri, atol=1e-4, rtol=1e-4), f"mismatch at {shp}"

    print("KERNEL_OK")
</pallas_src>

<mosaic_0001>
module attributes {stable_mosaic.version = 11 : i64} {
  func.func @kernel(%arg0: i32, %arg1: i32, %arg2: memref<398xf32, #tpu.memory_space<smem>>, %arg3: memref<1x3x2x128xf32, #tpu.memory_space<vmem>>, %arg4: memref<1x3x2x128xf32, #tpu.memory_space<vmem>>) attributes {dimension_semantics = [#tpu.dimension_semantics<parallel>, #tpu.dimension_semantics<parallel>], iteration_bounds = array<i64: 2, 1>, scalar_prefetch = 1 : i64, scratch_operands = 0 : i64, tpu.core_type = #tpu.core_type<tc>, window_params = [{transform_indices = @transform_0, window_bounds = array<i64: 1, 3, 2, 128>}, {transform_indices = @transform_1, window_bounds = array<i64: 1, 3, 2, 128>}]} {
    %c0 = arith.constant 0 : index
    %c0_0 = arith.constant 0 : index
    %c0_1 = arith.constant 0 : index
    %c0_2 = arith.constant 0 : index
    %0 = vector.load %arg3[%c0, %c0_0, %c0_1, %c0_2] : memref<1x3x2x128xf32, #tpu.memory_space<vmem>>, vector<1x1x2x128xf32>
    %1 = vector.shape_cast %0 : vector<1x1x2x128xf32> to vector<2x128xf32>
    %c0_3 = arith.constant 0 : index
    %c1 = arith.constant 1 : index
    %c0_4 = arith.constant 0 : index
    %c0_5 = arith.constant 0 : index
    %2 = vector.load %arg3[%c0_3, %c1, %c0_4, %c0_5] : memref<1x3x2x128xf32, #tpu.memory_space<vmem>>, vector<1x1x2x128xf32>
    %3 = vector.shape_cast %2 : vector<1x1x2x128xf32> to vector<2x128xf32>
    %c0_6 = arith.constant 0 : index
    %c2 = arith.constant 2 : index
    %c0_7 = arith.constant 0 : index
    %c0_8 = arith.constant 0 : index
    %4 = vector.load %arg3[%c0_6, %c2, %c0_7, %c0_8] : memref<1x3x2x128xf32, #tpu.memory_space<vmem>>, vector<1x1x2x128xf32>
    %5 = vector.shape_cast %4 : vector<1x1x2x128xf32> to vector<2x128xf32>
    %c0_9 = arith.constant 0 : index
    %6 = memref.load %arg2[%c0_9] : memref<398xf32, #tpu.memory_space<smem>>
    %7 = vector.broadcast %6 : f32 to vector<2x128xf32>
    %8 = arith.mulf %7, %1 : vector<2x128xf32>
    %c1_10 = arith.constant 1 : index
    %9 = memref.load %arg2[%c1_10] : memref<398xf32, #tpu.memory_space<smem>>
    %10 = vector.broadcast %9 : f32 to vector<2x128xf32>
    %11 = arith.mulf %10, %3 : vector<2x128xf32>
    %12 = arith.addf %8, %11 : vector<2x128xf32>
    %c2_11 = arith.constant 2 : index
    %13 = memref.load %arg2[%c2_11] : memref<398xf32, #tpu.memory_space<smem>>
    %14 = vector.broadcast %13 : f32 to vector<2x128xf32>
    %15 = arith.mulf %14, %5 : vector<2x128xf32>
    %16 = arith.addf %12, %15 : vector<2x128xf32>
    %c3 = arith.constant 3 : index
    %17 = memref.load %arg2[%c3] : memref<398xf32, #tpu.memory_space<smem>>
    %18 = vector.broadcast %17 : f32 to vector<2x128xf32>
    %19 = arith.mulf %18, %1 : vector<2x128xf32>
    %c4 = arith.constant 4 : index
    %20 = memref.load %arg2[%c4] : memref<398xf32, #tpu.memory_space<smem>>
    %21 = vector.broadcast %20 : f32 to vector<2x128xf32>
    %22 = arith.mulf %21, %3 : vector<2x128xf32>
    %23 = arith.addf %19, %22 : vector<2x128xf32>
    %c5 = arith.constant 5 : index
    %24 = memref.load %arg2[%c5] : memref<398xf32, #tpu.memory_space<smem>>
    %25 = vector.broadcast %24 : f32 to vector<2x128xf32>
    %26 = arith.mulf %25, %5 : vector<2x128xf32>
    %27 = arith.addf %23, %26 : vector<2x128xf32>
    %c6 = arith.constant 6 : index
    %28 = memref.load %arg2[%c6] : memref<398xf32, #tpu.memory_space<smem>>
    %29 = vector.broadcast %28 : f32 to vector<2x128xf32>
    %30 = arith.mulf %29, %1 : vector<2x128xf32>
    %c7 = arith.constant 7 : index
    %31 = memref.load %arg2[%c7] : memref<398xf32, #tpu.memory_space<smem>>
    %32 = vector.broadcast %31 : f32 to vector<2x128xf32>
    %33 = arith.mulf %32, %3 : vector<2x128xf32>
    %34 = arith.addf %30, %33 : vector<2x128xf32>
    %c8 = arith.constant 8 : index
    %35 = memref.load %arg2[%c8] : memref<398xf32, #tpu.memory_space<smem>>
    %36 = vector.broadcast %35 : f32 to vector<2x128xf32>
    %37 = arith.mulf %36, %5 : vector<2x128xf32>
    %38 = arith.addf %34, %37 : vector<2x128xf32>
    %c137 = arith.constant 137 : index
    %39 = memref.load %arg2[%c137] : memref<398xf32, #tpu.memory_space<smem>>
    %40 = vector.broadcast %39 : f32 to vector<2x128xf32>
    %c9 = arith.constant 9 : index
    %41 = memref.load %arg2[%c9] : memref<398xf32, #tpu.memory_space<smem>>
    %42 = vector.broadcast %41 : f32 to vector<2x128xf32>
    %43 = arith.mulf %42, %27 : vector<2x128xf32>
    %c10 = arith.constant 10 : index
    %44 = memref.load %arg2[%c10] : memref<398xf32, #tpu.memory_space<smem>>
    %45 = vector.broadcast %44 : f32 to vector<2x128xf32>
    %46 = arith.mulf %45, %38 : vector<2x128xf32>
    %47 = arith.addf %43, %46 : vector<2x128xf32>
    %c73 = arith.constant 73 : index
    %48 = memref.load %arg2[%c73] : memref<398xf32, #tpu.memory_space<smem>>
    %49 = vector.broadcast %48 : f32 to vector<2x128xf32>
    %50 = arith.addf %47, %49 : vector<2x128xf32>
    %cst = arith.constant 0.000000e+00 : f32
    %51 = vector.broadcast %cst : f32 to vector<2x128xf32>
    %52 = arith.maximumf %50, %51 : vector<2x128xf32>
    %c105 = arith.constant 105 : index
    %53 = memref.load %arg2[%c105] : memref<398xf32, #tpu.memory_space<smem>>
    %54 = vector.broadcast %53 : f32 to vector<2x128xf32>
    %55 = arith.mulf %54, %52 : vector<2x128xf32>
    %56 = arith.addf %40, %55 : vector<2x128xf32>
    %c11 = arith.constant 11 : index
    %57 = memref.load %arg2[%c11] : memref<398xf32, #tpu.memory_space<smem>>
    %58 = vector.broadcast %57 : f32 to vector<2x128xf32>
    %59 = arith.mulf %58, %27 : vector<2x128xf32>
    %c12 = arith.constant 12 : index
    %60 = memref.load %arg2[%c12] : memref<398xf32, #tpu.memory_space<smem>>
    %61 = vector.broadcast %60 : f32 to vector<2x128xf32>
    %62 = arith.mulf %61, %38 : vector<2x128xf32>
    %63 = arith.addf %59, %62 : vector<2x128xf32>
    %c74 = arith.constant 74 : index
    %64 = memref.load %arg2[%c74] : memref<398xf32, #tpu.memory_space<smem>>
    %65 = vector.broadcast %64 : f32 to vector<2x128xf32>
    %66 = arith.addf %63, %65 : vector<2x128xf32>
    %cst_12 = arith.constant 0.000000e+00 : f32
    %67 = vector.broadcast %cst_12 : f32 to vector<2x128xf32>
    %68 = arith.maximumf %66, %67 : vector<2x128xf32>
    %c106 = arith.constant 106 : index
    %69 = memref.load %arg2[%c106] : memref<398xf32, #tpu.memory_space<smem>>
    %70 = vector.broadcast %69 : f32 to vector<2x128xf32>
    %71 = arith.mulf %70, %68 : vector<2x128xf32>
    %72 = arith.addf %56, %71 : vector<2x128xf32>
    %c13 = arith.constant 13 : index
    %73 = memref.load %arg2[%c13] : memref<398xf32, #tpu.memory_space<smem>>
    %74 = vector.broadcast %73 : f32 to vector<2x128xf32>
    %75 = arith.mulf %74, %27 : vector<2x128xf32>
    %c14 = arith.constant 14 : index
    %76 = memref.load %arg2[%c14] : memref<398xf32, #tpu.memory_space<smem>>
    %77 = vector.broadcast %76 : f32 to vector<2x128xf32>
    %78 = arith.mulf %77, %38 : vector<2x128xf32>
    %79 = arith.addf %75, %78 : vector<2x128xf32>
    %c75 = arith.constant 75 : index
    %80 = memref.load %arg2[%c75] : memref<398xf32, #tpu.memory_space<smem>>
    %81 = vector.broadcast %80 : f32 to vector<2x128xf32>
    %82 = arith.addf %79, %81 : vector<2x128xf32>
    %cst_13 = arith.constant 0.000000e+00 : f32
    %83 = vector.broadcast %cst_13 : f32 to vector<2x128xf32>
    %84 = arith.maximumf %82, %83 : vector<2x128xf32>
    %c107 = arith.constant 107 : index
    %85 = memref.load %arg2[%c107] : memref<398xf32, #tpu.memory_space<smem>>
    %86 = vector.broadcast %85 : f32 to vector<2x128xf32>
    %87 = arith.mulf %86, %84 : vector<2x128xf32>
    %88 = arith.addf %72, %87 : vector<2x128xf32>
    %c15 = arith.constant 15 : index
    %89 = memref.load %arg2[%c15] : memref<398xf32, #tpu.memory_space<smem>>
    %90 = vector.broadcast %89 : f32 to vector<2x128xf32>
    %91 = arith.mulf %90, %27 : vector<2x128xf32>
    %c16 = arith.constant 16 : index
    %92 = memref.load %arg2[%c16] : memref<398xf32, #tpu.memory_space<smem>>
    %93 = vector.broadcast %92 : f32 to vector<2x128xf32>
    %94 = arith.mulf %93, %38 : vector<2x128xf32>
    %95 = arith.addf %91, %94 : vector<2x128xf32>
    %c76 = arith.constant 76 : index
    %96 = memref.load %arg2[%c76] : memref<398xf32, #tpu.memory_space<smem>>
    %97 = vector.broadcast %96 : f32 to vector<2x128xf32>
    %98 = arith.addf %95, %97 : vector<2x128xf32>
    %cst_14 = arith.constant 0.000000e+00 : f32
    %99 = vector.broadcast %cst_14 : f32 to vector<2x128xf32>
    %100 = arith.maximumf %98, %99 : vector<2x128xf32>
    %c108 = arith.constant 108 : index
    %101 = memref.load %arg2[%c108] : memref<398xf32, #tpu.memory_space<smem>>
    %102 = vector.broadcast %101 : f32 to vector<2x128xf32>
    %103 = arith.mulf %102, %100 : vector<2x128xf32>
    %104 = arith.addf %88, %103 : vector<2x128xf32>
    %c17 = arith.constant 17 : index
    %105 = memref.load %arg2[%c17] : memref<398xf32, #tpu.memory_space<smem>>
    %106 = vector.broadcast %105 : f32 to vector<2x128xf32>
    %107 = arith.mulf %106, %27 : vector<2x128xf32>
    %c18 = arith.constant 18 : index
    %108 = memref.load %arg2[%c18] : memref<398xf32, #tpu.memory_space<smem>>
    %109 = vector.broadcast %108 : f32 to vector<2x128xf32>
    %110 = arith.mulf %109, %38 : vector<2x128xf32>
    %111 = arith.addf %107, %110 : vector<2x128xf32>
    %c77 = arith.constant 77 : index
    %112 = memref.load %arg2[%c77] : memref<398xf32, #tpu.memory_space<smem>>
    %113 = vector.broadcast %112 : f32 to vector<2x128xf32>
    %114 = arith.addf %111, %113 : vector<2x128xf32>
    %cst_15 = arith.constant 0.000000e+00 : f32
    %115 = vector.broadcast %cst_15 : f32 to vector<2x128xf32>
    %116 = arith.maximumf %114, %115 : vector<2x128xf32>
    %c109 = arith.constant 109 : index
    %117 = memref.load %arg2[%c109] : memref<398xf32, #tpu.memory_space<smem>>
    %118 = vector.broadcast %117 : f32 to vector<2x128xf32>
    %119 = arith.mulf %118, %116 : vector<2x128xf32>
    %120 = arith.addf %104, %119 : vector<2x128xf32>
    %c19 = arith.constant 19 : index
    %121 = memref.load %arg2[%c19] : memref<398xf32, #tpu.memory_space<smem>>
    %122 = vector.broadcast %121 : f32 to vector<2x128xf32>
    %123 = arith.mulf %122, %27 : vector<2x128xf32>
    %c20 = arith.constant 20 : index
    %124 = memref.load %arg2[%c20] : memref<398xf32, #tpu.memory_space<smem>>
    %125 = vector.broadcast %124 : f32 to vector<2x128xf32>
    %126 = arith.mulf %125, %38 : vector<2x128xf32>
    %127 = arith.addf %123, %126 : vector<2x128xf32>
    %c78 = arith.constant 78 : index
    %128 = memref.load %arg2[%c78] : memref<398xf32, #tpu.memory_space<smem>>
    %129 = vector.broadcast %128 : f32 to vector<2x128xf32>
    %130 = arith.addf %127, %129 : vector<2x128xf32>
    %cst_16 = arith.constant 0.000000e+00 : f32
    %131 = vector.broadcast %cst_16 : f32 to vector<2x128xf32>
    %132 = arith.maximumf %130, %131 : vector<2x128xf32>
    %c110 = arith.constant 110 : index
    %133 = memref.load %arg2[%c110] : memref<398xf32, #tpu.memory_space<smem>>
    %134 = vector.broadcast %133 : f32 to vector<2x128xf32>
    %135 = arith.mulf %134, %132 : vector<2x128xf32>
    %136 = arith.addf %120, %135 : vector<2x128xf32>
    %c21 = arith.constant 21 : index
    %137 = memref.load %arg2[%c21] : memref<398xf32, #tpu.memory_space<smem>>
    %138 = vector.broadcast %137 : f32 to vector<2x128xf32>
    %139 = arith.mulf %138, %27 : vector<2x128xf32>
    %c22 = arith.constant 22 : index
    %140 = memref.load %arg2[%c22] : memref<398xf32, #tpu.memory_space<smem>>
    %141 = vector.broadcast %140 : f32 to vector<2x128xf32>
    %142 = arith.mulf %141, %38 : vector<2x128xf32>
    %143 = arith.addf %139, %142 : vector<2x128xf32>
    %c79 = arith.constant 79 : index
    %144 = memref.load %arg2[%c79] : memref<398xf32, #tpu.memory_space<smem>>
    %145 = vector.broadcast %144 : f32 to vector<2x128xf32>
    %146 = arith.addf %143, %145 : vector<2x128xf32>
    %cst_17 = arith.constant 0.000000e+00 : f32
    %147 = vector.broadcast %cst_17 : f32 to vector<2x128xf32>
    %148 = arith.maximumf %146, %147 : vector<2x128xf32>
    %c111 = arith.constant 111 : index
    %149 = memref.load %arg2[%c111] : memref<398xf32, #tpu.memory_space<smem>>
    %150 = vector.broadcast %149 : f32 to vector<2x128xf32>
    %151 = arith.mulf %150, %148 : vector<2x128xf32>
    %152 = arith.addf %136, %151 : vector<2x128xf32>
    %c23 = arith.constant 23 : index
    %153 = memref.load %arg2[%c23] : memref<398xf32, #tpu.memory_space<smem>>
    %154 = vector.broadcast %153 : f32 to vector<2x128xf32>
    %155 = arith.mulf %154, %27 : vector<2x128xf32>
    %c24 = arith.constant 24 : index
    %156 = memref.load %arg2[%c24] : memref<398xf32, #tpu.memory_space<smem>>
    %157 = vector.broadcast %156 : f32 to vector<2x128xf32>
    %158 = arith.mulf %157, %38 : vector<2x128xf32>
    %159 = arith.addf %155, %158 : vector<2x128xf32>
    %c80 = arith.constant 80 : index
    %160 = memref.load %arg2[%c80] : memref<398xf32, #tpu.memory_space<smem>>
    %161 = vector.broadcast %160 : f32 to vector<2x128xf32>
    %162 = arith.addf %159, %161 : vector<2x128xf32>
    %cst_18 = arith.constant 0.000000e+00 : f32
    %163 = vector.broadcast %cst_18 : f32 to vector<2x128xf32>
    %164 = arith.maximumf %162, %163 : vector<2x128xf32>
    %c112 = arith.constant 112 : index
    %165 = memref.load %arg2[%c112] : memref<398xf32, #tpu.memory_space<smem>>
    %166 = vector.broadcast %165 : f32 to vector<2x128xf32>
    %167 = arith.mulf %166, %164 : vector<2x128xf32>
    %168 = arith.addf %152, %167 : vector<2x128xf32>
    %c25 = arith.constant 25 : index
    %169 = memref.load %arg2[%c25] : memref<398xf32, #tpu.memory_space<smem>>
    %170 = vector.broadcast %169 : f32 to vector<2x128xf32>
    %171 = arith.mulf %170, %27 : vector<2x128xf32>
    %c26 = arith.constant 26 : index
    %172 = memref.load %arg2[%c26] : memref<398xf32, #tpu.memory_space<smem>>
    %173 = vector.broadcast %172 : f32 to vector<2x128xf32>
    %174 = arith.mulf %173, %38 : vector<2x128xf32>
    %175 = arith.addf %171, %174 : vector<2x128xf32>
    %c81 = arith.constant 81 : index
    %176 = memref.load %arg2[%c81] : memref<398xf32, #tpu.memory_space<smem>>
    %177 = vector.broadcast %176 : f32 to vector<2x128xf32>
    %178 = arith.addf %175, %177 : vector<2x128xf32>
    %cst_19 = arith.constant 0.000000e+00 : f32
    %179 = vector.broadcast %cst_19 : f32 to vector<2x128xf32>
    %180 = arith.maximumf %178, %179 : vector<2x128xf32>
    %c113 = arith.constant 113 : index
    %181 = memref.load %arg2[%c113] : memref<398xf32, #tpu.memory_space<smem>>
    %182 = vector.broadcast %181 : f32 to vector<2x128xf32>
    %183 = arith.mulf %182, %180 : vector<2x128xf32>
    %184 = arith.addf %168, %183 : vector<2x128xf32>
    %c27 = arith.constant 27 : index
    %185 = memref.load %arg2[%c27] : memref<398xf32, #tpu.memory_space<smem>>
    %186 = vector.broadcast %185 : f32 to vector<2x128xf32>
    %187 = arith.mulf %186, %27 : vector<2x128xf32>
    %c28 = arith.constant 28 : index
    %188 = memref.load %arg2[%c28] : memref<398xf32, #tpu.memory_space<smem>>
    %189 = vector.broadcast %188 : f32 to vector<2x128xf32>
    %190 = arith.mulf %189, %38 : vector<2x128xf32>
    %191 = arith.addf %187, %190 : vector<2x128xf32>
    %c82 = arith.constant 82 : index
    %192 = memref.load %arg2[%c82] : memref<398xf32, #tpu.memory_space<smem>>
    %193 = vector.broadcast %192 : f32 to vector<2x128xf32>
    %194 = arith.addf %191, %193 : vector<2x128xf32>
    %cst_20 = arith.constant 0.000000e+00 : f32
    %195 = vector.broadcast %cst_20 : f32 to vector<2x128xf32>
    %196 = arith.maximumf %194, %195 : vector<2x128xf32>
    %c114 = arith.constant 114 : index
    %197 = memref.load %arg2[%c114] : memref<398xf32, #tpu.memory_space<smem>>
    %198 = vector.broadcast %197 : f32 to vector<2x128xf32>
    %199 = arith.mulf %198, %196 : vector<2x128xf32>
    %200 = arith.addf %184, %199 : vector<2x128xf32>
    %c29 = arith.constant 29 : index
    %201 = memref.load %arg2[%c29] : memref<398xf32, #tpu.memory_space<smem>>
    %202 = vector.broadcast %201 : f32 to vector<2x128xf32>
    %203 = arith.mulf %202, %27 : vector<2x128xf32>
    %c30 = arith.constant 30 : index
    %204 = memref.load %arg2[%c30] : memref<398xf32, #tpu.memory_space<smem>>
    %205 = vector.broadcast %204 : f32 to vector<2x128xf32>
    %206 = arith.mulf %205, %38 : vector<2x128xf32>
    %207 = arith.addf %203, %206 : vector<2x128xf32>
    %c83 = arith.constant 83 : index
    %208 = memref.load %arg2[%c83] : memref<398xf32, #tpu.memory_space<smem>>
    %209 = vector.broadcast %208 : f32 to vector<2x128xf32>
    %210 = arith.addf %207, %209 : vector<2x128xf32>
    %cst_21 = arith.constant 0.000000e+00 : f32
    %211 = vector.broadcast %cst_21 : f32 to vector<2x128xf32>
    %212 = arith.maximumf %210, %211 : vector<2x128xf32>
    %c115 = arith.constant 115 : index
    %213 = memref.load %arg2[%c115] : memref<398xf32, #tpu.memory_space<smem>>
    %214 = vector.broadcast %213 : f32 to vector<2x128xf32>
    %215 = arith.mulf %214, %212 : vector<2x128xf32>
    %216 = arith.addf %200, %215 : vector<2x128xf32>
    %c31 = arith.constant 31 : index
    %217 = memref.load %arg2[%c31] : memref<398xf32, #tpu.memory_space<smem>>
    %218 = vector.broadcast %217 : f32 to vector<2x128xf32>
    %219 = arith.mulf %218, %27 : vector<2x128xf32>
    %c32 = arith.constant 32 : index
    %220 = memref.load %arg2[%c32] : memref<398xf32, #tpu.memory_space<smem>>
    %221 = vector.broadcast %220 : f32 to vector<2x128xf32>
    %222 = arith.mulf %221, %38 : vector<2x128xf32>
    %223 = arith.addf %219, %222 : vector<2x128xf32>
    %c84 = arith.constant 84 : index
    %224 = memref.load %arg2[%c84] : memref<398xf32, #tpu.memory_space<smem>>
    %225 = vector.broadcast %224 : f32 to vector<2x128xf32>
    %226 = arith.addf %223, %225 : vector<2x128xf32>
    %cst_22 = arith.constant 0.000000e+00 : f32
    %227 = vector.broadcast %cst_22 : f32 to vector<2x128xf32>
    %228 = arith.maximumf %226, %227 : vector<2x128xf32>
    %c116 = arith.constant 116 : index
    %229 = memref.load %arg2[%c116] : memref<398xf32, #tpu.memory_space<smem>>
    %230 = vector.broadcast %229 : f32 to vector<2x128xf32>
    %231 = arith.mulf %230, %228 : vector<2x128xf32>
    %232 = arith.addf %216, %231 : vector<2x128xf32>
    %c33 = arith.constant 33 : index
    %233 = memref.load %arg2[%c33] : memref<398xf32, #tpu.memory_space<smem>>
    %234 = vector.broadcast %233 : f32 to vector<2x128xf32>
    %235 = arith.mulf %234, %27 : vector<2x128xf32>
    %c34 = arith.constant 34 : index
    %236 = memref.load %arg2[%c34] : memref<398xf32, #tpu.memory_space<smem>>
    %237 = vector.broadcast %236 : f32 to vector<2x128xf32>
    %238 = arith.mulf %237, %38 : vector<2x128xf32>
    %239 = arith.addf %235, %238 : vector<2x128xf32>
    %c85 = arith.constant 85 : index
    %240 = memref.load %arg2[%c85] : memref<398xf32, #tpu.memory_space<smem>>
    %241 = vector.broadcast %240 : f32 to vector<2x128xf32>
    %242 = arith.addf %239, %241 : vector<2x128xf32>
    %cst_23 = arith.constant 0.000000e+00 : f32
    %243 = vector.broadcast %cst_23 : f32 to vector<2x128xf32>
    %244 = arith.maximumf %242, %243 : vector<2x128xf32>
    %c117 = arith.constant 117 : index
    %245 = memref.load %arg2[%c117] : memref<398xf32, #tpu.memory_space<smem>>
    %246 = vector.broadcast %245 : f32 to vector<2x128xf32>
    %247 = arith.mulf %246, %244 : vector<2x128xf32>
    %248 = arith.addf %232, %247 : vector<2x128xf32>
    %c35 = arith.constant 35 : index
    %249 = memref.load %arg2[%c35] : memref<398xf32, #tpu.memory_space<smem>>
    %250 = vector.broadcast %249 : f32 to vector<2x128xf32>
    %251 = arith.mulf %250, %27 : vector<2x128xf32>
    %c36 = arith.constant 36 : index
    %252 = memref.load %arg2[%c36] : memref<398xf32, #tpu.memory_space<smem>>
    %253 = vector.broadcast %252 : f32 to vector<2x128xf32>
    %254 = arith.mulf %253, %38 : vector<2x128xf32>
    %255 = arith.addf %251, %254 : vector<2x128xf32>
    %c86 = arith.constant 86 : index
    %256 = memref.load %arg2[%c86] : memref<398xf32, #tpu.memory_space<smem>>
    %257 = vector.broadcast %256 : f32 to vector<2x128xf32>
    %258 = arith.addf %255, %257 : vector<2x128xf32>
    %cst_24 = arith.constant 0.000000e+00 : f32
    %259 = vector.broadcast %cst_24 : f32 to vector<2x128xf32>
    %260 = arith.maximumf %258, %259 : vector<2x128xf32>
    %c118 = arith.constant 118 : index
    %261 = memref.load %arg2[%c118] : memref<398xf32, #tpu.memory_space<smem>>
    %262 = vector.broadcast %261 : f32 to vector<2x128xf32>
    %263 = arith.mulf %262, %260 : vector<2x128xf32>
    %264 = arith.addf %248, %263 : vector<2x128xf32>
    %c37 = arith.constant 37 : index
    %265 = memref.load %arg2[%c37] : memref<398xf32, #tpu.memory_space<smem>>
    %266 = vector.broadcast %265 : f32 to vector<2x128xf32>
    %267 = arith.mulf %266, %27 : vector<2x128xf32>
    %c38 = arith.constant 38 : index
    %268 = memref.load %arg2[%c38] : memref<398xf32, #tpu.memory_space<smem>>
    %269 = vector.broadcast %268 : f32 to vector<2x128xf32>
    %270 = arith.mulf %269, %38 : vector<2x128xf32>
    %271 = arith.addf %267, %270 : vector<2x128xf32>
    %c87 = arith.constant 87 : index
    %272 = memref.load %arg2[%c87] : memref<398xf32, #tpu.memory_space<smem>>
    %273 = vector.broadcast %272 : f32 to vector<2x128xf32>
    %274 = arith.addf %271, %273 : vector<2x128xf32>
    %cst_25 = arith.constant 0.000000e+00 : f32
    %275 = vector.broadcast %cst_25 : f32 to vector<2x128xf32>
    %276 = arith.maximumf %274, %275 : vector<2x128xf32>
    %c119 = arith.constant 119 : index
    %277 = memref.load %arg2[%c119] : memref<398xf32, #tpu.memory_space<smem>>
    %278 = vector.broadcast %277 : f32 to vector<2x128xf32>
    %279 = arith.mulf %278, %276 : vector<2x128xf32>
    %280 = arith.addf %264, %279 : vector<2x128xf32>
    %c39 = arith.constant 39 : index
    %281 = memref.load %arg2[%c39] : memref<398xf32, #tpu.memory_space<smem>>
    %282 = vector.broadcast %281 : f32 to vector<2x128xf32>
    %283 = arith.mulf %282, %27 : vector<2x128xf32>
    %c40 = arith.constant 40 : index
    %284 = memref.load %arg2[%c40] : memref<398xf32, #tpu.memory_space<smem>>
    %285 = vector.broadcast %284 : f32 to vector<2x128xf32>
    %286 = arith.mulf %285, %38 : vector<2x128xf32>
    %287 = arith.addf %283, %286 : vector<2x128xf32>
    %c88 = arith.constant 88 : index
    %288 = memref.load %arg2[%c88] : memref<398xf32, #tpu.memory_space<smem>>
    %289 = vector.broadcast %288 : f32 to vector<2x128xf32>
    %290 = arith.addf %287, %289 : vector<2x128xf32>
    %cst_26 = arith.constant 0.000000e+00 : f32
    %291 = vector.broadcast %cst_26 : f32 to vector<2x128xf32>
    %292 = arith.maximumf %290, %291 : vector<2x128xf32>
    %c120 = arith.constant 120 : index
    %293 = memref.load %arg2[%c120] : memref<398xf32, #tpu.memory_space<smem>>
    %294 = vector.broadcast %293 : f32 to vector<2x128xf32>
    %295 = arith.mulf %294, %292 : vector<2x128xf32>
    %296 = arith.addf %280, %295 : vector<2x128xf32>
    %c41 = arith.constant 41 : index
    %297 = memref.load %arg2[%c41] : memref<398xf32, #tpu.memory_space<smem>>
    %298 = vector.broadcast %297 : f32 to vector<2x128xf32>
    %299 = arith.mulf %298, %27 : vector<2x128xf32>
    %c42 = arith.constant 42 : index
    %300 = memref.load %arg2[%c42] : memref<398xf32, #tpu.memory_space<smem>>
    %301 = vector.broadcast %300 : f32 to vector<2x128xf32>
    %302 = arith.mulf %301, %38 : vector<2x128xf32>
    %303 = arith.addf %299, %302 : vector<2x128xf32>
    %c89 = arith.constant 89 : index
    %304 = memref.load %arg2[%c89] : memref<398xf32, #tpu.memory_space<smem>>
    %305 = vector.broadcast %304 : f32 to vector<2x128xf32>
    %306 = arith.addf %303, %305 : vector<2x128xf32>
    %cst_27 = arith.constant 0.000000e+00 : f32
    %307 = vector.broadcast %cst_27 : f32 to vector<2x128xf32>
    %308 = arith.maximumf %306, %307 : vector<2x128xf32>
    %c121 = arith.constant 121 : index
    %309 = memref.load %arg2[%c121] : memref<398xf32, #tpu.memory_space<smem>>
    %310 = vector.broadcast %309 : f32 to vector<2x128xf32>
    %311 = arith.mulf %310, %308 : vector<2x128xf32>
    %312 = arith.addf %296, %311 : vector<2x128xf32>
    %c43 = arith.constant 43 : index
    %313 = memref.load %arg2[%c43] : memref<398xf32, #tpu.memory_space<smem>>
    %314 = vector.broadcast %313 : f32 to vector<2x128xf32>
    %315 = arith.mulf %314, %27 : vector<2x128xf32>
    %c44 = arith.constant 44 : index
    %316 = memref.load %arg2[%c44] : memref<398xf32, #tpu.memory_space<smem>>
    %317 = vector.broadcast %316 : f32 to vector<2x128xf32>
    %318 = arith.mulf %317, %38 : vector<2x128xf32>
    %319 = arith.addf %315, %318 : vector<2x128xf32>
    %c90 = arith.constant 90 : index
    %320 = memref.load %arg2[%c90] : memref<398xf32, #tpu.memory_space<smem>>
    %321 = vector.broadcast %320 : f32 to vector<2x128xf32>
    %322 = arith.addf %319, %321 : vector<2x128xf32>
    %cst_28 = arith.constant 0.000000e+00 : f32
    %323 = vector.broadcast %cst_28 : f32 to vector<2x128xf32>
    %324 = arith.maximumf %322, %323 : vector<2x128xf32>
    %c122 = arith.constant 122 : index
    %325 = memref.load %arg2[%c122] : memref<398xf32, #tpu.memory_space<smem>>
    %326 = vector.broadcast %325 : f32 to vector<2x128xf32>
    %327 = arith.mulf %326, %324 : vector<2x128xf32>
    %328 = arith.addf %312, %327 : vector<2x128xf32>
    %c45 = arith.constant 45 : index
    %329 = memref.load %arg2[%c45] : memref<398xf32, #tpu.memory_space<smem>>
    %330 = vector.broadcast %329 : f32 to vector<2x128xf32>
    %331 = arith.mulf %330, %27 : vector<2x128xf32>
    %c46 = arith.constant 46 : index
    %332 = memref.load %arg2[%c46] : memref<398xf32, #tpu.memory_space<smem>>
    %333 = vector.broadcast %332 : f32 to vector<2x128xf32>
    %334 = arith.mulf %333, %38 : vector<2x128xf32>
    %335 = arith.addf %331, %334 : vector<2x128xf32>
    %c91 = arith.constant 91 : index
    %336 = memref.load %arg2[%c91] : memref<398xf32, #tpu.memory_space<smem>>
    %337 = vector.broadcast %336 : f32 to vector<2x128xf32>
    %338 = arith.addf %335, %337 : vector<2x128xf32>
    %cst_29 = arith.constant 0.000000e+00 : f32
    %339 = vector.broadcast %cst_29 : f32 to vector<2x128xf32>
    %340 = arith.maximumf %338, %339 : vector<2x128xf32>
    %c123 = arith.constant 123 : index
    %341 = memref.load %arg2[%c123] : memref<398xf32, #tpu.memory_space<smem>>
    %342 = vector.broadcast %341 : f32 to vector<2x128xf32>
    %343 = arith.mulf %342, %340 : vector<2x128xf32>
    %344 = arith.addf %328, %343 : vector<2x128xf32>
    %c47 = arith.constant 47 : index
    %345 = memref.load %arg2[%c47] : memref<398xf32, #tpu.memory_space<smem>>
    %346 = vector.broadcast %345 : f32 to vector<2x128xf32>
    %347 = arith.mulf %346, %27 : vector<2x128xf32>
    %c48 = arith.constant 48 : index
    %348 = memref.load %arg2[%c48] : memref<398xf32, #tpu.memory_space<smem>>
    %349 = vector.broadcast %348 : f32 to vector<2x128xf32>
    %350 = arith.mulf %349, %38 : vector<2x128xf32>
    %351 = arith.addf %347, %350 : vector<2x128xf32>
    %c92 = arith.constant 92 : index
    %352 = memref.load %arg2[%c92] : memref<398xf32, #tpu.memory_space<smem>>
    %353 = vector.broadcast %352 : f32 to vector<2x128xf32>
    %354 = arith.addf %351, %353 : vector<2x128xf32>
    %cst_30 = arith.constant 0.000000e+00 : f32
    %355 = vector.broadcast %cst_30 : f32 to vector<2x128xf32>
    %356 = arith.maximumf %354, %355 : vector<2x128xf32>
    %c124 = arith.constant 124 : index
    %357 = memref.load %arg2[%c124] : memref<398xf32, #tpu.memory_space<smem>>
    %358 = vector.broadcast %357 : f32 to vector<2x128xf32>
    %359 = arith.mulf %358, %356 : vector<2x128xf32>
    %360 = arith.addf %344, %359 : vector<2x128xf32>
    %c49 = arith.constant 49 : index
    %361 = memref.load %arg2[%c49] : memref<398xf32, #tpu.memory_space<smem>>
    %362 = vector.broadcast %361 : f32 to vector<2x128xf32>
    %363 = arith.mulf %362, %27 : vector<2x128xf32>
    %c50 = arith.constant 50 : index
    %364 = memref.load %arg2[%c50] : memref<398xf32, #tpu.memory_space<smem>>
    %365 = vector.broadcast %364 : f32 to vector<2x128xf32>
    %366 = arith.mulf %365, %38 : vector<2x128xf32>
    %367 = arith.addf %363, %366 : vector<2x128xf32>
    %c93 = arith.constant 93 : index
    %368 = memref.load %arg2[%c93] : memref<398xf32, #tpu.memory_space<smem>>
    %369 = vector.broadcast %368 : f32 to vector<2x128xf32>
    %370 = arith.addf %367, %369 : vector<2x128xf32>
    %cst_31 = arith.constant 0.000000e+00 : f32
    %371 = vector.broadcast %cst_31 : f32 to vector<2x128xf32>
    %372 = arith.maximumf %370, %371 : vector<2x128xf32>
    %c125 = arith.constant 125 : index
    %373 = memref.load %arg2[%c125] : memref<398xf32, #tpu.memory_space<smem>>
    %374 = vector.broadcast %373 : f32 to vector<2x128xf32>
    %375 = arith.mulf %374, %372 : vector<2x128xf32>
    %376 = arith.addf %360, %375 : vector<2x128xf32>
    %c51 = arith.constant 51 : index
    %377 = memref.load %arg2[%c51] : memref<398xf32, #tpu.memory_space<smem>>
    %378 = vector.broadcast %377 : f32 to vector<2x128xf32>
    %379 = arith.mulf %378, %27 : vector<2x128xf32>
    %c52 = arith.constant 52 : index
    %380 = memref.load %arg2[%c52] : memref<398xf32, #tpu.memory_space<smem>>
    %381 = vector.broadcast %380 : f32 to vector<2x128xf32>
    %382 = arith.mulf %381, %38 : vector<2x128xf32>
    %383 = arith.addf %379, %382 : vector<2x128xf32>
    %c94 = arith.constant 94 : index
    %384 = memref.load %arg2[%c94] : memref<398xf32, #tpu.memory_space<smem>>
    %385 = vector.broadcast %384 : f32 to vector<2x128xf32>
    %386 = arith.addf %383, %385 : vector<2x128xf32>
    %cst_32 = arith.constant 0.000000e+00 : f32
    %387 = vector.broadcast %cst_32 : f32 to vector<2x128xf32>
    %388 = arith.maximumf %386, %387 : vector<2x128xf32>
    %c126 = arith.constant 126 : index
    %389 = memref.load %arg2[%c126] : memref<398xf32, #tpu.memory_space<smem>>
    %390 = vector.broadcast %389 : f32 to vector<2x128xf32>
    %391 = arith.mulf %390, %388 : vector<2x128xf32>
    %392 = arith.addf %376, %391 : vector<2x128xf32>
    %c53 = arith.constant 53 : index
    %393 = memref.load %arg2[%c53] : memref<398xf32, #tpu.memory_space<smem>>
    %394 = vector.broadcast %393 : f32 to vector<2x128xf32>
    %395 = arith.mulf %394, %27 : vector<2x128xf32>
    %c54 = arith.constant 54 : index
    %396 = memref.load %arg2[%c54] : memref<398xf32, #tpu.memory_space<smem>>
    %397 = vector.broadcast %396 : f32 to vector<2x128xf32>
    %398 = arith.mulf %397, %38 : vector<2x128xf32>
    %399 = arith.addf %395, %398 : vector<2x128xf32>
    %c95 = arith.constant 95 : index
    %400 = memref.load %arg2[%c95] : memref<398xf32, #tpu.memory_space<smem>>
    %401 = vector.broadcast %400 : f32 to vector<2x128xf32>
    %402 = arith.addf %399, %401 : vector<2x128xf32>
    %cst_33 = arith.constant 0.000000e+00 : f32
    %403 = vector.broadcast %cst_33 : f32 to vector<2x128xf32>
    %404 = arith.maximumf %402, %403 : vector<2x128xf32>
    %c127 = arith.constant 127 : index
    %405 = memref.load %arg2[%c127] : memref<398xf32, #tpu.memory_space<smem>>
    %406 = vector.broadcast %405 : f32 to vector<2x128xf32>
    %407 = arith.mulf %406, %404 : vector<2x128xf32>
    %408 = arith.addf %392, %407 : vector<2x128xf32>
    %c55 = arith.constant 55 : index
    %409 = memref.load %arg2[%c55] : memref<398xf32, #tpu.memory_space<smem>>
    %410 = vector.broadcast %409 : f32 to vector<2x128xf32>
    %411 = arith.mulf %410, %27 : vector<2x128xf32>
    %c56 = arith.constant 56 : index
    %412 = memref.load %arg2[%c56] : memref<398xf32, #tpu.memory_space<smem>>
    %413 = vector.broadcast %412 : f32 to vector<2x128xf32>
    %414 = arith.mulf %413, %38 : vector<2x128xf32>
    %415 = arith.addf %411, %414 : vector<2x128xf32>
    %c96 = arith.constant 96 : index
    %416 = memref.load %arg2[%c96] : memref<398xf32, #tpu.memory_space<smem>>
    %417 = vector.broadcast %416 : f32 to vector<2x128xf32>
    %418 = arith.addf %415, %417 : vector<2x128xf32>
    %cst_34 = arith.constant 0.000000e+00 : f32
    %419 = vector.broadcast %cst_34 : f32 to vector<2x128xf32>
    %420 = arith.maximumf %418, %419 : vector<2x128xf32>
    %c128 = arith.constant 128 : index
    %421 = memref.load %arg2[%c128] : memref<398xf32, #tpu.memory_space<smem>>
    %422 = vector.broadcast %421 : f32 to vector<2x128xf32>
    %423 = arith.mulf %422, %420 : vector<2x128xf32>
    %424 = arith.addf %408, %423 : vector<2x128xf32>
    %c57 = arith.constant 57 : index
    %425 = memref.load %arg2[%c57] : memref<398xf32, #tpu.memory_space<smem>>
    %426 = vector.broadcast %425 : f32 to vector<2x128xf32>
    %427 = arith.mulf %426, %27 : vector<2x128xf32>
    %c58 = arith.constant 58 : index
    %428 = memref.load %arg2[%c58] : memref<398xf32, #tpu.memory_space<smem>>
    %429 = vector.broadcast %428 : f32 to vector<2x128xf32>
    %430 = arith.mulf %429, %38 : vector<2x128xf32>
    %431 = arith.addf %427, %430 : vector<2x128xf32>
    %c97 = arith.constant 97 : index
    %432 = memref.load %arg2[%c97] : memref<398xf32, #tpu.memory_space<smem>>
    %433 = vector.broadcast %432 : f32 to vector<2x128xf32>
    %434 = arith.addf %431, %433 : vector<2x128xf32>
    %cst_35 = arith.constant 0.000000e+00 : f32
    %435 = vector.broadcast %cst_35 : f32 to vector<2x128xf32>
    %436 = arith.maximumf %434, %435 : vector<2x128xf32>
    %c129 = arith.constant 129 : index
    %437 = memref.load %arg2[%c129] : memref<398xf32, #tpu.memory_space<smem>>
    %438 = vector.broadcast %437 : f32 to vector<2x128xf32>
    %439 = arith.mulf %438, %436 : vector<2x128xf32>
    %440 = arith.addf %424, %439 : vector<2x128xf32>
    %c59 = arith.constant 59 : index
    %441 = memref.load %arg2[%c59] : memref<398xf32, #tpu.memory_space<smem>>
    %442 = vector.broadcast %441 : f32 to vector<2x128xf32>
    %443 = arith.mulf %442, %27 : vector<2x128xf32>
    %c60 = arith.constant 60 : index
    %444 = memref.load %arg2[%c60] : memref<398xf32, #tpu.memory_space<smem>>
    %445 = vector.broadcast %444 : f32 to vector<2x128xf32>
    %446 = arith.mulf %445, %38 : vector<2x128xf32>
    %447 = arith.addf %443, %446 : vector<2x128xf32>
    %c98 = arith.constant 98 : index
    %448 = memref.load %arg2[%c98] : memref<398xf32, #tpu.memory_space<smem>>
    %449 = vector.broadcast %448 : f32 to vector<2x128xf32>
    %450 = arith.addf %447, %449 : vector<2x128xf32>
    %cst_36 = arith.constant 0.000000e+00 : f32
    %451 = vector.broadcast %cst_36 : f32 to vector<2x128xf32>
    %452 = arith.maximumf %450, %451 : vector<2x128xf32>
    %c130 = arith.constant 130 : index
    %453 = memref.load %arg2[%c130] : memref<398xf32, #tpu.memory_space<smem>>
    %454 = vector.broadcast %453 : f32 to vector<2x128xf32>
    %455 = arith.mulf %454, %452 : vector<2x128xf32>
    %456 = arith.addf %440, %455 : vector<2x128xf32>
    %c61 = arith.constant 61 : index
    %457 = memref.load %arg2[%c61] : memref<398xf32, #tpu.memory_space<smem>>
    %458 = vector.broadcast %457 : f32 to vector<2x128xf32>
    %459 = arith.mulf %458, %27 : vector<2x128xf32>
    %c62 = arith.constant 62 : index
    %460 = memref.load %arg2[%c62] : memref<398xf32, #tpu.memory_space<smem>>
    %461 = vector.broadcast %460 : f32 to vector<2x128xf32>
    %462 = arith.mulf %461, %38 : vector<2x128xf32>
    %463 = arith.addf %459, %462 : vector<2x128xf32>
    %c99 = arith.constant 99 : index
    %464 = memref.load %arg2[%c99] : memref<398xf32, #tpu.memory_space<smem>>
    %465 = vector.broadcast %464 : f32 to vector<2x128xf32>
    %466 = arith.addf %463, %465 : vector<2x128xf32>
    %cst_37 = arith.constant 0.000000e+00 : f32
    %467 = vector.broadcast %cst_37 : f32 to vector<2x128xf32>
    %468 = arith.maximumf %466, %467 : vector<2x128xf32>
    %c131 = arith.constant 131 : index
    %469 = memref.load %arg2[%c131] : memref<398xf32, #tpu.memory_space<smem>>
    %470 = vector.broadcast %469 : f32 to vector<2x128xf32>
    %471 = arith.mulf %470, %468 : vector<2x128xf32>
    %472 = arith.addf %456, %471 : vector<2x128xf32>
    %c63 = arith.constant 63 : index
    %473 = memref.load %arg2[%c63] : memref<398xf32, #tpu.memory_space<smem>>
    %474 = vector.broadcast %473 : f32 to vector<2x128xf32>
    %475 = arith.mulf %474, %27 : vector<2x128xf32>
    %c64 = arith.constant 64 : index
    %476 = memref.load %arg2[%c64] : memref<398xf32, #tpu.memory_space<smem>>
    %477 = vector.broadcast %476 : f32 to vector<2x128xf32>
    %478 = arith.mulf %477, %38 : vector<2x128xf32>
    %479 = arith.addf %475, %478 : vector<2x128xf32>
    %c100 = arith.constant 100 : index
    %480 = memref.load %arg2[%c100] : memref<398xf32, #tpu.memory_space<smem>>
    %481 = vector.broadcast %480 : f32 to vector<2x128xf32>
    %482 = arith.addf %479, %481 : vector<2x128xf32>
    %cst_38 = arith.constant 0.000000e+00 : f32
    %483 = vector.broadcast %cst_38 : f32 to vector<2x128xf32>
    %484 = arith.maximumf %482, %483 : vector<2x128xf32>
    %c132 = arith.constant 132 : index
    %485 = memref.load %arg2[%c132] : memref<398xf32, #tpu.memory_space<smem>>
    %486 = vector.broadcast %485 : f32 to vector<2x128xf32>
    %487 = arith.mulf %486, %484 : vector<2x128xf32>
    %488 = arith.addf %472, %487 : vector<2x128xf32>
    %c65 = arith.constant 65 : index
    %489 = memref.load %arg2[%c65] : memref<398xf32, #tpu.memory_space<smem>>
    %490 = vector.broadcast %489 : f32 to vector<2x128xf32>
    %491 = arith.mulf %490, %27 : vector<2x128xf32>
    %c66 = arith.constant 66 : index
    %492 = memref.load %arg2[%c66] : memref<398xf32, #tpu.memory_space<smem>>
    %493 = vector.broadcast %492 : f32 to vector<2x128xf32>
    %494 = arith.mulf %493, %38 : vector<2x128xf32>
    %495 = arith.addf %491, %494 : vector<2x128xf32>
    %c101 = arith.constant 101 : index
    %496 = memref.load %arg2[%c101] : memref<398xf32, #tpu.memory_space<smem>>
    %497 = vector.broadcast %496 : f32 to vector<2x128xf32>
    %498 = arith.addf %495, %497 : vector<2x128xf32>
    %cst_39 = arith.constant 0.000000e+00 : f32
    %499 = vector.broadcast %cst_39 : f32 to vector<2x128xf32>
    %500 = arith.maximumf %498, %499 : vector<2x128xf32>
    %c133 = arith.constant 133 : index
    %501 = memref.load %arg2[%c133] : memref<398xf32, #tpu.memory_space<smem>>
    %502 = vector.broadcast %501 : f32 to vector<2x128xf32>
    %503 = arith.mulf %502, %500 : vector<2x128xf32>
    %504 = arith.addf %488, %503 : vector<2x128xf32>
    %c67 = arith.constant 67 : index
    %505 = memref.load %arg2[%c67] : memref<398xf32, #tpu.memory_space<smem>>
    %506 = vector.broadcast %505 : f32 to vector<2x128xf32>
    %507 = arith.mulf %506, %27 : vector<2x128xf32>
    %c68 = arith.constant 68 : index
    %508 = memref.load %arg2[%c68] : memref<398xf32, #tpu.memory_space<smem>>
    %509 = vector.broadcast %508 : f32 to vector<2x128xf32>
    %510 = arith.mulf %509, %38 : vector<2x128xf32>
    %511 = arith.addf %507, %510 : vector<2x128xf32>
    %c102 = arith.constant 102 : index
    %512 = memref.load %arg2[%c102] : memref<398xf32, #tpu.memory_space<smem>>
    %513 = vector.broadcast %512 : f32 to vector<2x128xf32>
    %514 = arith.addf %511, %513 : vector<2x128xf32>
    %cst_40 = arith.constant 0.000000e+00 : f32
    %515 = vector.broadcast %cst_40 : f32 to vector<2x128xf32>
    %516 = arith.maximumf %514, %515 : vector<2x128xf32>
    %c134 = arith.constant 134 : index
    %517 = memref.load %arg2[%c134] : memref<398xf32, #tpu.memory_space<smem>>
    %518 = vector.broadcast %517 : f32 to vector<2x128xf32>
    %519 = arith.mulf %518, %516 : vector<2x128xf32>
    %520 = arith.addf %504, %519 : vector<2x128xf32>
    %c69 = arith.constant 69 : index
    %521 = memref.load %arg2[%c69] : memref<398xf32, #tpu.memory_space<smem>>
    %522 = vector.broadcast %521 : f32 to vector<2x128xf32>
    %523 = arith.mulf %522, %27 : vector<2x128xf32>
    %c70 = arith.constant 70 : index
    %524 = memref.load %arg2[%c70] : memref<398xf32, #tpu.memory_space<smem>>
    %525 = vector.broadcast %524 : f32 to vector<2x128xf32>
    %526 = arith.mulf %525, %38 : vector<2x128xf32>
    %527 = arith.addf %523, %526 : vector<2x128xf32>
    %c103 = arith.constant 103 : index
    %528 = memref.load %arg2[%c103] : memref<398xf32, #tpu.memory_space<smem>>
    %529 = vector.broadcast %528 : f32 to vector<2x128xf32>
    %530 = arith.addf %527, %529 : vector<2x128xf32>
    %cst_41 = arith.constant 0.000000e+00 : f32
    %531 = vector.broadcast %cst_41 : f32 to vector<2x128xf32>
    %532 = arith.maximumf %530, %531 : vector<2x128xf32>
    %c135 = arith.constant 135 : index
    %533 = memref.load %arg2[%c135] : memref<398xf32, #tpu.memory_space<smem>>
    %534 = vector.broadcast %533 : f32 to vector<2x128xf32>
    %535 = arith.mulf %534, %532 : vector<2x128xf32>
    %536 = arith.addf %520, %535 : vector<2x128xf32>
    %c71 = arith.constant 71 : index
    %537 = memref.load %arg2[%c71] : memref<398xf32, #tpu.memory_space<smem>>
    %538 = vector.broadcast %537 : f32 to vector<2x128xf32>
    %539 = arith.mulf %538, %27 : vector<2x128xf32>
    %c72 = arith.constant 72 : index
    %540 = memref.load %arg2[%c72] : memref<398xf32, #tpu.memory_space<smem>>
    %541 = vector.broadcast %540 : f32 to vector<2x128xf32>
    %542 = arith.mulf %541, %38 : vector<2x128xf32>
    %543 = arith.addf %539, %542 : vector<2x128xf32>
    %c104 = arith.constant 104 : index
    %544 = memref.load %arg2[%c104] : memref<398xf32, #tpu.memory_space<smem>>
    %545 = vector.broadcast %544 : f32 to vector<2x128xf32>
    %546 = arith.addf %543, %545 : vector<2x128xf32>
    %cst_42 = arith.constant 0.000000e+00 : f32
    %547 = vector.broadcast %cst_42 : f32 to vector<2x128xf32>
    %548 = arith.maximumf %546, %547 : vector<2x128xf32>
    %c136 = arith.constant 136 : index
    %549 = memref.load %arg2[%c136] : memref<398xf32, #tpu.memory_space<smem>>
    %550 = vector.broadcast %549 : f32 to vector<2x128xf32>
    %551 = arith.mulf %550, %548 : vector<2x128xf32>
    %552 = arith.addf %536, %551 : vector<2x128xf32>
    %553 = arith.addf %16, %552 : vector<2x128xf32>
    %c0_43 = arith.constant 0 : index
    %c0_44 = arith.constant 0 : index
    %c0_45 = arith.constant 0 : index
    %c0_46 = arith.constant 0 : index
    %554 = vector.load %arg4[%c0_43, %c0_44, %c0_45, %c0_46] : memref<1x3x2x128xf32, #tpu.memory_space<vmem>>, vector<1x1x2x128xf32>
    %555 = vector.shape_cast %554 : vector<1x1x2x128xf32> to vector<2x128xf32>
    %556 = vector.shape_cast %553 : vector<2x128xf32> to vector<1x1x2x128xf32>
    tpu.vector_store %arg4[%c0_43, %c0_44, %c0_45, %c0_46], %556 {strides = array<i32>} : memref<1x3x2x128xf32, #tpu.memory_space<vmem>>, vector<1x1x2x128xf32>,
    %c396 = arith.constant 396 : index
    %557 = memref.load %arg2[%c396] : memref<398xf32, #tpu.memory_space<smem>>
    %558 = vector.broadcast %557 : f32 to vector<2x128xf32>
    %c397 = arith.constant 397 : index
    %559 = memref.load %arg2[%c397] : memref<398xf32, #tpu.memory_space<smem>>
    %560 = vector.broadcast %559 : f32 to vector<2x128xf32>
    %c268 = arith.constant 268 : index
    %561 = memref.load %arg2[%c268] : memref<398xf32, #tpu.memory_space<smem>>
    %562 = vector.broadcast %561 : f32 to vector<2x128xf32>
    %563 = arith.mulf %562, %553 : vector<2x128xf32>
    %c300 = arith.constant 300 : index
    %564 = memref.load %arg2[%c300] : memref<398xf32, #tpu.memory_space<smem>>
    %565 = vector.broadcast %564 : f32 to vector<2x128xf32>
    %566 = arith.addf %563, %565 : vector<2x128xf32>
    %cst_47 = arith.constant 0.000000e+00 : f32
    %567 = vector.broadcast %cst_47 : f32 to vector<2x128xf32>
    %568 = arith.maximumf %566, %567 : vector<2x128xf32>
    %c332 = arith.constant 332 : index
    %569 = memref.load %arg2[%c332] : memref<398xf32, #tpu.memory_space<smem>>
    %570 = vector.broadcast %569 : f32 to vector<2x128xf32>
    %571 = arith.mulf %570, %568 : vector<2x128xf32>
    %572 = arith.addf %558, %571 : vector<2x128xf32>
    %c364 = arith.constant 364 : index
    %573 = memref.load %arg2[%c364] : memref<398xf32, #tpu.memory_space<smem>>
    %574 = vector.broadcast %573 : f32 to vector<2x128xf32>
    %575 = arith.mulf %574, %568 : vector<2x128xf32>
    %576 = arith.addf %560, %575 : vector<2x128xf32>
    %c269 = arith.constant 269 : index
    %577 = memref.load %arg2[%c269] : memref<398xf32, #tpu.memory_space<smem>>
    %578 = vector.broadcast %577 : f32 to vector<2x128xf32>
    %579 = arith.mulf %578, %553 : vector<2x128xf32>
    %c301 = arith.constant 301 : index
    %580 = memref.load %arg2[%c301] : memref<398xf32, #tpu.memory_space<smem>>
    %581 = vector.broadcast %580 : f32 to vector<2x128xf32>
    %582 = arith.addf %579, %581 : vector<2x128xf32>
    %cst_48 = arith.constant 0.000000e+00 : f32
    %583 = vector.broadcast %cst_48 : f32 to vector<2x128xf32>
    %584 = arith.maximumf %582, %583 : vector<2x128xf32>
    %c333 = arith.constant 333 : index
    %585 = memref.load %arg2[%c333] : memref<398xf32, #tpu.memory_space<smem>>
    %586 = vector.broadcast %585 : f32 to vector<2x128xf32>
    %587 = arith.mulf %586, %584 : vector<2x128xf32>
    %588 = arith.addf %572, %587 : vector<2x128xf32>
    %c365 = arith.constant 365 : index
    %589 = memref.load %arg2[%c365] : memref<398xf32, #tpu.memory_space<smem>>
    %590 = vector.broadcast %589 : f32 to vector<2x128xf32>
    %591 = arith.mulf %590, %584 : vector<2x128xf32>
    %592 = arith.addf %576, %591 : vector<2x128xf32>
    %c270 = arith.constant 270 : index
    %593 = memref.load %arg2[%c270] : memref<398xf32, #tpu.memory_space<smem>>
    %594 = vector.broadcast %593 : f32 to vector<2x128xf32>
    %595 = arith.mulf %594, %553 : vector<2x128xf32>
    %c302 = arith.constant 302 : index
    %596 = memref.load %arg2[%c302] : memref<398xf32, #tpu.memory_space<smem>>
    %597 = vector.broadcast %596 : f32 to vector<2x128xf32>
    %598 = arith.addf %595, %597 : vector<2x128xf32>
    %cst_49 = arith.constant 0.000000e+00 : f32
    %599 = vector.broadcast %cst_49 : f32 to vector<2x128xf32>
    %600 = arith.maximumf %598, %599 : vector<2x128xf32>
    %c334 = arith.constant 334 : index
    %601 = memref.load %arg2[%c334] : memref<398xf32, #tpu.memory_space<smem>>
    %602 = vector.broadcast %601 : f32 to vector<2x128xf32>
    %603 = arith.mulf %602, %600 : vector<2x128xf32>
    %604 = arith.addf %588, %603 : vector<2x128xf32>
    %c366 = arith.constant 366 : index
    %605 = memref.load %arg2[%c366] : memref<398xf32, #tpu.memory_space<smem>>
    %606 = vector.broadcast %605 : f32 to vector<2x128xf32>
    %607 = arith.mulf %606, %600 : vector<2x128xf32>
    %608 = arith.addf %592, %607 : vector<2x128xf32>
    %c271 = arith.constant 271 : index
    %609 = memref.load %arg2[%c271] : memref<398xf32, #tpu.memory_space<smem>>
    %610 = vector.broadcast %609 : f32 to vector<2x128xf32>
    %611 = arith.mulf %610, %553 : vector<2x128xf32>
    %c303 = arith.constant 303 : index
    %612 = memref.load %arg2[%c303] : memref<398xf32, #tpu.memory_space<smem>>
    %613 = vector.broadcast %612 : f32 to vector<2x128xf32>
    %614 = arith.addf %611, %613 : vector<2x128xf32>
    %cst_50 = arith.constant 0.000000e+00 : f32
    %615 = vector.broadcast %cst_50 : f32 to vector<2x128xf32>
    %616 = arith.maximumf %614, %615 : vector<2x128xf32>
    %c335 = arith.constant 335 : index
    %617 = memref.load %arg2[%c335] : memref<398xf32, #tpu.memory_space<smem>>
    %618 = vector.broadcast %617 : f32 to vector<2x128xf32>
    %619 = arith.mulf %618, %616 : vector<2x128xf32>
    %620 = arith.addf %604, %619 : vector<2x128xf32>
    %c367 = arith.constant 367 : index
    %621 = memref.load %arg2[%c367] : memref<398xf32, #tpu.memory_space<smem>>
    %622 = vector.broadcast %621 : f32 to vector<2x128xf32>
    %623 = arith.mulf %622, %616 : vector<2x128xf32>
    %624 = arith.addf %608, %623 : vector<2x128xf32>
    %c272 = arith.constant 272 : index
    %625 = memref.load %arg2[%c272] : memref<398xf32, #tpu.memory_space<smem>>
    %626 = vector.broadcast %625 : f32 to vector<2x128xf32>
    %627 = arith.mulf %626, %553 : vector<2x128xf32>
    %c304 = arith.constant 304 : index
    %628 = memref.load %arg2[%c304] : memref<398xf32, #tpu.memory_space<smem>>
    %629 = vector.broadcast %628 : f32 to vector<2x128xf32>
    %630 = arith.addf %627, %629 : vector<2x128xf32>
    %cst_51 = arith.constant 0.000000e+00 : f32
    %631 = vector.broadcast %cst_51 : f32 to vector<2x128xf32>
    %632 = arith.maximumf %630, %631 : vector<2x128xf32>
    %c336 = arith.constant 336 : index
    %633 = memref.load %arg2[%c336] : memref<398xf32, #tpu.memory_space<smem>>
    %634 = vector.broadcast %633 : f32 to vector<2x128xf32>
    %635 = arith.mulf %634, %632 : vector<2x128xf32>
    %636 = arith.addf %620, %635 : vector<2x128xf32>
    %c368 = arith.constant 368 : index
    %637 = memref.load %arg2[%c368] : memref<398xf32, #tpu.memory_space<smem>>
    %638 = vector.broadcast %637 : f32 to vector<2x128xf32>
    %639 = arith.mulf %638, %632 : vector<2x128xf32>
    %640 = arith.addf %624, %639 : vector<2x128xf32>
    %c273 = arith.constant 273 : index
    %641 = memref.load %arg2[%c273] : memref<398xf32, #tpu.memory_space<smem>>
    %642 = vector.broadcast %641 : f32 to vector<2x128xf32>
    %643 = arith.mulf %642, %553 : vector<2x128xf32>
    %c305 = arith.constant 305 : index
    %644 = memref.load %arg2[%c305] : memref<398xf32, #tpu.memory_space<smem>>
    %645 = vector.broadcast %644 : f32 to vector<2x128xf32>
    %646 = arith.addf %643, %645 : vector<2x128xf32>
    %cst_52 = arith.constant 0.000000e+00 : f32
    %647 = vector.broadcast %cst_52 : f32 to vector<2x128xf32>
    %648 = arith.maximumf %646, %647 : vector<2x128xf32>
    %c337 = arith.constant 337 : index
    %649 = memref.load %arg2[%c337] : memref<398xf32, #tpu.memory_space<smem>>
    %650 = vector.broadcast %649 : f32 to vector<2x128xf32>
    %651 = arith.mulf %650, %648 : vector<2x128xf32>
    %652 = arith.addf %636, %651 : vector<2x128xf32>
    %c369 = arith.constant 369 : index
    %653 = memref.load %arg2[%c369] : memref<398xf32, #tpu.memory_space<smem>>
    %654 = vector.broadcast %653 : f32 to vector<2x128xf32>
    %655 = arith.mulf %654, %648 : vector<2x128xf32>
    %656 = arith.addf %640, %655 : vector<2x128xf32>
    %c274 = arith.constant 274 : index
    %657 = memref.load %arg2[%c274] : memref<398xf32, #tpu.memory_space<smem>>
    %658 = vector.broadcast %657 : f32 to vector<2x128xf32>
    %659 = arith.mulf %658, %553 : vector<2x128xf32>
    %c306 = arith.constant 306 : index
    %660 = memref.load %arg2[%c306] : memref<398xf32, #tpu.memory_space<smem>>
    %661 = vector.broadcast %660 : f32 to vector<2x128xf32>
    %662 = arith.addf %659, %661 : vector<2x128xf32>
    %cst_53 = arith.constant 0.000000e+00 : f32
    %663 = vector.broadcast %cst_53 : f32 to vector<2x128xf32>
    %664 = arith.maximumf %662, %663 : vector<2x128xf32>
    %c338 = arith.constant 338 : index
    %665 = memref.load %arg2[%c338] : memref<398xf32, #tpu.memory_space<smem>>
    %666 = vector.broadcast %665 : f32 to vector<2x128xf32>
    %667 = arith.mulf %666, %664 : vector<2x128xf32>
    %668 = arith.addf %652, %667 : vector<2x128xf32>
    %c370 = arith.constant 370 : index
    %669 = memref.load %arg2[%c370] : memref<398xf32, #tpu.memory_space<smem>>
    %670 = vector.broadcast %669 : f32 to vector<2x128xf32>
    %671 = arith.mulf %670, %664 : vector<2x128xf32>
    %672 = arith.addf %656, %671 : vector<2x128xf32>
    %c275 = arith.constant 275 : index
    %673 = memref.load %arg2[%c275] : memref<398xf32, #tpu.memory_space<smem>>
    %674 = vector.broadcast %673 : f32 to vector<2x128xf32>
    %675 = arith.mulf %674, %553 : vector<2x128xf32>
    %c307 = arith.constant 307 : index
    %676 = memref.load %arg2[%c307] : memref<398xf32, #tpu.memory_space<smem>>
    %677 = vector.broadcast %676 : f32 to vector<2x128xf32>
    %678 = arith.addf %675, %677 : vector<2x128xf32>
    %cst_54 = arith.constant 0.000000e+00 : f32
    %679 = vector.broadcast %cst_54 : f32 to vector<2x128xf32>
    %680 = arith.maximumf %678, %679 : vector<2x128xf32>
    %c339 = arith.constant 339 : index
    %681 = memref.load %arg2[%c339] : memref<398xf32, #tpu.memory_space<smem>>
    %682 = vector.broadcast %681 : f32 to vector<2x128xf32>
    %683 = arith.mulf %682, %680 : vector<2x128xf32>
    %684 = arith.addf %668, %683 : vector<2x128xf32>
    %c371 = arith.constant 371 : index
    %685 = memref.load %arg2[%c371] : memref<398xf32, #tpu.memory_space<smem>>
    %686 = vector.broadcast %685 : f32 to vector<2x128xf32>
    %687 = arith.mulf %686, %680 : vector<2x128xf32>
    %688 = arith.addf %672, %687 : vector<2x128xf32>
    %c276 = arith.constant 276 : index
    %689 = memref.load %arg2[%c276] : memref<398xf32, #tpu.memory_space<smem>>
    %690 = vector.broadcast %689 : f32 to vector<2x128xf32>
    %691 = arith.mulf %690, %553 : vector<2x128xf32>
    %c308 = arith.constant 308 : index
    %692 = memref.load %arg2[%c308] : memref<398xf32, #tpu.memory_space<smem>>
    %693 = vector.broadcast %692 : f32 to vector<2x128xf32>
    %694 = arith.addf %691, %693 : vector<2x128xf32>
    %cst_55 = arith.constant 0.000000e+00 : f32
    %695 = vector.broadcast %cst_55 : f32 to vector<2x128xf32>
    %696 = arith.maximumf %694, %695 : vector<2x128xf32>
    %c340 = arith.constant 340 : index
    %697 = memref.load %arg2[%c340] : memref<398xf32, #tpu.memory_space<smem>>
    %698 = vector.broadcast %697 : f32 to vector<2x128xf32>
    %699 = arith.mulf %698, %696 : vector<2x128xf32>
    %700 = arith.addf %684, %699 : vector<2x128xf32>
    %c372 = arith.constant 372 : index
    %701 = memref.load %arg2[%c372] : memref<398xf32, #tpu.memory_space<smem>>
    %702 = vector.broadcast %701 : f32 to vector<2x128xf32>
    %703 = arith.mulf %702, %696 : vector<2x128xf32>
    %704 = arith.addf %688, %703 : vector<2x128xf32>
    %c277 = arith.constant 277 : index
    %705 = memref.load %arg2[%c277] : memref<398xf32, #tpu.memory_space<smem>>
    %706 = vector.broadcast %705 : f32 to vector<2x128xf32>
    %707 = arith.mulf %706, %553 : vector<2x128xf32>
    %c309 = arith.constant 309 : index
    %708 = memref.load %arg2[%c309] : memref<398xf32, #tpu.memory_space<smem>>
    %709 = vector.broadcast %708 : f32 to vector<2x128xf32>
    %710 = arith.addf %707, %709 : vector<2x128xf32>
    %cst_56 = arith.constant 0.000000e+00 : f32
    %711 = vector.broadcast %cst_56 : f32 to vector<2x128xf32>
    %712 = arith.maximumf %710, %711 : vector<2x128xf32>
    %c341 = arith.constant 341 : index
    %713 = memref.load %arg2[%c341] : memref<398xf32, #tpu.memory_space<smem>>
    %714 = vector.broadcast %713 : f32 to vector<2x128xf32>
    %715 = arith.mulf %714, %712 : vector<2x128xf32>
    %716 = arith.addf %700, %715 : vector<2x128xf32>
    %c373 = arith.constant 373 : index
    %717 = memref.load %arg2[%c373] : memref<398xf32, #tpu.memory_space<smem>>
    %718 = vector.broadcast %717 : f32 to vector<2x128xf32>
    %719 = arith.mulf %718, %712 : vector<2x128xf32>
    %720 = arith.addf %704, %719 : vector<2x128xf32>
    %c278 = arith.constant 278 : index
    %721 = memref.load %arg2[%c278] : memref<398xf32, #tpu.memory_space<smem>>
    %722 = vector.broadcast %721 : f32 to vector<2x128xf32>
    %723 = arith.mulf %722, %553 : vector<2x128xf32>
    %c310 = arith.constant 310 : index
    %724 = memref.load %arg2[%c310] : memref<398xf32, #tpu.memory_space<smem>>
    %725 = vector.broadcast %724 : f32 to vector<2x128xf32>
    %726 = arith.addf %723, %725 : vector<2x128xf32>
    %cst_57 = arith.constant 0.000000e+00 : f32
    %727 = vector.broadcast %cst_57 : f32 to vector<2x128xf32>
    %728 = arith.maximumf %726, %727 : vector<2x128xf32>
    %c342 = arith.constant 342 : index
    %729 = memref.load %arg2[%c342] : memref<398xf32, #tpu.memory_space<smem>>
    %730 = vector.broadcast %729 : f32 to vector<2x128xf32>
    %731 = arith.mulf %730, %728 : vector<2x128xf32>
    %732 = arith.addf %716, %731 : vector<2x128xf32>
    %c374 = arith.constant 374 : index
    %733 = memref.load %arg2[%c374] : memref<398xf32, #tpu.memory_space<smem>>
    %734 = vector.broadcast %733 : f32 to vector<2x128xf32>
    %735 = arith.mulf %734, %728 : vector<2x128xf32>
    %736 = arith.addf %720, %735 : vector<2x128xf32>
    %c279 = arith.constant 279 : index
    %737 = memref.load %arg2[%c279] : memref<398xf32, #tpu.memory_space<smem>>
    %738 = vector.broadcast %737 : f32 to vector<2x128xf32>
    %739 = arith.mulf %738, %553 : vector<2x128xf32>
    %c311 = arith.constant 311 : index
    %740 = memref.load %arg2[%c311] : memref<398xf32, #tpu.memory_space<smem>>
    %741 = vector.broadcast %740 : f32 to vector<2x128xf32>
    %742 = arith.addf %739, %741 : vector<2x128xf32>
    %cst_58 = arith.constant 0.000000e+00 : f32
    %743 = vector.broadcast %cst_58 : f32 to vector<2x128xf32>
    %744 = arith.maximumf %742, %743 : vector<2x128xf32>
    %c343 = arith.constant 343 : index
    %745 = memref.load %arg2[%c343] : memref<398xf32, #tpu.memory_space<smem>>
    %746 = vector.broadcast %745 : f32 to vector<2x128xf32>
    %747 = arith.mulf %746, %744 : vector<2x128xf32>
    %748 = arith.addf %732, %747 : vector<2x128xf32>
    %c375 = arith.constant 375 : index
    %749 = memref.load %arg2[%c375] : memref<398xf32, #tpu.memory_space<smem>>
    %750 = vector.broadcast %749 : f32 to vector<2x128xf32>
    %751 = arith.mulf %750, %744 : vector<2x128xf32>
    %752 = arith.addf %736, %751 : vector<2x128xf32>
    %c280 = arith.constant 280 : index
    %753 = memref.load %arg2[%c280] : memref<398xf32, #tpu.memory_space<smem>>
    %754 = vector.broadcast %753 : f32 to vector<2x128xf32>
    %755 = arith.mulf %754, %553 : vector<2x128xf32>
    %c312 = arith.constant 312 : index
    %756 = memref.load %arg2[%c312] : memref<398xf32, #tpu.memory_space<smem>>
    %757 = vector.broadcast %756 : f32 to vector<2x128xf32>
    %758 = arith.addf %755, %757 : vector<2x128xf32>
    %cst_59 = arith.constant 0.000000e+00 : f32
    %759 = vector.broadcast %cst_59 : f32 to vector<2x128xf32>
    %760 = arith.maximumf %758, %759 : vector<2x128xf32>
    %c344 = arith.constant 344 : index
    %761 = memref.load %arg2[%c344] : memref<398xf32, #tpu.memory_space<smem>>
    %762 = vector.broadcast %761 : f32 to vector<2x128xf32>
    %763 = arith.mulf %762, %760 : vector<2x128xf32>
    %764 = arith.addf %748, %763 : vector<2x128xf32>
    %c376 = arith.constant 376 : index
    %765 = memref.load %arg2[%c376] : memref<398xf32, #tpu.memory_space<smem>>
    %766 = vector.broadcast %765 : f32 to vector<2x128xf32>
    %767 = arith.mulf %766, %760 : vector<2x128xf32>
    %768 = arith.addf %752, %767 : vector<2x128xf32>
    %c281 = arith.constant 281 : index
    %769 = memref.load %arg2[%c281] : memref<398xf32, #tpu.memory_space<smem>>
    %770 = vector.broadcast %769 : f32 to vector<2x128xf32>
    %771 = arith.mulf %770, %553 : vector<2x128xf32>
    %c313 = arith.constant 313 : index
    %772 = memref.load %arg2[%c313] : memref<398xf32, #tpu.memory_space<smem>>
    %773 = vector.broadcast %772 : f32 to vector<2x128xf32>
    %774 = arith.addf %771, %773 : vector<2x128xf32>
    %cst_60 = arith.constant 0.000000e+00 : f32
    %775 = vector.broadcast %cst_60 : f32 to vector<2x128xf32>
    %776 = arith.maximumf %774, %775 : vector<2x128xf32>
    %c345 = arith.constant 345 : index
    %777 = memref.load %arg2[%c345] : memref<398xf32, #tpu.memory_space<smem>>
    %778 = vector.broadcast %777 : f32 to vector<2x128xf32>
    %779 = arith.mulf %778, %776 : vector<2x128xf32>
    %780 = arith.addf %764, %779 : vector<2x128xf32>
    %c377 = arith.constant 377 : index
    %781 = memref.load %arg2[%c377] : memref<398xf32, #tpu.memory_space<smem>>
    %782 = vector.broadcast %781 : f32 to vector<2x128xf32>
    %783 = arith.mulf %782, %776 : vector<2x128xf32>
    %784 = arith.addf %768, %783 : vector<2x128xf32>
    %c282 = arith.constant 282 : index
    %785 = memref.load %arg2[%c282] : memref<398xf32, #tpu.memory_space<smem>>
    %786 = vector.broadcast %785 : f32 to vector<2x128xf32>
    %787 = arith.mulf %786, %553 : vector<2x128xf32>
    %c314 = arith.constant 314 : index
    %788 = memref.load %arg2[%c314] : memref<398xf32, #tpu.memory_space<smem>>
    %789 = vector.broadcast %788 : f32 to vector<2x128xf32>
    %790 = arith.addf %787, %789 : vector<2x128xf32>
    %cst_61 = arith.constant 0.000000e+00 : f32
    %791 = vector.broadcast %cst_61 : f32 to vector<2x128xf32>
    %792 = arith.maximumf %790, %791 : vector<2x128xf32>
    %c346 = arith.constant 346 : index
    %793 = memref.load %arg2[%c346] : memref<398xf32, #tpu.memory_space<smem>>
    %794 = vector.broadcast %793 : f32 to vector<2x128xf32>
    %795 = arith.mulf %794, %792 : vector<2x128xf32>
    %796 = arith.addf %780, %795 : vector<2x128xf32>
    %c378 = arith.constant 378 : index
    %797 = memref.load %arg2[%c378] : memref<398xf32, #tpu.memory_space<smem>>
    %798 = vector.broadcast %797 : f32 to vector<2x128xf32>
    %799 = arith.mulf %798, %792 : vector<2x128xf32>
    %800 = arith.addf %784, %799 : vector<2x128xf32>
    %c283 = arith.constant 283 : index
    %801 = memref.load %arg2[%c283] : memref<398xf32, #tpu.memory_space<smem>>
    %802 = vector.broadcast %801 : f32 to vector<2x128xf32>
    %803 = arith.mulf %802, %553 : vector<2x128xf32>
    %c315 = arith.constant 315 : index
    %804 = memref.load %arg2[%c315] : memref<398xf32, #tpu.memory_space<smem>>
    %805 = vector.broadcast %804 : f32 to vector<2x128xf32>
    %806 = arith.addf %803, %805 : vector<2x128xf32>
    %cst_62 = arith.constant 0.000000e+00 : f32
    %807 = vector.broadcast %cst_62 : f32 to vector<2x128xf32>
    %808 = arith.maximumf %806, %807 : vector<2x128xf32>
    %c347 = arith.constant 347 : index
    %809 = memref.load %arg2[%c347] : memref<398xf32, #tpu.memory_space<smem>>
    %810 = vector.broadcast %809 : f32 to vector<2x128xf32>
    %811 = arith.mulf %810, %808 : vector<2x128xf32>
    %812 = arith.addf %796, %811 : vector<2x128xf32>
    %c379 = arith.constant 379 : index
    %813 = memref.load %arg2[%c379] : memref<398xf32, #tpu.memory_space<smem>>
    %814 = vector.broadcast %813 : f32 to vector<2x128xf32>
    %815 = arith.mulf %814, %808 : vector<2x128xf32>
    %816 = arith.addf %800, %815 : vector<2x128xf32>
    %c284 = arith.constant 284 : index
    %817 = memref.load %arg2[%c284] : memref<398xf32, #tpu.memory_space<smem>>
    %818 = vector.broadcast %817 : f32 to vector<2x128xf32>
    %819 = arith.mulf %818, %553 : vector<2x128xf32>
    %c316 = arith.constant 316 : index
    %820 = memref.load %arg2[%c316] : memref<398xf32, #tpu.memory_space<smem>>
    %821 = vector.broadcast %820 : f32 to vector<2x128xf32>
    %822 = arith.addf %819, %821 : vector<2x128xf32>
    %cst_63 = arith.constant 0.000000e+00 : f32
    %823 = vector.broadcast %cst_63 : f32 to vector<2x128xf32>
    %824 = arith.maximumf %822, %823 : vector<2x128xf32>
    %c348 = arith.constant 348 : index
    %825 = memref.load %arg2[%c348] : memref<398xf32, #tpu.memory_space<smem>>
    %826 = vector.broadcast %825 : f32 to vector<2x128xf32>
    %827 = arith.mulf %826, %824 : vector<2x128xf32>
    %828 = arith.addf %812, %827 : vector<2x128xf32>
    %c380 = arith.constant 380 : index
    %829 = memref.load %arg2[%c380] : memref<398xf32, #tpu.memory_space<smem>>
    %830 = vector.broadcast %829 : f32 to vector<2x128xf32>
    %831 = arith.mulf %830, %824 : vector<2x128xf32>
    %832 = arith.addf %816, %831 : vector<2x128xf32>
    %c285 = arith.constant 285 : index
    %833 = memref.load %arg2[%c285] : memref<398xf32, #tpu.memory_space<smem>>
    %834 = vector.broadcast %833 : f32 to vector<2x128xf32>
    %835 = arith.mulf %834, %553 : vector<2x128xf32>
    %c317 = arith.constant 317 : index
    %836 = memref.load %arg2[%c317] : memref<398xf32, #tpu.memory_space<smem>>
    %837 = vector.broadcast %836 : f32 to vector<2x128xf32>
    %838 = arith.addf %835, %837 : vector<2x128xf32>
    %cst_64 = arith.constant 0.000000e+00 : f32
    %839 = vector.broadcast %cst_64 : f32 to vector<2x128xf32>
    %840 = arith.maximumf %838, %839 : vector<2x128xf32>
    %c349 = arith.constant 349 : index
    %841 = memref.load %arg2[%c349] : memref<398xf32, #tpu.memory_space<smem>>
    %842 = vector.broadcast %841 : f32 to vector<2x128xf32>
    %843 = arith.mulf %842, %840 : vector<2x128xf32>
    %844 = arith.addf %828, %843 : vector<2x128xf32>
    %c381 = arith.constant 381 : index
    %845 = memref.load %arg2[%c381] : memref<398xf32, #tpu.memory_space<smem>>
    %846 = vector.broadcast %845 : f32 to vector<2x128xf32>
    %847 = arith.mulf %846, %840 : vector<2x128xf32>
    %848 = arith.addf %832, %847 : vector<2x128xf32>
    %c286 = arith.constant 286 : index
    %849 = memref.load %arg2[%c286] : memref<398xf32, #tpu.memory_space<smem>>
    %850 = vector.broadcast %849 : f32 to vector<2x128xf32>
    %851 = arith.mulf %850, %553 : vector<2x128xf32>
    %c318 = arith.constant 318 : index
    %852 = memref.load %arg2[%c318] : memref<398xf32, #tpu.memory_space<smem>>
    %853 = vector.broadcast %852 : f32 to vector<2x128xf32>
    %854 = arith.addf %851, %853 : vector<2x128xf32>
    %cst_65 = arith.constant 0.000000e+00 : f32
    %855 = vector.broadcast %cst_65 : f32 to vector<2x128xf32>
    %856 = arith.maximumf %854, %855 : vector<2x128xf32>
    %c350 = arith.constant 350 : index
    %857 = memref.load %arg2[%c350] : memref<398xf32, #tpu.memory_space<smem>>
    %858 = vector.broadcast %857 : f32 to vector<2x128xf32>
    %859 = arith.mulf %858, %856 : vector<2x128xf32>
    %860 = arith.addf %844, %859 : vector<2x128xf32>
    %c382 = arith.constant 382 : index
    %861 = memref.load %arg2[%c382] : memref<398xf32, #tpu.memory_space<smem>>
    %862 = vector.broadcast %861 : f32 to vector<2x128xf32>
    %863 = arith.mulf %862, %856 : vector<2x128xf32>
    %864 = arith.addf %848, %863 : vector<2x128xf32>
    %c287 = arith.constant 287 : index
    %865 = memref.load %arg2[%c287] : memref<398xf32, #tpu.memory_space<smem>>
    %866 = vector.broadcast %865 : f32 to vector<2x128xf32>
    %867 = arith.mulf %866, %553 : vector<2x128xf32>
    %c319 = arith.constant 319 : index
    %868 = memref.load %arg2[%c319] : memref<398xf32, #tpu.memory_space<smem>>
    %869 = vector.broadcast %868 : f32 to vector<2x128xf32>
    %870 = arith.addf %867, %869 : vector<2x128xf32>
    %cst_66 = arith.constant 0.000000e+00 : f32
    %871 = vector.broadcast %cst_66 : f32 to vector<2x128xf32>
    %872 = arith.maximumf %870, %871 : vector<2x128xf32>
    %c351 = arith.constant 351 : index
    %873 = memref.load %arg2[%c351] : memref<398xf32, #tpu.memory_space<smem>>
    %874 = vector.broadcast %873 : f32 to vector<2x128xf32>
    %875 = arith.mulf %874, %872 : vector<2x128xf32>
    %876 = arith.addf %860, %875 : vector<2x128xf32>
    %c383 = arith.constant 383 : index
    %877 = memref.load %arg2[%c383] : memref<398xf32, #tpu.memory_space<smem>>
    %878 = vector.broadcast %877 : f32 to vector<2x128xf32>
    %879 = arith.mulf %878, %872 : vector<2x128xf32>
    %880 = arith.addf %864, %879 : vector<2x128xf32>
    %c288 = arith.constant 288 : index
    %881 = memref.load %arg2[%c288] : memref<398xf32, #tpu.memory_space<smem>>
    %882 = vector.broadcast %881 : f32 to vector<2x128xf32>
    %883 = arith.mulf %882, %553 : vector<2x128xf32>
    %c320 = arith.constant 320 : index
    %884 = memref.load %arg2[%c320] : memref<398xf32, #tpu.memory_space<smem>>
    %885 = vector.broadcast %884 : f32 to vector<2x128xf32>
    %886 = arith.addf %883, %885 : vector<2x128xf32>
    %cst_67 = arith.constant 0.000000e+00 : f32
    %887 = vector.broadcast %cst_67 : f32 to vector<2x128xf32>
    %888 = arith.maximumf %886, %887 : vector<2x128xf32>
    %c352 = arith.constant 352 : index
    %889 = memref.load %arg2[%c352] : memref<398xf32, #tpu.memory_space<smem>>
    %890 = vector.broadcast %889 : f32 to vector<2x128xf32>
    %891 = arith.mulf %890, %888 : vector<2x128xf32>
    %892 = arith.addf %876, %891 : vector<2x128xf32>
    %c384 = arith.constant 384 : index
    %893 = memref.load %arg2[%c384] : memref<398xf32, #tpu.memory_space<smem>>
    %894 = vector.broadcast %893 : f32 to vector<2x128xf32>
    %895 = arith.mulf %894, %888 : vector<2x128xf32>
    %896 = arith.addf %880, %895 : vector<2x128xf32>
    %c289 = arith.constant 289 : index
    %897 = memref.load %arg2[%c289] : memref<398xf32, #tpu.memory_space<smem>>
    %898 = vector.broadcast %897 : f32 to vector<2x128xf32>
    %899 = arith.mulf %898, %553 : vector<2x128xf32>
    %c321 = arith.constant 321 : index
    %900 = memref.load %arg2[%c321] : memref<398xf32, #tpu.memory_space<smem>>
    %901 = vector.broadcast %900 : f32 to vector<2x128xf32>
    %902 = arith.addf %899, %901 : vector<2x128xf32>
    %cst_68 = arith.constant 0.000000e+00 : f32
    %903 = vector.broadcast %cst_68 : f32 to vector<2x128xf32>
    %904 = arith.maximumf %902, %903 : vector<2x128xf32>
    %c353 = arith.constant 353 : index
    %905 = memref.load %arg2[%c353] : memref<398xf32, #tpu.memory_space<smem>>
    %906 = vector.broadcast %905 : f32 to vector<2x128xf32>
    %907 = arith.mulf %906, %904 : vector<2x128xf32>
    %908 = arith.addf %892, %907 : vector<2x128xf32>
    %c385 = arith.constant 385 : index
    %909 = memref.load %arg2[%c385] : memref<398xf32, #tpu.memory_space<smem>>
    %910 = vector.broadcast %909 : f32 to vector<2x128xf32>
    %911 = arith.mulf %910, %904 : vector<2x128xf32>
    %912 = arith.addf %896, %911 : vector<2x128xf32>
    %c290 = arith.constant 290 : index
    %913 = memref.load %arg2[%c290] : memref<398xf32, #tpu.memory_space<smem>>
    %914 = vector.broadcast %913 : f32 to vector<2x128xf32>
    %915 = arith.mulf %914, %553 : vector<2x128xf32>
    %c322 = arith.constant 322 : index
    %916 = memref.load %arg2[%c322] : memref<398xf32, #tpu.memory_space<smem>>
    %917 = vector.broadcast %916 : f32 to vector<2x128xf32>
    %918 = arith.addf %915, %917 : vector<2x128xf32>
    %cst_69 = arith.constant 0.000000e+00 : f32
    %919 = vector.broadcast %cst_69 : f32 to vector<2x128xf32>
    %920 = arith.maximumf %918, %919 : vector<2x128xf32>
    %c354 = arith.constant 354 : index
    %921 = memref.load %arg2[%c354] : memref<398xf32, #tpu.memory_space<smem>>
    %922 = vector.broadcast %921 : f32 to vector<2x128xf32>
    %923 = arith.mulf %922, %920 : vector<2x128xf32>
    %924 = arith.addf %908, %923 : vector<2x128xf32>
    %c386 = arith.constant 386 : index
    %925 = memref.load %arg2[%c386] : memref<398xf32, #tpu.memory_space<smem>>
    %926 = vector.broadcast %925 : f32 to vector<2x128xf32>
    %927 = arith.mulf %926, %920 : vector<2x128xf32>
    %928 = arith.addf %912, %927 : vector<2x128xf32>
    %c291 = arith.constant 291 : index
    %929 = memref.load %arg2[%c291] : memref<398xf32, #tpu.memory_space<smem>>
    %930 = vector.broadcast %929 : f32 to vector<2x128xf32>
    %931 = arith.mulf %930, %553 : vector<2x128xf32>
    %c323 = arith.constant 323 : index
    %932 = memref.load %arg2[%c323] : memref<398xf32, #tpu.memory_space<smem>>
    %933 = vector.broadcast %932 : f32 to vector<2x128xf32>
    %934 = arith.addf %931, %933 : vector<2x128xf32>
    %cst_70 = arith.constant 0.000000e+00 : f32
    %935 = vector.broadcast %cst_70 : f32 to vector<2x128xf32>
    %936 = arith.maximumf %934, %935 : vector<2x128xf32>
    %c355 = arith.constant 355 : index
    %937 = memref.load %arg2[%c355] : memref<398xf32, #tpu.memory_space<smem>>
    %938 = vector.broadcast %937 : f32 to vector<2x128xf32>
    %939 = arith.mulf %938, %936 : vector<2x128xf32>
    %940 = arith.addf %924, %939 : vector<2x128xf32>
    %c387 = arith.constant 387 : index
    %941 = memref.load %arg2[%c387] : memref<398xf32, #tpu.memory_space<smem>>
    %942 = vector.broadcast %941 : f32 to vector<2x128xf32>
    %943 = arith.mulf %942, %936 : vector<2x128xf32>
    %944 = arith.addf %928, %943 : vector<2x128xf32>
    %c292 = arith.constant 292 : index
    %945 = memref.load %arg2[%c292] : memref<398xf32, #tpu.memory_space<smem>>
    %946 = vector.broadcast %945 : f32 to vector<2x128xf32>
    %947 = arith.mulf %946, %553 : vector<2x128xf32>
    %c324 = arith.constant 324 : index
    %948 = memref.load %arg2[%c324] : memref<398xf32, #tpu.memory_space<smem>>
    %949 = vector.broadcast %948 : f32 to vector<2x128xf32>
    %950 = arith.addf %947, %949 : vector<2x128xf32>
    %cst_71 = arith.constant 0.000000e+00 : f32
    %951 = vector.broadcast %cst_71 : f32 to vector<2x128xf32>
    %952 = arith.maximumf %950, %951 : vector<2x128xf32>
    %c356 = arith.constant 356 : index
    %953 = memref.load %arg2[%c356] : memref<398xf32, #tpu.memory_space<smem>>
    %954 = vector.broadcast %953 : f32 to vector<2x128xf32>
    %955 = arith.mulf %954, %952 : vector<2x128xf32>
    %956 = arith.addf %940, %955 : vector<2x128xf32>
    %c388 = arith.constant 388 : index
    %957 = memref.load %arg2[%c388] : memref<398xf32, #tpu.memory_space<smem>>
    %958 = vector.broadcast %957 : f32 to vector<2x128xf32>
    %959 = arith.mulf %958, %952 : vector<2x128xf32>
    %960 = arith.addf %944, %959 : vector<2x128xf32>
    %c293 = arith.constant 293 : index
    %961 = memref.load %arg2[%c293] : memref<398xf32, #tpu.memory_space<smem>>
    %962 = vector.broadcast %961 : f32 to vector<2x128xf32>
    %963 = arith.mulf %962, %553 : vector<2x128xf32>
    %c325 = arith.constant 325 : index
    %964 = memref.load %arg2[%c325] : memref<398xf32, #tpu.memory_space<smem>>
    %965 = vector.broadcast %964 : f32 to vector<2x128xf32>
    %966 = arith.addf %963, %965 : vector<2x128xf32>
    %cst_72 = arith.constant 0.000000e+00 : f32
    %967 = vector.broadcast %cst_72 : f32 to vector<2x128xf32>
    %968 = arith.maximumf %966, %967 : vector<2x128xf32>
    %c357 = arith.constant 357 : index
    %969 = memref.load %arg2[%c357] : memref<398xf32, #tpu.memory_space<smem>>
    %970 = vector.broadcast %969 : f32 to vector<2x128xf32>
    %971 = arith.mulf %970, %968 : vector<2x128xf32>
    %972 = arith.addf %956, %971 : vector<2x128xf32>
    %c389 = arith.constant 389 : index
    %973 = memref.load %arg2[%c389] : memref<398xf32, #tpu.memory_space<smem>>
    %974 = vector.broadcast %973 : f32 to vector<2x128xf32>
    %975 = arith.mulf %974, %968 : vector<2x128xf32>
    %976 = arith.addf %960, %975 : vector<2x128xf32>
    %c294 = arith.constant 294 : index
    %977 = memref.load %arg2[%c294] : memref<398xf32, #tpu.memory_space<smem>>
    %978 = vector.broadcast %977 : f32 to vector<2x128xf32>
    %979 = arith.mulf %978, %553 : vector<2x128xf32>
    %c326 = arith.constant 326 : index
    %980 = memref.load %arg2[%c326] : memref<398xf32, #tpu.memory_space<smem>>
    %981 = vector.broadcast %980 : f32 to vector<2x128xf32>
    %982 = arith.addf %979, %981 : vector<2x128xf32>
    %cst_73 = arith.constant 0.000000e+00 : f32
    %983 = vector.broadcast %cst_73 : f32 to vector<2x128xf32>
    %984 = arith.maximumf %982, %983 : vector<2x128xf32>
    %c358 = arith.constant 358 : index
    %985 = memref.load %arg2[%c358] : memref<398xf32, #tpu.memory_space<smem>>
    %986 = vector.broadcast %985 : f32 to vector<2x128xf32>
    %987 = arith.mulf %986, %984 : vector<2x128xf32>
    %988 = arith.addf %972, %987 : vector<2x128xf32>
    %c390 = arith.constant 390 : index
    %989 = memref.load %arg2[%c390] : memref<398xf32, #tpu.memory_space<smem>>
    %990 = vector.broadcast %989 : f32 to vector<2x128xf32>
    %991 = arith.mulf %990, %984 : vector<2x128xf32>
    %992 = arith.addf %976, %991 : vector<2x128xf32>
    %c295 = arith.constant 295 : index
    %993 = memref.load %arg2[%c295] : memref<398xf32, #tpu.memory_space<smem>>
    %994 = vector.broadcast %993 : f32 to vector<2x128xf32>
    %995 = arith.mulf %994, %553 : vector<2x128xf32>
    %c327 = arith.constant 327 : index
    %996 = memref.load %arg2[%c327] : memref<398xf32, #tpu.memory_space<smem>>
    %997 = vector.broadcast %996 : f32 to vector<2x128xf32>
    %998 = arith.addf %995, %997 : vector<2x128xf32>
    %cst_74 = arith.constant 0.000000e+00 : f32
    %999 = vector.broadcast %cst_74 : f32 to vector<2x128xf32>
    %1000 = arith.maximumf %998, %999 : vector<2x128xf32>
    %c359 = arith.constant 359 : index
    %1001 = memref.load %arg2[%c359] : memref<398xf32, #tpu.memory_space<smem>>
    %1002 = vector.broadcast %1001 : f32 to vector<2x128xf32>
    %1003 = arith.mulf %1002, %1000 : vector<2x128xf32>
    %1004 = arith.addf %988, %1003 : vector<2x128xf32>
    %c391 = arith.constant 391 : index
    %1005 = memref.load %arg2[%c391] : memref<398xf32, #tpu.memory_space<smem>>
    %1006 = vector.broadcast %1005 : f32 to vector<2x128xf32>
    %1007 = arith.mulf %1006, %1000 : vector<2x128xf32>
    %1008 = arith.addf %992, %1007 : vector<2x128xf32>
    %c296 = arith.constant 296 : index
    %1009 = memref.load %arg2[%c296] : memref<398xf32, #tpu.memory_space<smem>>
    %1010 = vector.broadcast %1009 : f32 to vector<2x128xf32>
    %1011 = arith.mulf %1010, %553 : vector<2x128xf32>
    %c328 = arith.constant 328 : index
    %1012 = memref.load %arg2[%c328] : memref<398xf32, #tpu.memory_space<smem>>
    %1013 = vector.broadcast %1012 : f32 to vector<2x128xf32>
    %1014 = arith.addf %1011, %1013 : vector<2x128xf32>
    %cst_75 = arith.constant 0.000000e+00 : f32
    %1015 = vector.broadcast %cst_75 : f32 to vector<2x128xf32>
    %1016 = arith.maximumf %1014, %1015 : vector<2x128xf32>
    %c360 = arith.constant 360 : index
    %1017 = memref.load %arg2[%c360] : memref<398xf32, #tpu.memory_space<smem>>
    %1018 = vector.broadcast %1017 : f32 to vector<2x128xf32>
    %1019 = arith.mulf %1018, %1016 : vector<2x128xf32>
    %1020 = arith.addf %1004, %1019 : vector<2x128xf32>
    %c392 = arith.constant 392 : index
    %1021 = memref.load %arg2[%c392] : memref<398xf32, #tpu.memory_space<smem>>
    %1022 = vector.broadcast %1021 : f32 to vector<2x128xf32>
    %1023 = arith.mulf %1022, %1016 : vector<2x128xf32>
    %1024 = arith.addf %1008, %1023 : vector<2x128xf32>
    %c297 = arith.constant 297 : index
    %1025 = memref.load %arg2[%c297] : memref<398xf32, #tpu.memory_space<smem>>
    %1026 = vector.broadcast %1025 : f32 to vector<2x128xf32>
    %1027 = arith.mulf %1026, %553 : vector<2x128xf32>
    %c329 = arith.constant 329 : index
    %1028 = memref.load %arg2[%c329] : memref<398xf32, #tpu.memory_space<smem>>
    %1029 = vector.broadcast %1028 : f32 to vector<2x128xf32>
    %1030 = arith.addf %1027, %1029 : vector<2x128xf32>
    %cst_76 = arith.constant 0.000000e+00 : f32
    %1031 = vector.broadcast %cst_76 : f32 to vector<2x128xf32>
    %1032 = arith.maximumf %1030, %1031 : vector<2x128xf32>
    %c361 = arith.constant 361 : index
    %1033 = memref.load %arg2[%c361] : memref<398xf32, #tpu.memory_space<smem>>
    %1034 = vector.broadcast %1033 : f32 to vector<2x128xf32>
    %1035 = arith.mulf %1034, %1032 : vector<2x128xf32>
    %1036 = arith.addf %1020, %1035 : vector<2x128xf32>
    %c393 = arith.constant 393 : index
    %1037 = memref.load %arg2[%c393] : memref<398xf32, #tpu.memory_space<smem>>
    %1038 = vector.broadcast %1037 : f32 to vector<2x128xf32>
    %1039 = arith.mulf %1038, %1032 : vector<2x128xf32>
    %1040 = arith.addf %1024, %1039 : vector<2x128xf32>
    %c298 = arith.constant 298 : index
    %1041 = memref.load %arg2[%c298] : memref<398xf32, #tpu.memory_space<smem>>
    %1042 = vector.broadcast %1041 : f32 to vector<2x128xf32>
    %1043 = arith.mulf %1042, %553 : vector<2x128xf32>
    %c330 = arith.constant 330 : index
    %1044 = memref.load %arg2[%c330] : memref<398xf32, #tpu.memory_space<smem>>
    %1045 = vector.broadcast %1044 : f32 to vector<2x128xf32>
    %1046 = arith.addf %1043, %1045 : vector<2x128xf32>
    %cst_77 = arith.constant 0.000000e+00 : f32
    %1047 = vector.broadcast %cst_77 : f32 to vector<2x128xf32>
    %1048 = arith.maximumf %1046, %1047 : vector<2x128xf32>
    %c362 = arith.constant 362 : index
    %1049 = memref.load %arg2[%c362] : memref<398xf32, #tpu.memory_space<smem>>
    %1050 = vector.broadcast %1049 : f32 to vector<2x128xf32>
    %1051 = arith.mulf %1050, %1048 : vector<2x128xf32>
    %1052 = arith.addf %1036, %1051 : vector<2x128xf32>
    %c394 = arith.constant 394 : index
    %1053 = memref.load %arg2[%c394] : memref<398xf32, #tpu.memory_space<smem>>
    %1054 = vector.broadcast %1053 : f32 to vector<2x128xf32>
    %1055 = arith.mulf %1054, %1048 : vector<2x128xf32>
    %1056 = arith.addf %1040, %1055 : vector<2x128xf32>
    %c299 = arith.constant 299 : index
    %1057 = memref.load %arg2[%c299] : memref<398xf32, #tpu.memory_space<smem>>
    %1058 = vector.broadcast %1057 : f32 to vector<2x128xf32>
    %1059 = arith.mulf %1058, %553 : vector<2x128xf32>
    %c331 = arith.constant 331 : index
    %1060 = memref.load %arg2[%c331] : memref<398xf32, #tpu.memory_space<smem>>
    %1061 = vector.broadcast %1060 : f32 to vector<2x128xf32>
    %1062 = arith.addf %1059, %1061 : vector<2x128xf32>
    %cst_78 = arith.constant 0.000000e+00 : f32
    %1063 = vector.broadcast %cst_78 : f32 to vector<2x128xf32>
    %1064 = arith.maximumf %1062, %1063 : vector<2x128xf32>
    %c363 = arith.constant 363 : index
    %1065 = memref.load %arg2[%c363] : memref<398xf32, #tpu.memory_space<smem>>
    %1066 = vector.broadcast %1065 : f32 to vector<2x128xf32>
    %1067 = arith.mulf %1066, %1064 : vector<2x128xf32>
    %1068 = arith.addf %1052, %1067 : vector<2x128xf32>
    %c395 = arith.constant 395 : index
    %1069 = memref.load %arg2[%c395] : memref<398xf32, #tpu.memory_space<smem>>
    %1070 = vector.broadcast %1069 : f32 to vector<2x128xf32>
    %1071 = arith.mulf %1070, %1064 : vector<2x128xf32>
    %1072 = arith.addf %1056, %1071 : vector<2x128xf32>
    %1073 = math.tanh %1068 : vector<2x128xf32>
    %cst_79 = arith.constant 8.000000e-01 : f32
    %1074 = vector.broadcast %cst_79 : f32 to vector<2x128xf32>
    %1075 = arith.mulf %1074, %1073 : vector<2x128xf32>
    %1076 = math.exp %1075 : vector<2x128xf32>
    %1077 = arith.mulf %27, %1076 : vector<2x128xf32>
    %1078 = math.tanh %1072 : vector<2x128xf32>
    %cst_80 = arith.constant 8.000000e-01 : f32
    %1079 = vector.broadcast %cst_80 : f32 to vector<2x128xf32>
    %1080 = arith.mulf %1079, %1078 : vector<2x128xf32>
    %1081 = math.exp %1080 : vector<2x128xf32>
    %1082 = arith.mulf %38, %1081 : vector<2x128xf32>
    %c266 = arith.constant 266 : index
    %1083 = memref.load %arg2[%c266] : memref<398xf32, #tpu.memory_space<smem>>
    %1084 = vector.broadcast %1083 : f32 to vector<2x128xf32>
    %c267 = arith.constant 267 : index
    %1085 = memref.load %arg2[%c267] : memref<398xf32, #tpu.memory_space<smem>>
    %1086 = vector.broadcast %1085 : f32 to vector<2x128xf32>
    %c138 = arith.constant 138 : index
    %1087 = memref.load %arg2[%c138] : memref<398xf32, #tpu.memory_space<smem>>
    %1088 = vector.broadcast %1087 : f32 to vector<2x128xf32>
    %1089 = arith.mulf %1088, %553 : vector<2x128xf32>
    %c170 = arith.constant 170 : index
    %1090 = memref.load %arg2[%c170] : memref<398xf32, #tpu.memory_space<smem>>
    %1091 = vector.broadcast %1090 : f32 to vector<2x128xf32>
    %1092 = arith.addf %1089, %1091 : vector<2x128xf32>
    %cst_81 = arith.constant 0.000000e+00 : f32
    %1093 = vector.broadcast %cst_81 : f32 to vector<2x128xf32>
    %1094 = arith.maximumf %1092, %1093 : vector<2x128xf32>
    %c202 = arith.constant 202 : index
    %1095 = memref.load %arg2[%c202] : memref<398xf32, #tpu.memory_space<smem>>
    %1096 = vector.broadcast %1095 : f32 to vector<2x128xf32>
    %1097 = arith.mulf %1096, %1094 : vector<2x128xf32>
    %1098 = arith.addf %1084, %1097 : vector<2x128xf32>
    %c234 = arith.constant 234 : index
    %1099 = memref.load %arg2[%c234] : memref<398xf32, #tpu.memory_space<smem>>
    %1100 = vector.broadcast %1099 : f32 to vector<2x128xf32>
    %1101 = arith.mulf %1100, %1094 : vector<2x128xf32>
    %1102 = arith.addf %1086, %1101 : vector<2x128xf32>
    %c139 = arith.constant 139 : index
    %1103 = memref.load %arg2[%c139] : memref<398xf32, #tpu.memory_space<smem>>
    %1104 = vector.broadcast %1103 : f32 to vector<2x128xf32>
    %1105 = arith.mulf %1104, %553 : vector<2x128xf32>
    %c171 = arith.constant 171 : index
    %1106 = memref.load %arg2[%c171] : memref<398xf32, #tpu.memory_space<smem>>
    %1107 = vector.broadcast %1106 : f32 to vector<2x128xf32>
    %1108 = arith.addf %1105, %1107 : vector<2x128xf32>
    %cst_82 = arith.constant 0.000000e+00 : f32
    %1109 = vector.broadcast %cst_82 : f32 to vector<2x128xf32>
    %1110 = arith.maximumf %1108, %1109 : vector<2x128xf32>
    %c203 = arith.constant 203 : index
    %1111 = memref.load %arg2[%c203] : memref<398xf32, #tpu.memory_space<smem>>
    %1112 = vector.broadcast %1111 : f32 to vector<2x128xf32>
    %1113 = arith.mulf %1112, %1110 : vector<2x128xf32>
    %1114 = arith.addf %1098, %1113 : vector<2x128xf32>
    %c235 = arith.constant 235 : index
    %1115 = memref.load %arg2[%c235] : memref<398xf32, #tpu.memory_space<smem>>
    %1116 = vector.broadcast %1115 : f32 to vector<2x128xf32>
    %1117 = arith.mulf %1116, %1110 : vector<2x128xf32>
    %1118 = arith.addf %1102, %1117 : vector<2x128xf32>
    %c140 = arith.constant 140 : index
    %1119 = memref.load %arg2[%c140] : memref<398xf32, #tpu.memory_space<smem>>
    %1120 = vector.broadcast %1119 : f32 to vector<2x128xf32>
    %1121 = arith.mulf %1120, %553 : vector<2x128xf32>
    %c172 = arith.constant 172 : index
    %1122 = memref.load %arg2[%c172] : memref<398xf32, #tpu.memory_space<smem>>
    %1123 = vector.broadcast %1122 : f32 to vector<2x128xf32>
    %1124 = arith.addf %1121, %1123 : vector<2x128xf32>
    %cst_83 = arith.constant 0.000000e+00 : f32
    %1125 = vector.broadcast %cst_83 : f32 to vector<2x128xf32>
    %1126 = arith.maximumf %1124, %1125 : vector<2x128xf32>
    %c204 = arith.constant 204 : index
    %1127 = memref.load %arg2[%c204] : memref<398xf32, #tpu.memory_space<smem>>
    %1128 = vector.broadcast %1127 : f32 to vector<2x128xf32>
    %1129 = arith.mulf %1128, %1126 : vector<2x128xf32>
    %1130 = arith.addf %1114, %1129 : vector<2x128xf32>
    %c236 = arith.constant 236 : index
    %1131 = memref.load %arg2[%c236] : memref<398xf32, #tpu.memory_space<smem>>
    %1132 = vector.broadcast %1131 : f32 to vector<2x128xf32>
    %1133 = arith.mulf %1132, %1126 : vector<2x128xf32>
    %1134 = arith.addf %1118, %1133 : vector<2x128xf32>
    %c141 = arith.constant 141 : index
    %1135 = memref.load %arg2[%c141] : memref<398xf32, #tpu.memory_space<smem>>
    %1136 = vector.broadcast %1135 : f32 to vector<2x128xf32>
    %1137 = arith.mulf %1136, %553 : vector<2x128xf32>
    %c173 = arith.constant 173 : index
    %1138 = memref.load %arg2[%c173] : memref<398xf32, #tpu.memory_space<smem>>
    %1139 = vector.broadcast %1138 : f32 to vector<2x128xf32>
    %1140 = arith.addf %1137, %1139 : vector<2x128xf32>
    %cst_84 = arith.constant 0.000000e+00 : f32
    %1141 = vector.broadcast %cst_84 : f32 to vector<2x128xf32>
    %1142 = arith.maximumf %1140, %1141 : vector<2x128xf32>
    %c205 = arith.constant 205 : index
    %1143 = memref.load %arg2[%c205] : memref<398xf32, #tpu.memory_space<smem>>
    %1144 = vector.broadcast %1143 : f32 to vector<2x128xf32>
    %1145 = arith.mulf %1144, %1142 : vector<2x128xf32>
    %1146 = arith.addf %1130, %1145 : vector<2x128xf32>
    %c237 = arith.constant 237 : index
    %1147 = memref.load %arg2[%c237] : memref<398xf32, #tpu.memory_space<smem>>
    %1148 = vector.broadcast %1147 : f32 to vector<2x128xf32>
    %1149 = arith.mulf %1148, %1142 : vector<2x128xf32>
    %1150 = arith.addf %1134, %1149 : vector<2x128xf32>
    %c142 = arith.constant 142 : index
    %1151 = memref.load %arg2[%c142] : memref<398xf32, #tpu.memory_space<smem>>
    %1152 = vector.broadcast %1151 : f32 to vector<2x128xf32>
    %1153 = arith.mulf %1152, %553 : vector<2x128xf32>
    %c174 = arith.constant 174 : index
    %1154 = memref.load %arg2[%c174] : memref<398xf32, #tpu.memory_space<smem>>
    %1155 = vector.broadcast %1154 : f32 to vector<2x128xf32>
    %1156 = arith.addf %1153, %1155 : vector<2x128xf32>
    %cst_85 = arith.constant 0.000000e+00 : f32
    %1157 = vector.broadcast %cst_85 : f32 to vector<2x128xf32>
    %1158 = arith.maximumf %1156, %1157 : vector<2x128xf32>
    %c206 = arith.constant 206 : index
    %1159 = memref.load %arg2[%c206] : memref<398xf32, #tpu.memory_space<smem>>
    %1160 = vector.broadcast %1159 : f32 to vector<2x128xf32>
    %1161 = arith.mulf %1160, %1158 : vector<2x128xf32>
    %1162 = arith.addf %1146, %1161 : vector<2x128xf32>
    %c238 = arith.constant 238 : index
    %1163 = memref.load %arg2[%c238] : memref<398xf32, #tpu.memory_space<smem>>
    %1164 = vector.broadcast %1163 : f32 to vector<2x128xf32>
    %1165 = arith.mulf %1164, %1158 : vector<2x128xf32>
    %1166 = arith.addf %1150, %1165 : vector<2x128xf32>
    %c143 = arith.constant 143 : index
    %1167 = memref.load %arg2[%c143] : memref<398xf32, #tpu.memory_space<smem>>
    %1168 = vector.broadcast %1167 : f32 to vector<2x128xf32>
    %1169 = arith.mulf %1168, %553 : vector<2x128xf32>
    %c175 = arith.constant 175 : index
    %1170 = memref.load %arg2[%c175] : memref<398xf32, #tpu.memory_space<smem>>
    %1171 = vector.broadcast %1170 : f32 to vector<2x128xf32>
    %1172 = arith.addf %1169, %1171 : vector<2x128xf32>
    %cst_86 = arith.constant 0.000000e+00 : f32
    %1173 = vector.broadcast %cst_86 : f32 to vector<2x128xf32>
    %1174 = arith.maximumf %1172, %1173 : vector<2x128xf32>
    %c207 = arith.constant 207 : index
    %1175 = memref.load %arg2[%c207] : memref<398xf32, #tpu.memory_space<smem>>
    %1176 = vector.broadcast %1175 : f32 to vector<2x128xf32>
    %1177 = arith.mulf %1176, %1174 : vector<2x128xf32>
    %1178 = arith.addf %1162, %1177 : vector<2x128xf32>
    %c239 = arith.constant 239 : index
    %1179 = memref.load %arg2[%c239] : memref<398xf32, #tpu.memory_space<smem>>
    %1180 = vector.broadcast %1179 : f32 to vector<2x128xf32>
    %1181 = arith.mulf %1180, %1174 : vector<2x128xf32>
    %1182 = arith.addf %1166, %1181 : vector<2x128xf32>
    %c144 = arith.constant 144 : index
    %1183 = memref.load %arg2[%c144] : memref<398xf32, #tpu.memory_space<smem>>
    %1184 = vector.broadcast %1183 : f32 to vector<2x128xf32>
    %1185 = arith.mulf %1184, %553 : vector<2x128xf32>
    %c176 = arith.constant 176 : index
    %1186 = memref.load %arg2[%c176] : memref<398xf32, #tpu.memory_space<smem>>
    %1187 = vector.broadcast %1186 : f32 to vector<2x128xf32>
    %1188 = arith.addf %1185, %1187 : vector<2x128xf32>
    %cst_87 = arith.constant 0.000000e+00 : f32
    %1189 = vector.broadcast %cst_87 : f32 to vector<2x128xf32>
    %1190 = arith.maximumf %1188, %1189 : vector<2x128xf32>
    %c208 = arith.constant 208 : index
    %1191 = memref.load %arg2[%c208] : memref<398xf32, #tpu.memory_space<smem>>
    %1192 = vector.broadcast %1191 : f32 to vector<2x128xf32>
    %1193 = arith.mulf %1192, %1190 : vector<2x128xf32>
    %1194 = arith.addf %1178, %1193 : vector<2x128xf32>
    %c240 = arith.constant 240 : index
    %1195 = memref.load %arg2[%c240] : memref<398xf32, #tpu.memory_space<smem>>
    %1196 = vector.broadcast %1195 : f32 to vector<2x128xf32>
    %1197 = arith.mulf %1196, %1190 : vector<2x128xf32>
    %1198 = arith.addf %1182, %1197 : vector<2x128xf32>
    %c145 = arith.constant 145 : index
    %1199 = memref.load %arg2[%c145] : memref<398xf32, #tpu.memory_space<smem>>
    %1200 = vector.broadcast %1199 : f32 to vector<2x128xf32>
    %1201 = arith.mulf %1200, %553 : vector<2x128xf32>
    %c177 = arith.constant 177 : index
    %1202 = memref.load %arg2[%c177] : memref<398xf32, #tpu.memory_space<smem>>
    %1203 = vector.broadcast %1202 : f32 to vector<2x128xf32>
    %1204 = arith.addf %1201, %1203 : vector<2x128xf32>
    %cst_88 = arith.constant 0.000000e+00 : f32
    %1205 = vector.broadcast %cst_88 : f32 to vector<2x128xf32>
    %1206 = arith.maximumf %1204, %1205 : vector<2x128xf32>
    %c209 = arith.constant 209 : index
    %1207 = memref.load %arg2[%c209] : memref<398xf32, #tpu.memory_space<smem>>
    %1208 = vector.broadcast %1207 : f32 to vector<2x128xf32>
    %1209 = arith.mulf %1208, %1206 : vector<2x128xf32>
    %1210 = arith.addf %1194, %1209 : vector<2x128xf32>
    %c241 = arith.constant 241 : index
    %1211 = memref.load %arg2[%c241] : memref<398xf32, #tpu.memory_space<smem>>
    %1212 = vector.broadcast %1211 : f32 to vector<2x128xf32>
    %1213 = arith.mulf %1212, %1206 : vector<2x128xf32>
    %1214 = arith.addf %1198, %1213 : vector<2x128xf32>
    %c146 = arith.constant 146 : index
    %1215 = memref.load %arg2[%c146] : memref<398xf32, #tpu.memory_space<smem>>
    %1216 = vector.broadcast %1215 : f32 to vector<2x128xf32>
    %1217 = arith.mulf %1216, %553 : vector<2x128xf32>
    %c178 = arith.constant 178 : index
    %1218 = memref.load %arg2[%c178] : memref<398xf32, #tpu.memory_space<smem>>
    %1219 = vector.broadcast %1218 : f32 to vector<2x128xf32>
    %1220 = arith.addf %1217, %1219 : vector<2x128xf32>
    %cst_89 = arith.constant 0.000000e+00 : f32
    %1221 = vector.broadcast %cst_89 : f32 to vector<2x128xf32>
    %1222 = arith.maximumf %1220, %1221 : vector<2x128xf32>
    %c210 = arith.constant 210 : index
    %1223 = memref.load %arg2[%c210] : memref<398xf32, #tpu.memory_space<smem>>
    %1224 = vector.broadcast %1223 : f32 to vector<2x128xf32>
    %1225 = arith.mulf %1224, %1222 : vector<2x128xf32>
    %1226 = arith.addf %1210, %1225 : vector<2x128xf32>
    %c242 = arith.constant 242 : index
    %1227 = memref.load %arg2[%c242] : memref<398xf32, #tpu.memory_space<smem>>
    %1228 = vector.broadcast %1227 : f32 to vector<2x128xf32>
    %1229 = arith.mulf %1228, %1222 : vector<2x128xf32>
    %1230 = arith.addf %1214, %1229 : vector<2x128xf32>
    %c147 = arith.constant 147 : index
    %1231 = memref.load %arg2[%c147] : memref<398xf32, #tpu.memory_space<smem>>
    %1232 = vector.broadcast %1231 : f32 to vector<2x128xf32>
    %1233 = arith.mulf %1232, %553 : vector<2x128xf32>
    %c179 = arith.constant 179 : index
    %1234 = memref.load %arg2[%c179] : memref<398xf32, #tpu.memory_space<smem>>
    %1235 = vector.broadcast %1234 : f32 to vector<2x128xf32>
    %1236 = arith.addf %1233, %1235 : vector<2x128xf32>
    %cst_90 = arith.constant 0.000000e+00 : f32
    %1237 = vector.broadcast %cst_90 : f32 to vector<2x128xf32>
    %1238 = arith.maximumf %1236, %1237 : vector<2x128xf32>
    %c211 = arith.constant 211 : index
    %1239 = memref.load %arg2[%c211] : memref<398xf32, #tpu.memory_space<smem>>
    %1240 = vector.broadcast %1239 : f32 to vector<2x128xf32>
    %1241 = arith.mulf %1240, %1238 : vector<2x128xf32>
    %1242 = arith.addf %1226, %1241 : vector<2x128xf32>
    %c243 = arith.constant 243 : index
    %1243 = memref.load %arg2[%c243] : memref<398xf32, #tpu.memory_space<smem>>
    %1244 = vector.broadcast %1243 : f32 to vector<2x128xf32>
    %1245 = arith.mulf %1244, %1238 : vector<2x128xf32>
    %1246 = arith.addf %1230, %1245 : vector<2x128xf32>
    %c148 = arith.constant 148 : index
    %1247 = memref.load %arg2[%c148] : memref<398xf32, #tpu.memory_space<smem>>
    %1248 = vector.broadcast %1247 : f32 to vector<2x128xf32>
    %1249 = arith.mulf %1248, %553 : vector<2x128xf32>
    %c180 = arith.constant 180 : index
    %1250 = memref.load %arg2[%c180] : memref<398xf32, #tpu.memory_space<smem>>
    %1251 = vector.broadcast %1250 : f32 to vector<2x128xf32>
    %1252 = arith.addf %1249, %1251 : vector<2x128xf32>
    %cst_91 = arith.constant 0.000000e+00 : f32
    %1253 = vector.broadcast %cst_91 : f32 to vector<2x128xf32>
    %1254 = arith.maximumf %1252, %1253 : vector<2x128xf32>
    %c212 = arith.constant 212 : index
    %1255 = memref.load %arg2[%c212] : memref<398xf32, #tpu.memory_space<smem>>
    %1256 = vector.broadcast %1255 : f32 to vector<2x128xf32>
    %1257 = arith.mulf %1256, %1254 : vector<2x128xf32>
    %1258 = arith.addf %1242, %1257 : vector<2x128xf32>
    %c244 = arith.constant 244 : index
    %1259 = memref.load %arg2[%c244] : memref<398xf32, #tpu.memory_space<smem>>
    %1260 = vector.broadcast %1259 : f32 to vector<2x128xf32>
    %1261 = arith.mulf %1260, %1254 : vector<2x128xf32>
    %1262 = arith.addf %1246, %1261 : vector<2x128xf32>
    %c149 = arith.constant 149 : index
    %1263 = memref.load %arg2[%c149] : memref<398xf32, #tpu.memory_space<smem>>
    %1264 = vector.broadcast %1263 : f32 to vector<2x128xf32>
    %1265 = arith.mulf %1264, %553 : vector<2x128xf32>
    %c181 = arith.constant 181 : index
    %1266 = memref.load %arg2[%c181] : memref<398xf32, #tpu.memory_space<smem>>
    %1267 = vector.broadcast %1266 : f32 to vector<2x128xf32>
    %1268 = arith.addf %1265, %1267 : vector<2x128xf32>
    %cst_92 = arith.constant 0.000000e+00 : f32
    %1269 = vector.broadcast %cst_92 : f32 to vector<2x128xf32>
    %1270 = arith.maximumf %1268, %1269 : vector<2x128xf32>
    %c213 = arith.constant 213 : index
    %1271 = memref.load %arg2[%c213] : memref<398xf32, #tpu.memory_space<smem>>
    %1272 = vector.broadcast %1271 : f32 to vector<2x128xf32>
    %1273 = arith.mulf %1272, %1270 : vector<2x128xf32>
    %1274 = arith.addf %1258, %1273 : vector<2x128xf32>
    %c245 = arith.constant 245 : index
    %1275 = memref.load %arg2[%c245] : memref<398xf32, #tpu.memory_space<smem>>
    %1276 = vector.broadcast %1275 : f32 to vector<2x128xf32>
    %1277 = arith.mulf %1276, %1270 : vector<2x128xf32>
    %1278 = arith.addf %1262, %1277 : vector<2x128xf32>
    %c150 = arith.constant 150 : index
    %1279 = memref.load %arg2[%c150] : memref<398xf32, #tpu.memory_space<smem>>
    %1280 = vector.broadcast %1279 : f32 to vector<2x128xf32>
    %1281 = arith.mulf %1280, %553 : vector<2x128xf32>
    %c182 = arith.constant 182 : index
    %1282 = memref.load %arg2[%c182] : memref<398xf32, #tpu.memory_space<smem>>
    %1283 = vector.broadcast %1282 : f32 to vector<2x128xf32>
    %1284 = arith.addf %1281, %1283 : vector<2x128xf32>
    %cst_93 = arith.constant 0.000000e+00 : f32
    %1285 = vector.broadcast %cst_93 : f32 to vector<2x128xf32>
    %1286 = arith.maximumf %1284, %1285 : vector<2x128xf32>
    %c214 = arith.constant 214 : index
    %1287 = memref.load %arg2[%c214] : memref<398xf32, #tpu.memory_space<smem>>
    %1288 = vector.broadcast %1287 : f32 to vector<2x128xf32>
    %1289 = arith.mulf %1288, %1286 : vector<2x128xf32>
    %1290 = arith.addf %1274, %1289 : vector<2x128xf32>
    %c246 = arith.constant 246 : index
    %1291 = memref.load %arg2[%c246] : memref<398xf32, #tpu.memory_space<smem>>
    %1292 = vector.broadcast %1291 : f32 to vector<2x128xf32>
    %1293 = arith.mulf %1292, %1286 : vector<2x128xf32>
    %1294 = arith.addf %1278, %1293 : vector<2x128xf32>
    %c151 = arith.constant 151 : index
    %1295 = memref.load %arg2[%c151] : memref<398xf32, #tpu.memory_space<smem>>
    %1296 = vector.broadcast %1295 : f32 to vector<2x128xf32>
    %1297 = arith.mulf %1296, %553 : vector<2x128xf32>
    %c183 = arith.constant 183 : index
    %1298 = memref.load %arg2[%c183] : memref<398xf32, #tpu.memory_space<smem>>
    %1299 = vector.broadcast %1298 : f32 to vector<2x128xf32>
    %1300 = arith.addf %1297, %1299 : vector<2x128xf32>
    %cst_94 = arith.constant 0.000000e+00 : f32
    %1301 = vector.broadcast %cst_94 : f32 to vector<2x128xf32>
    %1302 = arith.maximumf %1300, %1301 : vector<2x128xf32>
    %c215 = arith.constant 215 : index
    %1303 = memref.load %arg2[%c215] : memref<398xf32, #tpu.memory_space<smem>>
    %1304 = vector.broadcast %1303 : f32 to vector<2x128xf32>
    %1305 = arith.mulf %1304, %1302 : vector<2x128xf32>
    %1306 = arith.addf %1290, %1305 : vector<2x128xf32>
    %c247 = arith.constant 247 : index
    %1307 = memref.load %arg2[%c247] : memref<398xf32, #tpu.memory_space<smem>>
    %1308 = vector.broadcast %1307 : f32 to vector<2x128xf32>
    %1309 = arith.mulf %1308, %1302 : vector<2x128xf32>
    %1310 = arith.addf %1294, %1309 : vector<2x128xf32>
    %c152 = arith.constant 152 : index
    %1311 = memref.load %arg2[%c152] : memref<398xf32, #tpu.memory_space<smem>>
    %1312 = vector.broadcast %1311 : f32 to vector<2x128xf32>
    %1313 = arith.mulf %1312, %553 : vector<2x128xf32>
    %c184 = arith.constant 184 : index
    %1314 = memref.load %arg2[%c184] : memref<398xf32, #tpu.memory_space<smem>>
    %1315 = vector.broadcast %1314 : f32 to vector<2x128xf32>
    %1316 = arith.addf %1313, %1315 : vector<2x128xf32>
    %cst_95 = arith.constant 0.000000e+00 : f32
    %1317 = vector.broadcast %cst_95 : f32 to vector<2x128xf32>
    %1318 = arith.maximumf %1316, %1317 : vector<2x128xf32>
    %c216 = arith.constant 216 : index
    %1319 = memref.load %arg2[%c216] : memref<398xf32, #tpu.memory_space<smem>>
    %1320 = vector.broadcast %1319 : f32 to vector<2x128xf32>
    %1321 = arith.mulf %1320, %1318 : vector<2x128xf32>
    %1322 = arith.addf %1306, %1321 : vector<2x128xf32>
    %c248 = arith.constant 248 : index
    %1323 = memref.load %arg2[%c248] : memref<398xf32, #tpu.memory_space<smem>>
    %1324 = vector.broadcast %1323 : f32 to vector<2x128xf32>
    %1325 = arith.mulf %1324, %1318 : vector<2x128xf32>
    %1326 = arith.addf %1310, %1325 : vector<2x128xf32>
    %c153 = arith.constant 153 : index
    %1327 = memref.load %arg2[%c153] : memref<398xf32, #tpu.memory_space<smem>>
    %1328 = vector.broadcast %1327 : f32 to vector<2x128xf32>
    %1329 = arith.mulf %1328, %553 : vector<2x128xf32>
    %c185 = arith.constant 185 : index
    %1330 = memref.load %arg2[%c185] : memref<398xf32, #tpu.memory_space<smem>>
    %1331 = vector.broadcast %1330 : f32 to vector<2x128xf32>
    %1332 = arith.addf %1329, %1331 : vector<2x128xf32>
    %cst_96 = arith.constant 0.000000e+00 : f32
    %1333 = vector.broadcast %cst_96 : f32 to vector<2x128xf32>
    %1334 = arith.maximumf %1332, %1333 : vector<2x128xf32>
    %c217 = arith.constant 217 : index
    %1335 = memref.load %arg2[%c217] : memref<398xf32, #tpu.memory_space<smem>>
    %1336 = vector.broadcast %1335 : f32 to vector<2x128xf32>
    %1337 = arith.mulf %1336, %1334 : vector<2x128xf32>
    %1338 = arith.addf %1322, %1337 : vector<2x128xf32>
    %c249 = arith.constant 249 : index
    %1339 = memref.load %arg2[%c249] : memref<398xf32, #tpu.memory_space<smem>>
    %1340 = vector.broadcast %1339 : f32 to vector<2x128xf32>
    %1341 = arith.mulf %1340, %1334 : vector<2x128xf32>
    %1342 = arith.addf %1326, %1341 : vector<2x128xf32>
    %c154 = arith.constant 154 : index
    %1343 = memref.load %arg2[%c154] : memref<398xf32, #tpu.memory_space<smem>>
    %1344 = vector.broadcast %1343 : f32 to vector<2x128xf32>
    %1345 = arith.mulf %1344, %553 : vector<2x128xf32>
    %c186 = arith.constant 186 : index
    %1346 = memref.load %arg2[%c186] : memref<398xf32, #tpu.memory_space<smem>>
    %1347 = vector.broadcast %1346 : f32 to vector<2x128xf32>
    %1348 = arith.addf %1345, %1347 : vector<2x128xf32>
    %cst_97 = arith.constant 0.000000e+00 : f32
    %1349 = vector.broadcast %cst_97 : f32 to vector<2x128xf32>
    %1350 = arith.maximumf %1348, %1349 : vector<2x128xf32>
    %c218 = arith.constant 218 : index
    %1351 = memref.load %arg2[%c218] : memref<398xf32, #tpu.memory_space<smem>>
    %1352 = vector.broadcast %1351 : f32 to vector<2x128xf32>
    %1353 = arith.mulf %1352, %1350 : vector<2x128xf32>
    %1354 = arith.addf %1338, %1353 : vector<2x128xf32>
    %c250 = arith.constant 250 : index
    %1355 = memref.load %arg2[%c250] : memref<398xf32, #tpu.memory_space<smem>>
    %1356 = vector.broadcast %1355 : f32 to vector<2x128xf32>
    %1357 = arith.mulf %1356, %1350 : vector<2x128xf32>
    %1358 = arith.addf %1342, %1357 : vector<2x128xf32>
    %c155 = arith.constant 155 : index
    %1359 = memref.load %arg2[%c155] : memref<398xf32, #tpu.memory_space<smem>>
    %1360 = vector.broadcast %1359 : f32 to vector<2x128xf32>
    %1361 = arith.mulf %1360, %553 : vector<2x128xf32>
    %c187 = arith.constant 187 : index
    %1362 = memref.load %arg2[%c187] : memref<398xf32, #tpu.memory_space<smem>>
    %1363 = vector.broadcast %1362 : f32 to vector<2x128xf32>
    %1364 = arith.addf %1361, %1363 : vector<2x128xf32>
    %cst_98 = arith.constant 0.000000e+00 : f32
    %1365 = vector.broadcast %cst_98 : f32 to vector<2x128xf32>
    %1366 = arith.maximumf %1364, %1365 : vector<2x128xf32>
    %c219 = arith.constant 219 : index
    %1367 = memref.load %arg2[%c219] : memref<398xf32, #tpu.memory_space<smem>>
    %1368 = vector.broadcast %1367 : f32 to vector<2x128xf32>
    %1369 = arith.mulf %1368, %1366 : vector<2x128xf32>
    %1370 = arith.addf %1354, %1369 : vector<2x128xf32>
    %c251 = arith.constant 251 : index
    %1371 = memref.load %arg2[%c251] : memref<398xf32, #tpu.memory_space<smem>>
    %1372 = vector.broadcast %1371 : f32 to vector<2x128xf32>
    %1373 = arith.mulf %1372, %1366 : vector<2x128xf32>
    %1374 = arith.addf %1358, %1373 : vector<2x128xf32>
    %c156 = arith.constant 156 : index
    %1375 = memref.load %arg2[%c156] : memref<398xf32, #tpu.memory_space<smem>>
    %1376 = vector.broadcast %1375 : f32 to vector<2x128xf32>
    %1377 = arith.mulf %1376, %553 : vector<2x128xf32>
    %c188 = arith.constant 188 : index
    %1378 = memref.load %arg2[%c188] : memref<398xf32, #tpu.memory_space<smem>>
    %1379 = vector.broadcast %1378 : f32 to vector<2x128xf32>
    %1380 = arith.addf %1377, %1379 : vector<2x128xf32>
    %cst_99 = arith.constant 0.000000e+00 : f32
    %1381 = vector.broadcast %cst_99 : f32 to vector<2x128xf32>
    %1382 = arith.maximumf %1380, %1381 : vector<2x128xf32>
    %c220 = arith.constant 220 : index
    %1383 = memref.load %arg2[%c220] : memref<398xf32, #tpu.memory_space<smem>>
    %1384 = vector.broadcast %1383 : f32 to vector<2x128xf32>
    %1385 = arith.mulf %1384, %1382 : vector<2x128xf32>
    %1386 = arith.addf %1370, %1385 : vector<2x128xf32>
    %c252 = arith.constant 252 : index
    %1387 = memref.load %arg2[%c252] : memref<398xf32, #tpu.memory_space<smem>>
    %1388 = vector.broadcast %1387 : f32 to vector<2x128xf32>
    %1389 = arith.mulf %1388, %1382 : vector<2x128xf32>
    %1390 = arith.addf %1374, %1389 : vector<2x128xf32>
    %c157 = arith.constant 157 : index
    %1391 = memref.load %arg2[%c157] : memref<398xf32, #tpu.memory_space<smem>>
    %1392 = vector.broadcast %1391 : f32 to vector<2x128xf32>
    %1393 = arith.mulf %1392, %553 : vector<2x128xf32>
    %c189 = arith.constant 189 : index
    %1394 = memref.load %arg2[%c189] : memref<398xf32, #tpu.memory_space<smem>>
    %1395 = vector.broadcast %1394 : f32 to vector<2x128xf32>
    %1396 = arith.addf %1393, %1395 : vector<2x128xf32>
    %cst_100 = arith.constant 0.000000e+00 : f32
    %1397 = vector.broadcast %cst_100 : f32 to vector<2x128xf32>
    %1398 = arith.maximumf %1396, %1397 : vector<2x128xf32>
    %c221 = arith.constant 221 : index
    %1399 = memref.load %arg2[%c221] : memref<398xf32, #tpu.memory_space<smem>>
    %1400 = vector.broadcast %1399 : f32 to vector<2x128xf32>
    %1401 = arith.mulf %1400, %1398 : vector<2x128xf32>
    %1402 = arith.addf %1386, %1401 : vector<2x128xf32>
    %c253 = arith.constant 253 : index
    %1403 = memref.load %arg2[%c253] : memref<398xf32, #tpu.memory_space<smem>>
    %1404 = vector.broadcast %1403 : f32 to vector<2x128xf32>
    %1405 = arith.mulf %1404, %1398 : vector<2x128xf32>
    %1406 = arith.addf %1390, %1405 : vector<2x128xf32>
    %c158 = arith.constant 158 : index
    %1407 = memref.load %arg2[%c158] : memref<398xf32, #tpu.memory_space<smem>>
    %1408 = vector.broadcast %1407 : f32 to vector<2x128xf32>
    %1409 = arith.mulf %1408, %553 : vector<2x128xf32>
    %c190 = arith.constant 190 : index
    %1410 = memref.load %arg2[%c190] : memref<398xf32, #tpu.memory_space<smem>>
    %1411 = vector.broadcast %1410 : f32 to vector<2x128xf32>
    %1412 = arith.addf %1409, %1411 : vector<2x128xf32>
    %cst_101 = arith.constant 0.000000e+00 : f32
    %1413 = vector.broadcast %cst_101 : f32 to vector<2x128xf32>
    %1414 = arith.maximumf %1412, %1413 : vector<2x128xf32>
    %c222 = arith.constant 222 : index
    %1415 = memref.load %arg2[%c222] : memref<398xf32, #tpu.memory_space<smem>>
    %1416 = vector.broadcast %1415 : f32 to vector<2x128xf32>
    %1417 = arith.mulf %1416, %1414 : vector<2x128xf32>
    %1418 = arith.addf %1402, %1417 : vector<2x128xf32>
    %c254 = arith.constant 254 : index
    %1419 = memref.load %arg2[%c254] : memref<398xf32, #tpu.memory_space<smem>>
    %1420 = vector.broadcast %1419 : f32 to vector<2x128xf32>
    %1421 = arith.mulf %1420, %1414 : vector<2x128xf32>
    %1422 = arith.addf %1406, %1421 : vector<2x128xf32>
    %c159 = arith.constant 159 : index
    %1423 = memref.load %arg2[%c159] : memref<398xf32, #tpu.memory_space<smem>>
    %1424 = vector.broadcast %1423 : f32 to vector<2x128xf32>
    %1425 = arith.mulf %1424, %553 : vector<2x128xf32>
    %c191 = arith.constant 191 : index
    %1426 = memref.load %arg2[%c191] : memref<398xf32, #tpu.memory_space<smem>>
    %1427 = vector.broadcast %1426 : f32 to vector<2x128xf32>
    %1428 = arith.addf %1425, %1427 : vector<2x128xf32>
    %cst_102 = arith.constant 0.000000e+00 : f32
    %1429 = vector.broadcast %cst_102 : f32 to vector<2x128xf32>
    %1430 = arith.maximumf %1428, %1429 : vector<2x128xf32>
    %c223 = arith.constant 223 : index
    %1431 = memref.load %arg2[%c223] : memref<398xf32, #tpu.memory_space<smem>>
    %1432 = vector.broadcast %1431 : f32 to vector<2x128xf32>
    %1433 = arith.mulf %1432, %1430 : vector<2x128xf32>
    %1434 = arith.addf %1418, %1433 : vector<2x128xf32>
    %c255 = arith.constant 255 : index
    %1435 = memref.load %arg2[%c255] : memref<398xf32, #tpu.memory_space<smem>>
    %1436 = vector.broadcast %1435 : f32 to vector<2x128xf32>
    %1437 = arith.mulf %1436, %1430 : vector<2x128xf32>
    %1438 = arith.addf %1422, %1437 : vector<2x128xf32>
    %c160 = arith.constant 160 : index
    %1439 = memref.load %arg2[%c160] : memref<398xf32, #tpu.memory_space<smem>>
    %1440 = vector.broadcast %1439 : f32 to vector<2x128xf32>
    %1441 = arith.mulf %1440, %553 : vector<2x128xf32>
    %c192 = arith.constant 192 : index
    %1442 = memref.load %arg2[%c192] : memref<398xf32, #tpu.memory_space<smem>>
    %1443 = vector.broadcast %1442 : f32 to vector<2x128xf32>
    %1444 = arith.addf %1441, %1443 : vector<2x128xf32>
    %cst_103 = arith.constant 0.000000e+00 : f32
    %1445 = vector.broadcast %cst_103 : f32 to vector<2x128xf32>
    %1446 = arith.maximumf %1444, %1445 : vector<2x128xf32>
    %c224 = arith.constant 224 : index
    %1447 = memref.load %arg2[%c224] : memref<398xf32, #tpu.memory_space<smem>>
    %1448 = vector.broadcast %1447 : f32 to vector<2x128xf32>
    %1449 = arith.mulf %1448, %1446 : vector<2x128xf32>
    %1450 = arith.addf %1434, %1449 : vector<2x128xf32>
    %c256 = arith.constant 256 : index
    %1451 = memref.load %arg2[%c256] : memref<398xf32, #tpu.memory_space<smem>>
    %1452 = vector.broadcast %1451 : f32 to vector<2x128xf32>
    %1453 = arith.mulf %1452, %1446 : vector<2x128xf32>
    %1454 = arith.addf %1438, %1453 : vector<2x128xf32>
    %c161 = arith.constant 161 : index
    %1455 = memref.load %arg2[%c161] : memref<398xf32, #tpu.memory_space<smem>>
    %1456 = vector.broadcast %1455 : f32 to vector<2x128xf32>
    %1457 = arith.mulf %1456, %553 : vector<2x128xf32>
    %c193 = arith.constant 193 : index
    %1458 = memref.load %arg2[%c193] : memref<398xf32, #tpu.memory_space<smem>>
    %1459 = vector.broadcast %1458 : f32 to vector<2x128xf32>
    %1460 = arith.addf %1457, %1459 : vector<2x128xf32>
    %cst_104 = arith.constant 0.000000e+00 : f32
    %1461 = vector.broadcast %cst_104 : f32 to vector<2x128xf32>
    %1462 = arith.maximumf %1460, %1461 : vector<2x128xf32>
    %c225 = arith.constant 225 : index
    %1463 = memref.load %arg2[%c225] : memref<398xf32, #tpu.memory_space<smem>>
    %1464 = vector.broadcast %1463 : f32 to vector<2x128xf32>
    %1465 = arith.mulf %1464, %1462 : vector<2x128xf32>
    %1466 = arith.addf %1450, %1465 : vector<2x128xf32>
    %c257 = arith.constant 257 : index
    %1467 = memref.load %arg2[%c257] : memref<398xf32, #tpu.memory_space<smem>>
    %1468 = vector.broadcast %1467 : f32 to vector<2x128xf32>
    %1469 = arith.mulf %1468, %1462 : vector<2x128xf32>
    %1470 = arith.addf %1454, %1469 : vector<2x128xf32>
    %c162 = arith.constant 162 : index
    %1471 = memref.load %arg2[%c162] : memref<398xf32, #tpu.memory_space<smem>>
    %1472 = vector.broadcast %1471 : f32 to vector<2x128xf32>
    %1473 = arith.mulf %1472, %553 : vector<2x128xf32>
    %c194 = arith.constant 194 : index
    %1474 = memref.load %arg2[%c194] : memref<398xf32, #tpu.memory_space<smem>>
    %1475 = vector.broadcast %1474 : f32 to vector<2x128xf32>
    %1476 = arith.addf %1473, %1475 : vector<2x128xf32>
    %cst_105 = arith.constant 0.000000e+00 : f32
    %1477 = vector.broadcast %cst_105 : f32 to vector<2x128xf32>
    %1478 = arith.maximumf %1476, %1477 : vector<2x128xf32>
    %c226 = arith.constant 226 : index
    %1479 = memref.load %arg2[%c226] : memref<398xf32, #tpu.memory_space<smem>>
    %1480 = vector.broadcast %1479 : f32 to vector<2x128xf32>
    %1481 = arith.mulf %1480, %1478 : vector<2x128xf32>
    %1482 = arith.addf %1466, %1481 : vector<2x128xf32>
    %c258 = arith.constant 258 : index
    %1483 = memref.load %arg2[%c258] : memref<398xf32, #tpu.memory_space<smem>>
    %1484 = vector.broadcast %1483 : f32 to vector<2x128xf32>
    %1485 = arith.mulf %1484, %1478 : vector<2x128xf32>
    %1486 = arith.addf %1470, %1485 : vector<2x128xf32>
    %c163 = arith.constant 163 : index
    %1487 = memref.load %arg2[%c163] : memref<398xf32, #tpu.memory_space<smem>>
    %1488 = vector.broadcast %1487 : f32 to vector<2x128xf32>
    %1489 = arith.mulf %1488, %553 : vector<2x128xf32>
    %c195 = arith.constant 195 : index
    %1490 = memref.load %arg2[%c195] : memref<398xf32, #tpu.memory_space<smem>>
    %1491 = vector.broadcast %1490 : f32 to vector<2x128xf32>
    %1492 = arith.addf %1489, %1491 : vector<2x128xf32>
    %cst_106 = arith.constant 0.000000e+00 : f32
    %1493 = vector.broadcast %cst_106 : f32 to vector<2x128xf32>
    %1494 = arith.maximumf %1492, %1493 : vector<2x128xf32>
    %c227 = arith.constant 227 : index
    %1495 = memref.load %arg2[%c227] : memref<398xf32, #tpu.memory_space<smem>>
    %1496 = vector.broadcast %1495 : f32 to vector<2x128xf32>
    %1497 = arith.mulf %1496, %1494 : vector<2x128xf32>
    %1498 = arith.addf %1482, %1497 : vector<2x128xf32>
    %c259 = arith.constant 259 : index
    %1499 = memref.load %arg2[%c259] : memref<398xf32, #tpu.memory_space<smem>>
    %1500 = vector.broadcast %1499 : f32 to vector<2x128xf32>
    %1501 = arith.mulf %1500, %1494 : vector<2x128xf32>
    %1502 = arith.addf %1486, %1501 : vector<2x128xf32>
    %c164 = arith.constant 164 : index
    %1503 = memref.load %arg2[%c164] : memref<398xf32, #tpu.memory_space<smem>>
    %1504 = vector.broadcast %1503 : f32 to vector<2x128xf32>
    %1505 = arith.mulf %1504, %553 : vector<2x128xf32>
    %c196 = arith.constant 196 : index
    %1506 = memref.load %arg2[%c196] : memref<398xf32, #tpu.memory_space<smem>>
    %1507 = vector.broadcast %1506 : f32 to vector<2x128xf32>
    %1508 = arith.addf %1505, %1507 : vector<2x128xf32>
    %cst_107 = arith.constant 0.000000e+00 : f32
    %1509 = vector.broadcast %cst_107 : f32 to vector<2x128xf32>
    %1510 = arith.maximumf %1508, %1509 : vector<2x128xf32>
    %c228 = arith.constant 228 : index
    %1511 = memref.load %arg2[%c228] : memref<398xf32, #tpu.memory_space<smem>>
    %1512 = vector.broadcast %1511 : f32 to vector<2x128xf32>
    %1513 = arith.mulf %1512, %1510 : vector<2x128xf32>
    %1514 = arith.addf %1498, %1513 : vector<2x128xf32>
    %c260 = arith.constant 260 : index
    %1515 = memref.load %arg2[%c260] : memref<398xf32, #tpu.memory_space<smem>>
    %1516 = vector.broadcast %1515 : f32 to vector<2x128xf32>
    %1517 = arith.mulf %1516, %1510 : vector<2x128xf32>
    %1518 = arith.addf %1502, %1517 : vector<2x128xf32>
    %c165 = arith.constant 165 : index
    %1519 = memref.load %arg2[%c165] : memref<398xf32, #tpu.memory_space<smem>>
    %1520 = vector.broadcast %1519 : f32 to vector<2x128xf32>
    %1521 = arith.mulf %1520, %553 : vector<2x128xf32>
    %c197 = arith.constant 197 : index
    %1522 = memref.load %arg2[%c197] : memref<398xf32, #tpu.memory_space<smem>>
    %1523 = vector.broadcast %1522 : f32 to vector<2x128xf32>
    %1524 = arith.addf %1521, %1523 : vector<2x128xf32>
    %cst_108 = arith.constant 0.000000e+00 : f32
    %1525 = vector.broadcast %cst_108 : f32 to vector<2x128xf32>
    %1526 = arith.maximumf %1524, %1525 : vector<2x128xf32>
    %c229 = arith.constant 229 : index
    %1527 = memref.load %arg2[%c229] : memref<398xf32, #tpu.memory_space<smem>>
    %1528 = vector.broadcast %1527 : f32 to vector<2x128xf32>
    %1529 = arith.mulf %1528, %1526 : vector<2x128xf32>
    %1530 = arith.addf %1514, %1529 : vector<2x128xf32>
    %c261 = arith.constant 261 : index
    %1531 = memref.load %arg2[%c261] : memref<398xf32, #tpu.memory_space<smem>>
    %1532 = vector.broadcast %1531 : f32 to vector<2x128xf32>
    %1533 = arith.mulf %1532, %1526 : vector<2x128xf32>
    %1534 = arith.addf %1518, %1533 : vector<2x128xf32>
    %c166 = arith.constant 166 : index
    %1535 = memref.load %arg2[%c166] : memref<398xf32, #tpu.memory_space<smem>>
    %1536 = vector.broadcast %1535 : f32 to vector<2x128xf32>
    %1537 = arith.mulf %1536, %553 : vector<2x128xf32>
    %c198 = arith.constant 198 : index
    %1538 = memref.load %arg2[%c198] : memref<398xf32, #tpu.memory_space<smem>>
    %1539 = vector.broadcast %1538 : f32 to vector<2x128xf32>
    %1540 = arith.addf %1537, %1539 : vector<2x128xf32>
    %cst_109 = arith.constant 0.000000e+00 : f32
    %1541 = vector.broadcast %cst_109 : f32 to vector<2x128xf32>
    %1542 = arith.maximumf %1540, %1541 : vector<2x128xf32>
    %c230 = arith.constant 230 : index
    %1543 = memref.load %arg2[%c230] : memref<398xf32, #tpu.memory_space<smem>>
    %1544 = vector.broadcast %1543 : f32 to vector<2x128xf32>
    %1545 = arith.mulf %1544, %1542 : vector<2x128xf32>
    %1546 = arith.addf %1530, %1545 : vector<2x128xf32>
    %c262 = arith.constant 262 : index
    %1547 = memref.load %arg2[%c262] : memref<398xf32, #tpu.memory_space<smem>>
    %1548 = vector.broadcast %1547 : f32 to vector<2x128xf32>
    %1549 = arith.mulf %1548, %1542 : vector<2x128xf32>
    %1550 = arith.addf %1534, %1549 : vector<2x128xf32>
    %c167 = arith.constant 167 : index
    %1551 = memref.load %arg2[%c167] : memref<398xf32, #tpu.memory_space<smem>>
    %1552 = vector.broadcast %1551 : f32 to vector<2x128xf32>
    %1553 = arith.mulf %1552, %553 : vector<2x128xf32>
    %c199 = arith.constant 199 : index
    %1554 = memref.load %arg2[%c199] : memref<398xf32, #tpu.memory_space<smem>>
    %1555 = vector.broadcast %1554 : f32 to vector<2x128xf32>
    %1556 = arith.addf %1553, %1555 : vector<2x128xf32>
    %cst_110 = arith.constant 0.000000e+00 : f32
    %1557 = vector.broadcast %cst_110 : f32 to vector<2x128xf32>
    %1558 = arith.maximumf %1556, %1557 : vector<2x128xf32>
    %c231 = arith.constant 231 : index
    %1559 = memref.load %arg2[%c231] : memref<398xf32, #tpu.memory_space<smem>>
    %1560 = vector.broadcast %1559 : f32 to vector<2x128xf32>
    %1561 = arith.mulf %1560, %1558 : vector<2x128xf32>
    %1562 = arith.addf %1546, %1561 : vector<2x128xf32>
    %c263 = arith.constant 263 : index
    %1563 = memref.load %arg2[%c263] : memref<398xf32, #tpu.memory_space<smem>>
    %1564 = vector.broadcast %1563 : f32 to vector<2x128xf32>
    %1565 = arith.mulf %1564, %1558 : vector<2x128xf32>
    %1566 = arith.addf %1550, %1565 : vector<2x128xf32>
    %c168 = arith.constant 168 : index
    %1567 = memref.load %arg2[%c168] : memref<398xf32, #tpu.memory_space<smem>>
    %1568 = vector.broadcast %1567 : f32 to vector<2x128xf32>
    %1569 = arith.mulf %1568, %553 : vector<2x128xf32>
    %c200 = arith.constant 200 : index
    %1570 = memref.load %arg2[%c200] : memref<398xf32, #tpu.memory_space<smem>>
    %1571 = vector.broadcast %1570 : f32 to vector<2x128xf32>
    %1572 = arith.addf %1569, %1571 : vector<2x128xf32>
    %cst_111 = arith.constant 0.000000e+00 : f32
    %1573 = vector.broadcast %cst_111 : f32 to vector<2x128xf32>
    %1574 = arith.maximumf %1572, %1573 : vector<2x128xf32>
    %c232 = arith.constant 232 : index
    %1575 = memref.load %arg2[%c232] : memref<398xf32, #tpu.memory_space<smem>>
    %1576 = vector.broadcast %1575 : f32 to vector<2x128xf32>
    %1577 = arith.mulf %1576, %1574 : vector<2x128xf32>
    %1578 = arith.addf %1562, %1577 : vector<2x128xf32>
    %c264 = arith.constant 264 : index
    %1579 = memref.load %arg2[%c264] : memref<398xf32, #tpu.memory_space<smem>>
    %1580 = vector.broadcast %1579 : f32 to vector<2x128xf32>
    %1581 = arith.mulf %1580, %1574 : vector<2x128xf32>
    %1582 = arith.addf %1566, %1581 : vector<2x128xf32>
    %c169 = arith.constant 169 : index
    %1583 = memref.load %arg2[%c169] : memref<398xf32, #tpu.memory_space<smem>>
    %1584 = vector.broadcast %1583 : f32 to vector<2x128xf32>
    %1585 = arith.mulf %1584, %553 : vector<2x128xf32>
    %c201 = arith.constant 201 : index
    %1586 = memref.load %arg2[%c201] : memref<398xf32, #tpu.memory_space<smem>>
    %1587 = vector.broadcast %1586 : f32 to vector<2x128xf32>
    %1588 = arith.addf %1585, %1587 : vector<2x128xf32>
    %cst_112 = arith.constant 0.000000e+00 : f32
    %1589 = vector.broadcast %cst_112 : f32 to vector<2x128xf32>
    %1590 = arith.maximumf %1588, %1589 : vector<2x128xf32>
    %c233 = arith.constant 233 : index
    %1591 = memref.load %arg2[%c233] : memref<398xf32, #tpu.memory_space<smem>>
    %1592 = vector.broadcast %1591 : f32 to vector<2x128xf32>
    %1593 = arith.mulf %1592, %1590 : vector<2x128xf32>
    %1594 = arith.addf %1578, %1593 : vector<2x128xf32>
    %c265 = arith.constant 265 : index
    %1595 = memref.load %arg2[%c265] : memref<398xf32, #tpu.memory_space<smem>>
    %1596 = vector.broadcast %1595 : f32 to vector<2x128xf32>
    %1597 = arith.mulf %1596, %1590 : vector<2x128xf32>
    %1598 = arith.addf %1582, %1597 : vector<2x128xf32>
    %1599 = arith.addf %1077, %1594 : vector<2x128xf32>
    %c0_113 = arith.constant 0 : index
    %c1_114 = arith.constant 1 : index
    %c0_115 = arith.constant 0 : index
    %c0_116 = arith.constant 0 : index
    %1600 = vector.load %arg4[%c0_113, %c1_114, %c0_115, %c0_116] : memref<1x3x2x128xf32, #tpu.memory_space<vmem>>, vector<1x1x2x128xf32>
    %1601 = vector.shape_cast %1600 : vector<1x1x2x128xf32> to vector<2x128xf32>
    %1602 = vector.shape_cast %1599 : vector<2x128xf32> to vector<1x1x2x128xf32>
    tpu.vector_store %arg4[%c0_113, %c1_114, %c0_115, %c0_116], %1602 {strides = array<i32>} : memref<1x3x2x128xf32, #tpu.memory_space<vmem>>, vector<1x1x2x128xf32>,
    %1603 = arith.addf %1082, %1598 : vector<2x128xf32>
    %c0_117 = arith.constant 0 : index
    %c2_118 = arith.constant 2 : index
    %c0_119 = arith.constant 0 : index
    %c0_120 = arith.constant 0 : index
    %1604 = vector.load %arg4[%c0_117, %c2_118, %c0_119, %c0_120] : memref<1x3x2x128xf32, #tpu.memory_space<vmem>>, vector<1x1x2x128xf32>
    %1605 = vector.shape_cast %1604 : vector<1x1x2x128xf32> to vector<2x128xf32>
    %1606 = vector.shape_cast %1603 : vector<2x128xf32> to vector<1x1x2x128xf32>
    tpu.vector_store %arg4[%c0_117, %c2_118, %c0_119, %c0_120], %1606 {strides = array<i32>} : memref<1x3x2x128xf32, #tpu.memory_space<vmem>>, vector<1x1x2x128xf32>,
    return
  }
  func.func @transform_0(%arg0: i32, %arg1: i32, %arg2: memref<398xf32, #tpu.memory_space<smem>>) -> (i32, i32, i32, i32) {
    %c0_i32 = arith.constant 0 : i32
    %c0_i32_0 = arith.constant 0 : i32
    %c0_i32_1 = arith.constant 0 : i32
    return %arg0, %c0_i32, %arg1, %c0_i32_0 : i32, i32, i32, i32
  }
  func.func @transform_1(%arg0: i32, %arg1: i32, %arg2: memref<398xf32, #tpu.memory_space<smem>>) -> (i32, i32, i32, i32) {
    %c0_i32 = arith.constant 0 : i32
    %c0_i32_0 = arith.constant 0 : i32
    %c0_i32_1 = arith.constant 0 : i32
    return %arg0, %c0_i32, %arg1, %c0_i32_0 : i32, i32, i32, i32
  }
}

</mosaic_0001>

<llo_original>
// kernel: tpu_custom_call.1
$region0: #{tpu_custom_call.1}
  #allocation0 [shape = 'u32[]', space=smem, size = 0x4, offset = 0x4, fixed_abs, tag = 'smem constant byte address 0x4 - core index']
  #allocation1 [shape = 'u32[144,128]{1,0:T(1,128)}', space=vmem, size = 0x12000, scoped, tag = 'internal scratch']
  #allocation2 [shape = 's32[1]{0}', space=sflag, size = 0x4, scoped, tag = 'scoped memory for tpu_custom_call.1']
  #allocation3 [shape = 'u8[2048]{0}', space=smem, size = 0x800, scoped, tag = 'prefetched SMEM operand 0']
  %s0 = inlined_call_operand.hbm [shape: f32[398], index: 0, kind: input, shape index: {}]
  %s1 = inlined_call_operand.hbm [shape: f32[2,3,2,128], index: 1, kind: input, shape index: {}]
  %s2 = inlined_call_operand.hbm [shape: f32[2,3,2,128], index: 2, kind: output, shape index: {}]
  %s3 = sld [smem:[#allocation0]]
  $region41: #{tpu_custom_call.1} parent=0
    _
  %s5 = ssub.s32 1, %s3
  %s6 = scalar_select 0, %s5, %s3
  %8 = dma.hbm_to_smem %s0, 64, [#allocation3], [#allocation2]
  %9 = dma.done [#allocation2], 64
  %10 = sfence
  $region1: #{tpu_custom_call.1} parent=0
    #allocation4 [shape = 'u8[6144]{0}', space=vmem, size = 0x1800, scoped, tag = 'input window, operand 1']
    #allocation5 [shape = 's32[2]{0}', space=sflag, size = 0x8, scoped, tag = 'scoped memory for tpu_custom_call.1']
    #allocation6 [shape = 's32[2]{0}', space=sflag, size = 0x8, scoped, tag = 'scoped memory for tpu_custom_call.1']
    #allocation7 [shape = 'u8[6144]{0}', space=vmem, size = 0x1800, scoped, tag = 'output window, operand 0']
    %11 = vsyncpa [#allocation5], 0
    %s12 = scalar_lea.sflag [#allocation5], 1
    %13 = vsyncpa %s12, 0
    %14 = vsyncpa [#allocation6], 0
    %s15 = scalar_lea.sflag [#allocation6], 1
    %16 = vsyncpa %s15, 0
    loop: start=0, step=1, limit=4
    $region2: #{tpu_custom_call.1} parent=1 // loop_pre_header
      _
    $region3: #{tpu_custom_call.1} parent=1 // loop_header
      %s18 = sphi 0, %s22
      %p19 = scmp.ge.s32.totalorder %s18, 4
      %s25 = sphi 0, %s37
      %s26 = sphi 0, %s33
      %s27 = sphi 0, %s25
      %s28 = sphi 0, %s26
      %s29 = sphi 0, %s27
      %s30 = sphi 0, %s28
      %s42 = sphi 0, %s44
      %s45 = sphi 0, %s42
      %s46 = sphi 0, %s45
      %s62 = sphi 0, %s46
      %s70 = sphi 0, %s72
      %s73 = sphi 0, %s70
      %s74 = sphi 0, %s73
      %s90 = sphi 0, %s74
    $region4: #{tpu_custom_call.1} parent=1 // loop_header_branch
      %21 = sbr.rel (%p19) target = $region8
    $region5: #{tpu_custom_call.1} parent=1 // loop_body
      %s23 = ssub.s32 %s18, 1
      %s24 = ssub.s32 %s18, 2
      %s31 = sadd.s32 1, %s26
      %p32 = scmp.ge.s32.totalorder %s31, 1
      %s33 = scalar_select %p32, 0, %s31
      %s34 = sadd.s32 1, %s25
      %s35 = scalar_select %p32, %s34, %s25
      %p36 = scmp.ge.s32.totalorder %s35, 2
      %s37 = scalar_select %p36, 0, %s35
      %s38 = ssub.s32 %s25, %s37
      %s39 = ssub.s32 %s26, %s33
      %s40 = sor.u32 %s38, %s39
      %p41 = scmp.eq.s32.totalorder %s40, 0
      %s43 = sadd.s32 %s42, 1
      %s44 = scalar_select %p41, %s42, %s43
      %p47 = pneg %p41
      %p48 = scmp.eq.s32.totalorder %s18, 1
      %p49 = por %p47, %p48
      %p50 = scmp.ne.s32.totalorder %s42, %s45
      %p51 = scmp.eq.s32.totalorder %s18, 0
      %p52 = por %p50, %p51
      %p53 = scmp.ne.s32.totalorder %s42, %s45
      %p54 = scmp.eq.s32.totalorder %s23, 1
      %p55 = por %p53, %p54
      %p56 = scmp.ne.s32.totalorder %s45, %s46
      %p57 = scmp.eq.s32.totalorder %s23, 0
      %p58 = por %p56, %p57
      %p59 = scmp.ne.s32.totalorder %s45, %s46
      %p60 = scmp.eq.s32.totalorder %s24, 1
      %p61 = por %p59, %p60
      %p63 = scmp.ne.s32.totalorder %s46, %s62
      %p64 = scmp.eq.s32.totalorder %s24, 0
      %p65 = por %p63, %p64
      %s66 = ssub.s32 %s25, %s37
      %s67 = ssub.s32 %s26, %s33
      %s68 = sor.u32 %s66, %s67
      %p69 = scmp.eq.s32.totalorder %s68, 0
      %s71 = sadd.s32 %s70, 1
      %s72 = scalar_select %p69, %s70, %s71
      %p75 = pneg %p69
      %p76 = scmp.eq.s32.totalorder %s18, 1
      %p77 = por %p75, %p76
      %p78 = scmp.ne.s32.totalorder %s70, %s73
      %p79 = scmp.eq.s32.totalorder %s18, 0
      %p80 = por %p78, %p79
      %p81 = scmp.ne.s32.totalorder %s70, %s73
      %p82 = scmp.eq.s32.totalorder %s23, 1
      %p83 = por %p81, %p82
      %p84 = scmp.ne.s32.totalorder %s73, %s74
      %p85 = scmp.eq.s32.totalorder %s23, 0
      %p86 = por %p84, %p85
      %p87 = scmp.ne.s32.totalorder %s73, %s74
      %p88 = scmp.eq.s32.totalorder %s24, 1
      %p89 = por %p87, %p88
      %p91 = scmp.ne.s32.totalorder %s74, %s90
      %p92 = scmp.eq.s32.totalorder %s24, 0
      %p93 = por %p91, %p92
      %p94 = scmp.le.s32.totalorder 1, %s18
      %p95 = scmp.lt.s32.totalorder %s18, 3
      %p96 = pnand %p94, %p95
      %p97 = pneg %p96
      // Predicated region
      $region9: #{tpu_custom_call.1} parent=5 // pred_check
        _
      $region10: #{tpu_custom_call.1} parent=5 // pred_check_branch
        %99 = sbr.rel (%p96) target = $region12
      $region11: #{tpu_custom_call.1} parent=5 // pred_region
        %s100 = ssub.s32 %s18, 1
      $region12: #{tpu_custom_call.1} parent=5 // pred_fallthru
        _
      %p101 = scmp.lt.s32.totalorder %s18, 2
      // Predicated region
      $region13: #{tpu_custom_call.1} parent=5 // pred_check
        %p102 = pneg %p101
      $region14: #{tpu_custom_call.1} parent=5 // pred_check_branch
        %104 = sbr.rel (%p102) target = $region16
      $region15: #{tpu_custom_call.1} parent=5 // pred_region
        // Predicated region
        $region17: #{tpu_custom_call.1} parent=15 // pred_check
          %p105 = pneg %p52
        $region18: #{tpu_custom_call.1} parent=15 // pred_check_branch
          %107 = sbr.rel (%p105) target = $region20
        $region19: #{tpu_custom_call.1} parent=15 // pred_region
          %s108 = sand.u32 %s42, 1
          %s109 = scalar_lea.sflag [#allocation5], %s108
          %s110 = sand.u32 %s42, 1
          %s111 = smul.addr %s110, 6
          %s112 = scalar_lea.vmem [#allocation4], %s111
          %s114 = ssub.s32 96, 96
          %115 = vsyncadd %s109, %s114
          %s116 = smul.addr %s25, 3
          %s117 = sadd.s32 %s26, %s116
          %s118 = smul.addr %s117, 32
          %s119 = scalar_lea.hbm %s1, %s118
          %s120 = sshll.u32 %s112, 4
          %s121 = int_to_ptr.vmem [resolvable:$true] %s120
          %126 = dma.hbm_to_vmem [thread:$0]  %s119, 96, %s121, %s109, 32, 32, 2
        $region20: #{tpu_custom_call.1} parent=15 // pred_fallthru
          _
      $region16: #{tpu_custom_call.1} parent=5 // pred_fallthru
        _
      %p127 = scmp.le.s32.totalorder 1, %s18
      %p128 = scmp.lt.s32.totalorder %s18, 3
      %p129 = pnand %p127, %p128
      %p130 = pneg %p129
      // Predicated region
      $region21: #{tpu_custom_call.1} parent=5 // pred_check
        _
      $region22: #{tpu_custom_call.1} parent=5 // pred_check_branch
        %132 = sbr.rel (%p129) target = $region24
      $region23: #{tpu_custom_call.1} parent=5 // pred_region
        %s133 = ssub.s32 %s18, 1
        %s134 = sand.u32 %s45, 1
        %s135 = scalar_lea.sflag [#allocation5], %s134
        %s136 = sand.u32 %s45, 1
        %s137 = smul.addr %s136, 6
        %s138 = scalar_lea.vmem [#allocation4], %s137
        // Predicated region
        $region25: #{tpu_custom_call.1} parent=23 // pred_check
          %p139 = pneg %p58
        $region26: #{tpu_custom_call.1} parent=23 // pred_check_branch
          %141 = sbr.rel (%p139) target = $region28
        $region27: #{tpu_custom_call.1} parent=23 // pred_region
          %142 = dma.done %s135, 96
        $region28: #{tpu_custom_call.1} parent=23 // pred_fallthru
          _
        %s143 = sand.u32 %s45, 1
        %s144 = scalar_lea.sflag [#allocation5], %s143
        %s145 = sand.u32 %s45, 1
        %s146 = smul.addr %s145, 6
        %s147 = scalar_lea.vmem [#allocation4], %s146
        %p148 = pneg %p58
        %p149 = pneg %p55
        %p150 = pneg %p86
        %p151 = pneg %p83
        %s152 = sand.u32 %s73, 1
        %s153 = scalar_lea.sflag [#allocation6], %s152
        %s154 = sand.u32 %s73, 1
        %s155 = smul.addr %s154, 6
        %s156 = scalar_lea.vmem [#allocation7], %s155
        %v157 = vld [vmem:[%s138] sm:$0x3]
        %s158 = scalar_lea.vmem %s138, 2 [#allocation4]
        %v159 = vld [vmem:[%s158] sm:$0x3]
        %s160 = scalar_lea.vmem %s138, 4 [#allocation4]
        %v161 = vld [vmem:[%s160] sm:$0x3]
        %s162 = sld [smem:[#allocation3]]
        %v163 = vstv %s162
        %v164 = vmul.f32 %v163, %v157
        %s165 = sld [smem:[#allocation3 + $0x1]]
        %v166 = vstv %s165
        %v167 = vmul.f32 %v166, %v159
        %v168 = vadd.f32 %v164, %v167
        %s169 = sld [smem:[#allocation3 + $0x2]]
        %v170 = vstv %s169
        %v171 = vmul.f32 %v170, %v161
        %v172 = vadd.f32 %v168, %v171
        %s173 = sld [smem:[#allocation3 + $0x3]]
        %v174 = vstv %s173
        %v175 = vmul.f32 %v174, %v157
        %s176 = sld [smem:[#allocation3 + $0x4]]
        %v177 = vstv %s176
        %v178 = vmul.f32 %v177, %v159
        %v179 = vadd.f32 %v175, %v178
        %s180 = sld [smem:[#allocation3 + $0x5]]
        %v181 = vstv %s180
        %v182 = vmul.f32 %v181, %v161
        %v183 = vadd.f32 %v179, %v182
        %s184 = sld [smem:[#allocation3 + $0x6]]
        %v185 = vstv %s184
        %v186 = vmul.f32 %v185, %v157
        %s187 = sld [smem:[#allocation3 + $0x7]]
        %v188 = vstv %s187
        %v189 = vmul.f32 %v188, %v159
        %v190 = vadd.f32 %v186, %v189
        %s191 = sld [smem:[#allocation3 + $0x8]]
        %v192 = vstv %s191
        %v193 = vmul.f32 %v192, %v161
        %v194 = vadd.f32 %v190, %v193
        %s195 = sld [smem:[#allocation3 + $0x89]]
        %v196 = vstv %s195
        %s197 = sld [smem:[#allocation3 + $0x9]]
        %v198 = vstv %s197
        %v199 = vmul.f32 %v198, %v183
        %s200 = sld [smem:[#allocation3 + $0xa]]
        %v201 = vstv %s200
        %v202 = vmul.f32 %v201, %v194
        %v203 = vadd.f32 %v199, %v202
        %s204 = sld [smem:[#allocation3 + $0x49]]
        %v205 = vstv %s204
        %v206 = vadd.f32 %v203, %v205
        %v207 = vmax.f32 %v206, 0.0
        %s208 = sld [smem:[#allocation3 + $0x69]]
        %v209 = vstv %s208
        %v210 = vmul.f32 %v209, %v207
        %v211 = vadd.f32 %v196, %v210
        %s212 = sld [smem:[#allocation3 + $0xb]]
        %v213 = vstv %s212
        %v214 = vmul.f32 %v213, %v183
        %s215 = sld [smem:[#allocation3 + $0xc]]
        %v216 = vstv %s215
        %v217 = vmul.f32 %v216, %v194
        %v218 = vadd.f32 %v214, %v217
        %s219 = sld [smem:[#allocation3 + $0x4a]]
        %v220 = vstv %s219
        %v221 = vadd.f32 %v218, %v220
        %v222 = vmax.f32 %v221, 0.0
        %s223 = sld [smem:[#allocation3 + $0x6a]]
        %v224 = vstv %s223
        %v225 = vmul.f32 %v224, %v222
        %v226 = vadd.f32 %v211, %v225
        %s227 = sld [smem:[#allocation3 + $0xd]]
        %v228 = vstv %s227
        %v229 = vmul.f32 %v228, %v183
        %s230 = sld [smem:[#allocation3 + $0xe]]
        %v231 = vstv %s230
        %v232 = vmul.f32 %v231, %v194
        %v233 = vadd.f32 %v229, %v232
        %s234 = sld [smem:[#allocation3 + $0x4b]]
        %v235 = vstv %s234
        %v236 = vadd.f32 %v233, %v235
        %v237 = vmax.f32 %v236, 0.0
        %s238 = sld [smem:[#allocation3 + $0x6b]]
        %v239 = vstv %s238
        %v240 = vmul.f32 %v239, %v237
        %v241 = vadd.f32 %v226, %v240
        %s242 = sld [smem:[#allocation3 + $0xf]]
        %v243 = vstv %s242
        %v244 = vmul.f32 %v243, %v183
        %s245 = sld [smem:[#allocation3 + $0x10]]
        %v246 = vstv %s245
        %v247 = vmul.f32 %v246, %v194
        %v248 = vadd.f32 %v244, %v247
        %s249 = sld [smem:[#allocation3 + $0x4c]]
        %v250 = vstv %s249
        %v251 = vadd.f32 %v248, %v250
        %v252 = vmax.f32 %v251, 0.0
        %s253 = sld [smem:[#allocation3 + $0x6c]]
        %v254 = vstv %s253
        %v255 = vmul.f32 %v254, %v252
        %v256 = vadd.f32 %v241, %v255
        %s257 = sld [smem:[#allocation3 + $0x11]]
        %v258 = vstv %s257
        %v259 = vmul.f32 %v258, %v183
        %s260 = sld [smem:[#allocation3 + $0x12]]
        %v261 = vstv %s260
        %v262 = vmul.f32 %v261, %v194
        %v263 = vadd.f32 %v259, %v262
        %s264 = sld [smem:[#allocation3 + $0x4d]]
        %v265 = vstv %s264
        %v266 = vadd.f32 %v263, %v265
        %v267 = vmax.f32 %v266, 0.0
        %s268 = sld [smem:[#allocation3 + $0x6d]]
        %v269 = vstv %s268
        %v270 = vmul.f32 %v269, %v267
        %v271 = vadd.f32 %v256, %v270
        %s272 = sld [smem:[#allocation3 + $0x13]]
        %v273 = vstv %s272
        %v274 = vmul.f32 %v273, %v183
        %s275 = sld [smem:[#allocation3 + $0x14]]
        %v276 = vstv %s275
        %v277 = vmul.f32 %v276, %v194
        %v278 = vadd.f32 %v274, %v277
        %s279 = sld [smem:[#allocation3 + $0x4e]]
        %v280 = vstv %s279
        %v281 = vadd.f32 %v278, %v280
        %v282 = vmax.f32 %v281, 0.0
        %s283 = sld [smem:[#allocation3 + $0x6e]]
        %v284 = vstv %s283
        %v285 = vmul.f32 %v284, %v282
        %v286 = vadd.f32 %v271, %v285
        %s287 = sld [smem:[#allocation3 + $0x15]]
        %v288 = vstv %s287
        %v289 = vmul.f32 %v288, %v183
        %s290 = sld [smem:[#allocation3 + $0x16]]
        %v291 = vstv %s290
        %v292 = vmul.f32 %v291, %v194
        %v293 = vadd.f32 %v289, %v292
        %s294 = sld [smem:[#allocation3 + $0x4f]]
        %v295 = vstv %s294
        %v296 = vadd.f32 %v293, %v295
        %v297 = vmax.f32 %v296, 0.0
        %s298 = sld [smem:[#allocation3 + $0x6f]]
        %v299 = vstv %s298
        %v300 = vmul.f32 %v299, %v297
        %v301 = vadd.f32 %v286, %v300
        %s302 = sld [smem:[#allocation3 + $0x17]]
        %v303 = vstv %s302
        %v304 = vmul.f32 %v303, %v183
        %s305 = sld [smem:[#allocation3 + $0x18]]
        %v306 = vstv %s305
        %v307 = vmul.f32 %v306, %v194
        %v308 = vadd.f32 %v304, %v307
        %s309 = sld [smem:[#allocation3 + $0x50]]
        %v310 = vstv %s309
        %v311 = vadd.f32 %v308, %v310
        %v312 = vmax.f32 %v311, 0.0
        %s313 = sld [smem:[#allocation3 + $0x70]]
        %v314 = vstv %s313
        %v315 = vmul.f32 %v314, %v312
        %v316 = vadd.f32 %v301, %v315
        %s317 = sld [smem:[#allocation3 + $0x19]]
        %v318 = vstv %s317
        %v319 = vmul.f32 %v318, %v183
        %s320 = sld [smem:[#allocation3 + $0x1a]]
        %v321 = vstv %s320
        %v322 = vmul.f32 %v321, %v194
        %v323 = vadd.f32 %v319, %v322
        %s324 = sld [smem:[#allocation3 + $0x51]]
        %v325 = vstv %s324
        %v326 = vadd.f32 %v323, %v325
        %v327 = vmax.f32 %v326, 0.0
        %s328 = sld [smem:[#allocation3 + $0x71]]
        %v329 = vstv %s328
        %v330 = vmul.f32 %v329, %v327
        %v331 = vadd.f32 %v316, %v330
        %s332 = sld [smem:[#allocation3 + $0x1b]]
        %v333 = vstv %s332
        %v334 = vmul.f32 %v333, %v183
        %s335 = sld [smem:[#allocation3 + $0x1c]]
        %v336 = vstv %s335
        %v337 = vmul.f32 %v336, %v194
        %v338 = vadd.f32 %v334, %v337
        %s339 = sld [smem:[#allocation3 + $0x52]]
        %v340 = vstv %s339
        %v341 = vadd.f32 %v338, %v340
        %v342 = vmax.f32 %v341, 0.0
        %s343 = sld [smem:[#allocation3 + $0x72]]
        %v344 = vstv %s343
        %v345 = vmul.f32 %v344, %v342
        %v346 = vadd.f32 %v331, %v345
        %s347 = sld [smem:[#allocation3 + $0x1d]]
        %v348 = vstv %s347
        %v349 = vmul.f32 %v348, %v183
        %s350 = sld [smem:[#allocation3 + $0x1e]]
        %v351 = vstv %s350
        %v352 = vmul.f32 %v351, %v194
        %v353 = vadd.f32 %v349, %v352
        %s354 = sld [smem:[#allocation3 + $0x53]]
        %v355 = vstv %s354
        %v356 = vadd.f32 %v353, %v355
        %v357 = vmax.f32 %v356, 0.0
        %s358 = sld [smem:[#allocation3 + $0x73]]
        %v359 = vstv %s358
        %v360 = vmul.f32 %v359, %v357
        %v361 = vadd.f32 %v346, %v360
        %s362 = sld [smem:[#allocation3 + $0x1f]]
        %v363 = vstv %s362
        %v364 = vmul.f32 %v363, %v183
        %s365 = sld [smem:[#allocation3 + $0x20]]
        %v366 = vstv %s365
        %v367 = vmul.f32 %v366, %v194
        %v368 = vadd.f32 %v364, %v367
        %s369 = sld [smem:[#allocation3 + $0x54]]
        %v370 = vstv %s369
        %v371 = vadd.f32 %v368, %v370
        %v372 = vmax.f32 %v371, 0.0
        %s373 = sld [smem:[#allocation3 + $0x74]]
        %v374 = vstv %s373
        %v375 = vmul.f32 %v374, %v372
        %v376 = vadd.f32 %v361, %v375
        %s377 = sld [smem:[#allocation3 + $0x21]]
        %v378 = vstv %s377
        %v379 = vmul.f32 %v378, %v183
        %s380 = sld [smem:[#allocation3 + $0x22]]
        %v381 = vstv %s380
        %v382 = vmul.f32 %v381, %v194
        %v383 = vadd.f32 %v379, %v382
        %s384 = sld [smem:[#allocation3 + $0x55]]
        %v385 = vstv %s384
        %v386 = vadd.f32 %v383, %v385
        %v387 = vmax.f32 %v386, 0.0
        %s388 = sld [smem:[#allocation3 + $0x75]]
        %v389 = vstv %s388
        %v390 = vmul.f32 %v389, %v387
        %v391 = vadd.f32 %v376, %v390
        %s392 = sld [smem:[#allocation3 + $0x23]]
        %v393 = vstv %s392
        %v394 = vmul.f32 %v393, %v183
        %s395 = sld [smem:[#allocation3 + $0x24]]
        %v396 = vstv %s395
        %v397 = vmul.f32 %v396, %v194
        %v398 = vadd.f32 %v394, %v397
        %s399 = sld [smem:[#allocation3 + $0x56]]
        %v400 = vstv %s399
        %v401 = vadd.f32 %v398, %v400
        %v402 = vmax.f32 %v401, 0.0
        %s403 = sld [smem:[#allocation3 + $0x76]]
        %v404 = vstv %s403
        %v405 = vmul.f32 %v404, %v402
        %v406 = vadd.f32 %v391, %v405
        %s407 = sld [smem:[#allocation3 + $0x25]]
        %v408 = vstv %s407
        %v409 = vmul.f32 %v408, %v183
        %s410 = sld [smem:[#allocation3 + $0x26]]
        %v411 = vstv %s410
        %v412 = vmul.f32 %v411, %v194
        %v413 = vadd.f32 %v409, %v412
        %s414 = sld [smem:[#allocation3 + $0x57]]
        %v415 = vstv %s414
        %v416 = vadd.f32 %v413, %v415
        %v417 = vmax.f32 %v416, 0.0
        %s418 = sld [smem:[#allocation3 + $0x77]]
        %v419 = vstv %s418
        %v420 = vmul.f32 %v419, %v417
        %v421 = vadd.f32 %v406, %v420
        %s422 = sld [smem:[#allocation3 + $0x27]]
        %v423 = vstv %s422
        %v424 = vmul.f32 %v423, %v183
        %s425 = sld [smem:[#allocation3 + $0x28]]
        %v426 = vstv %s425
        %v427 = vmul.f32 %v426, %v194
        %v428 = vadd.f32 %v424, %v427
        %s429 = sld [smem:[#allocation3 + $0x58]]
        %v430 = vstv %s429
        %v431 = vadd.f32 %v428, %v430
        %v432 = vmax.f32 %v431, 0.0
        %s433 = sld [smem:[#allocation3 + $0x78]]
        %v434 = vstv %s433
        %v435 = vmul.f32 %v434, %v432
        %v436 = vadd.f32 %v421, %v435
        %s437 = sld [smem:[#allocation3 + $0x29]]
        %v438 = vstv %s437
        %v439 = vmul.f32 %v438, %v183
        %s440 = sld [smem:[#allocation3 + $0x2a]]
        %v441 = vstv %s440
        %v442 = vmul.f32 %v441, %v194
        %v443 = vadd.f32 %v439, %v442
        %s444 = sld [smem:[#allocation3 + $0x59]]
        %v445 = vstv %s444
        %v446 = vadd.f32 %v443, %v445
        %v447 = vmax.f32 %v446, 0.0
        %s448 = sld [smem:[#allocation3 + $0x79]]
        %v449 = vstv %s448
        %v450 = vmul.f32 %v449, %v447
        %v451 = vadd.f32 %v436, %v450
        %s452 = sld [smem:[#allocation3 + $0x2b]]
        %v453 = vstv %s452
        %v454 = vmul.f32 %v453, %v183
        %s455 = sld [smem:[#allocation3 + $0x2c]]
        %v456 = vstv %s455
        %v457 = vmul.f32 %v456, %v194
        %v458 = vadd.f32 %v454, %v457
        %s459 = sld [smem:[#allocation3 + $0x5a]]
        %v460 = vstv %s459
        %v461 = vadd.f32 %v458, %v460
        %v462 = vmax.f32 %v461, 0.0
        %s463 = sld [smem:[#allocation3 + $0x7a]]
        %v464 = vstv %s463
        %v465 = vmul.f32 %v464, %v462
        %v466 = vadd.f32 %v451, %v465
        %s467 = sld [smem:[#allocation3 + $0x2d]]
        %v468 = vstv %s467
        %v469 = vmul.f32 %v468, %v183
        %s470 = sld [smem:[#allocation3 + $0x2e]]
        %v471 = vstv %s470
        %v472 = vmul.f32 %v471, %v194
        %v473 = vadd.f32 %v469, %v472
        %s474 = sld [smem:[#allocation3 + $0x5b]]
        %v475 = vstv %s474
        %v476 = vadd.f32 %v473, %v475
        %v477 = vmax.f32 %v476, 0.0
        %s478 = sld [smem:[#allocation3 + $0x7b]]
        %v479 = vstv %s478
        %v480 = vmul.f32 %v479, %v477
        %v481 = vadd.f32 %v466, %v480
        %s482 = sld [smem:[#allocation3 + $0x2f]]
        %v483 = vstv %s482
        %v484 = vmul.f32 %v483, %v183
        %s485 = sld [smem:[#allocation3 + $0x30]]
        %v486 = vstv %s485
        %v487 = vmul.f32 %v486, %v194
        %v488 = vadd.f32 %v484, %v487
        %s489 = sld [smem:[#allocation3 + $0x5c]]
        %v490 = vstv %s489
        %v491 = vadd.f32 %v488, %v490
        %v492 = vmax.f32 %v491, 0.0
        %s493 = sld [smem:[#allocation3 + $0x7c]]
        %v494 = vstv %s493
        %v495 = vmul.f32 %v494, %v492
        %v496 = vadd.f32 %v481, %v495
        %s497 = sld [smem:[#allocation3 + $0x31]]
        %v498 = vstv %s497
        %v499 = vmul.f32 %v498, %v183
        %s500 = sld [smem:[#allocation3 + $0x32]]
        %v501 = vstv %s500
        %v502 = vmul.f32 %v501, %v194
        %v503 = vadd.f32 %v499, %v502
        %s504 = sld [smem:[#allocation3 + $0x5d]]
        %v505 = vstv %s504
        %v506 = vadd.f32 %v503, %v505
        %v507 = vmax.f32 %v506, 0.0
        %s508 = sld [smem:[#allocation3 + $0x7d]]
        %v509 = vstv %s508
        %v510 = vmul.f32 %v509, %v507
        %v511 = vadd.f32 %v496, %v510
        %s512 = sld [smem:[#allocation3 + $0x33]]
        %v513 = vstv %s512
        %v514 = vmul.f32 %v513, %v183
        %s515 = sld [smem:[#allocation3 + $0x34]]
        %v516 = vstv %s515
        %v517 = vmul.f32 %v516, %v194
        %v518 = vadd.f32 %v514, %v517
        %s519 = sld [smem:[#allocation3 + $0x5e]]
        %v520 = vstv %s519
        %v521 = vadd.f32 %v518, %v520
        %v522 = vmax.f32 %v521, 0.0
        %s523 = sld [smem:[#allocation3 + $0x7e]]
        %v524 = vstv %s523
        %v525 = vmul.f32 %v524, %v522
        %v526 = vadd.f32 %v511, %v525
        %s527 = sld [smem:[#allocation3 + $0x35]]
        %v528 = vstv %s527
        %v529 = vmul.f32 %v528, %v183
        %s530 = sld [smem:[#allocation3 + $0x36]]
        %v531 = vstv %s530
        %v532 = vmul.f32 %v531, %v194
        %v533 = vadd.f32 %v529, %v532
        %s534 = sld [smem:[#allocation3 + $0x5f]]
        %v535 = vstv %s534
        %v536 = vadd.f32 %v533, %v535
        %v537 = vmax.f32 %v536, 0.0
        %s538 = sld [smem:[#allocation3 + $0x7f]]
        %v539 = vstv %s538
        %v540 = vmul.f32 %v539, %v537
        %v541 = vadd.f32 %v526, %v540
        %s542 = sld [smem:[#allocation3 + $0x37]]
        %v543 = vstv %s542
        %v544 = vmul.f32 %v543, %v183
        %s545 = sld [smem:[#allocation3 + $0x38]]
        %v546 = vstv %s545
        %v547 = vmul.f32 %v546, %v194
        %v548 = vadd.f32 %v544, %v547
        %s549 = sld [smem:[#allocation3 + $0x60]]
        %v550 = vstv %s549
        %v551 = vadd.f32 %v548, %v550
        %v552 = vmax.f32 %v551, 0.0
        %s553 = sld [smem:[#allocation3 + $0x80]]
        %v554 = vstv %s553
        %v555 = vmul.f32 %v554, %v552
        %v556 = vadd.f32 %v541, %v555
        %s557 = sld [smem:[#allocation3 + $0x39]]
        %v558 = vstv %s557
        %v559 = vmul.f32 %v558, %v183
        %s560 = sld [smem:[#allocation3 + $0x3a]]
        %v561 = vstv %s560
        %v562 = vmul.f32 %v561, %v194
        %v563 = vadd.f32 %v559, %v562
        %s564 = sld [smem:[#allocation3 + $0x61]]
        %v565 = vstv %s564
        %v566 = vadd.f32 %v563, %v565
        %v567 = vmax.f32 %v566, 0.0
        %s568 = sld [smem:[#allocation3 + $0x81]]
        %v569 = vstv %s568
        %v570 = vmul.f32 %v569, %v567
        %v571 = vadd.f32 %v556, %v570
        %s572 = sld [smem:[#allocation3 + $0x3b]]
        %v573 = vstv %s572
        %v574 = vmul.f32 %v573, %v183
        %s575 = sld [smem:[#allocation3 + $0x3c]]
        %v576 = vstv %s575
        %v577 = vmul.f32 %v576, %v194
        %v578 = vadd.f32 %v574, %v577
        %s579 = sld [smem:[#allocation3 + $0x62]]
        %v580 = vstv %s579
        %v581 = vadd.f32 %v578, %v580
        %v582 = vmax.f32 %v581, 0.0
        %s583 = sld [smem:[#allocation3 + $0x82]]
        %v584 = vstv %s583
        %v585 = vmul.f32 %v584, %v582
        %v586 = vadd.f32 %v571, %v585
        %s587 = sld [smem:[#allocation3 + $0x3d]]
        %v588 = vstv %s587
        %v589 = vmul.f32 %v588, %v183
        %s590 = sld [smem:[#allocation3 + $0x3e]]
        %v591 = vstv %s590
        %v592 = vmul.f32 %v591, %v194
        %v593 = vadd.f32 %v589, %v592
        %s594 = sld [smem:[#allocation3 + $0x63]]
        %v595 = vstv %s594
        %v596 = vadd.f32 %v593, %v595
        %v597 = vmax.f32 %v596, 0.0
        %s598 = sld [smem:[#allocation3 + $0x83]]
        %v599 = vstv %s598
        %v600 = vmul.f32 %v599, %v597
        %v601 = vadd.f32 %v586, %v600
        %s602 = sld [smem:[#allocation3 + $0x3f]]
        %v603 = vstv %s602
        %v604 = vmul.f32 %v603, %v183
        %s605 = sld [smem:[#allocation3 + $0x40]]
        %v606 = vstv %s605
        %v607 = vmul.f32 %v606, %v194
        %v608 = vadd.f32 %v604, %v607
        %s609 = sld [smem:[#allocation3 + $0x64]]
        %v610 = vstv %s609
        %v611 = vadd.f32 %v608, %v610
        %v612 = vmax.f32 %v611, 0.0
        %s613 = sld [smem:[#allocation3 + $0x84]]
        %v614 = vstv %s613
        %v615 = vmul.f32 %v614, %v612
        %v616 = vadd.f32 %v601, %v615
        %s617 = sld [smem:[#allocation3 + $0x41]]
        %v618 = vstv %s617
        %v619 = vmul.f32 %v618, %v183
        %s620 = sld [smem:[#allocation3 + $0x42]]
        %v621 = vstv %s620
        %v622 = vmul.f32 %v621, %v194
        %v623 = vadd.f32 %v619, %v622
        %s624 = sld [smem:[#allocation3 + $0x65]]
        %v625 = vstv %s624
        %v626 = vadd.f32 %v623, %v625
        %v627 = vmax.f32 %v626, 0.0
        %s628 = sld [smem:[#allocation3 + $0x85]]
        %v629 = vstv %s628
        %v630 = vmul.f32 %v629, %v627
        %v631 = vadd.f32 %v616, %v630
        %s632 = sld [smem:[#allocation3 + $0x43]]
        %v633 = vstv %s632
        %v634 = vmul.f32 %v633, %v183
        %s635 = sld [smem:[#allocation3 + $0x44]]
        %v636 = vstv %s635
        %v637 = vmul.f32 %v636, %v194
        %v638 = vadd.f32 %v634, %v637
        %s639 = sld [smem:[#allocation3 + $0x66]]
        %v640 = vstv %s639
        %v641 = vadd.f32 %v638, %v640
        %v642 = vmax.f32 %v641, 0.0
        %s643 = sld [smem:[#allocation3 + $0x86]]
        %v644 = vstv %s643
        %v645 = vmul.f32 %v644, %v642
        %v646 = vadd.f32 %v631, %v645
        %s647 = sld [smem:[#allocation3 + $0x45]]
        %v648 = vstv %s647
        %v649 = vmul.f32 %v648, %v183
        %s650 = sld [smem:[#allocation3 + $0x46]]
        %v651 = vstv %s650
        %v652 = vmul.f32 %v651, %v194
        %v653 = vadd.f32 %v649, %v652
        %s654 = sld [smem:[#allocation3 + $0x67]]
        %v655 = vstv %s654
        %v656 = vadd.f32 %v653, %v655
        %v657 = vmax.f32 %v656, 0.0
        %s658 = sld [smem:[#allocation3 + $0x87]]
        %v659 = vstv %s658
        %v660 = vmul.f32 %v659, %v657
        %v661 = vadd.f32 %v646, %v660
        %s662 = sld [smem:[#allocation3 + $0x47]]
        %v663 = vstv %s662
        %v664 = vmul.f32 %v663, %v183
        %s665 = sld [smem:[#allocation3 + $0x48]]
        %v666 = vstv %s665
        %v667 = vmul.f32 %v666, %v194
        %v668 = vadd.f32 %v664, %v667
        %s669 = sld [smem:[#allocation3 + $0x68]]
        %v670 = vstv %s669
        %v671 = vadd.f32 %v668, %v670
        %v672 = vmax.f32 %v671, 0.0
        %s673 = sld [smem:[#allocation3 + $0x88]]
        %v674 = vstv %s673
        %v675 = vmul.f32 %v674, %v672
        %v676 = vadd.f32 %v661, %v675
        %v677 = vadd.f32 %v172, %v676
        %678 = vst [vmem:[%s156] sm:$0x3] %v677
        %s679 = sld [smem:[#allocation3 + $0x18c]]
        %v680 = vstv %s679
        %s681 = sld [smem:[#allocation3 + $0x18d]]
        %v682 = vstv %s681
        %s683 = sld [smem:[#allocation3 + $0x10c]]
        %v684 = vstv %s683
        %v685 = vmul.f32 %v684, %v677
        %s686 = sld [smem:[#allocation3 + $0x12c]]
        %v687 = vstv %s686
        %v688 = vadd.f32 %v685, %v687
        %v689 = vmax.f32 %v688, 0.0
        %s690 = sld [smem:[#allocation3 + $0x14c]]
        %v691 = vstv %s690
        %v692 = vmul.f32 %v691, %v689
        %v693 = vadd.f32 %v680, %v692
        %s694 = sld [smem:[#allocation3 + $0x16c]]
        %v695 = vstv %s694
        %v696 = vmul.f32 %v695, %v689
        %v697 = vadd.f32 %v682, %v696
        %s698 = sld [smem:[#allocation3 + $0x10d]]
        %v699 = vstv %s698
        %v700 = vmul.f32 %v699, %v677
        %s701 = sld [smem:[#allocation3 + $0x12d]]
        %v702 = vstv %s701
        %v703 = vadd.f32 %v700, %v702
        %v704 = vmax.f32 %v703, 0.0
        %s705 = sld [smem:[#allocation3 + $0x14d]]
        %v706 = vstv %s705
        %v707 = vmul.f32 %v706, %v704
        %v708 = vadd.f32 %v693, %v707
        %s709 = sld [smem:[#allocation3 + $0x16d]]
        %v710 = vstv %s709
        %v711 = vmul.f32 %v710, %v704
        %v712 = vadd.f32 %v697, %v711
        %s713 = sld [smem:[#allocation3 + $0x10e]]
        %v714 = vstv %s713
        %v715 = vmul.f32 %v714, %v677
        %s716 = sld [smem:[#allocation3 + $0x12e]]
        %v717 = vstv %s716
        %v718 = vadd.f32 %v715, %v717
        %v719 = vmax.f32 %v718, 0.0
        %s720 = sld [smem:[#allocation3 + $0x14e]]
        %v721 = vstv %s720
        %v722 = vmul.f32 %v721, %v719
        %v723 = vadd.f32 %v708, %v722
        %s724 = sld [smem:[#allocation3 + $0x16e]]
        %v725 = vstv %s724
        %v726 = vmul.f32 %v725, %v719
        %v727 = vadd.f32 %v712, %v726
        %s728 = sld [smem:[#allocation3 + $0x10f]]
        %v729 = vstv %s728
        %v730 = vmul.f32 %v729, %v677
        %s731 = sld [smem:[#allocation3 + $0x12f]]
        %v732 = vstv %s731
        %v733 = vadd.f32 %v730, %v732
        %v734 = vmax.f32 %v733, 0.0
        %s735 = sld [smem:[#allocation3 + $0x14f]]
        %v736 = vstv %s735
        %v737 = vmul.f32 %v736, %v734
        %v738 = vadd.f32 %v723, %v737
        %s739 = sld [smem:[#allocation3 + $0x16f]]
        %v740 = vstv %s739
        %v741 = vmul.f32 %v740, %v734
        %v742 = vadd.f32 %v727, %v741
        %s743 = sld [smem:[#allocation3 + $0x110]]
        %v744 = vstv %s743
        %v745 = vmul.f32 %v744, %v677
        %s746 = sld [smem:[#allocation3 + $0x130]]
        %v747 = vstv %s746
        %v748 = vadd.f32 %v745, %v747
        %v749 = vmax.f32 %v748, 0.0
        %s750 = sld [smem:[#allocation3 + $0x150]]
        %v751 = vstv %s750
        %v752 = vmul.f32 %v751, %v749
        %v753 = vadd.f32 %v738, %v752
        %s754 = sld [smem:[#allocation3 + $0x170]]
        %v755 = vstv %s754
        %v756 = vmul.f32 %v755, %v749
        %v757 = vadd.f32 %v742, %v756
        %s758 = sld [smem:[#allocation3 + $0x111]]
        %v759 = vstv %s758
        %v760 = vmul.f32 %v759, %v677
        %s761 = sld [smem:[#allocation3 + $0x131]]
        %v762 = vstv %s761
        %v763 = vadd.f32 %v760, %v762
        %v764 = vmax.f32 %v763, 0.0
        %s765 = sld [smem:[#allocation3 + $0x151]]
        %v766 = vstv %s765
        %v767 = vmul.f32 %v766, %v764
        %v768 = vadd.f32 %v753, %v767
        %s769 = sld [smem:[#allocation3 + $0x171]]
        %v770 = vstv %s769
        %v771 = vmul.f32 %v770, %v764
        %v772 = vadd.f32 %v757, %v771
        %s773 = sld [smem:[#allocation3 + $0x112]]
        %v774 = vstv %s773
        %v775 = vmul.f32 %v774, %v677
        %s776 = sld [smem:[#allocation3 + $0x132]]
        %v777 = vstv %s776
        %v778 = vadd.f32 %v775, %v777
        %v779 = vmax.f32 %v778, 0.0
        %s780 = sld [smem:[#allocation3 + $0x152]]
        %v781 = vstv %s780
        %v782 = vmul.f32 %v781, %v779
        %v783 = vadd.f32 %v768, %v782
        %s784 = sld [smem:[#allocation3 + $0x172]]
        %v785 = vstv %s784
        %v786 = vmul.f32 %v785, %v779
        %v787 = vadd.f32 %v772, %v786
        %s788 = sld [smem:[#allocation3 + $0x113]]
        %v789 = vstv %s788
        %v790 = vmul.f32 %v789, %v677
        %s791 = sld [smem:[#allocation3 + $0x133]]
        %v792 = vstv %s791
        %v793 = vadd.f32 %v790, %v792
        %v794 = vmax.f32 %v793, 0.0
        %s795 = sld [smem:[#allocation3 + $0x153]]
        %v796 = vstv %s795
        %v797 = vmul.f32 %v796, %v794
        %v798 = vadd.f32 %v783, %v797
        %s799 = sld [smem:[#allocation3 + $0x173]]
        %v800 = vstv %s799
        %v801 = vmul.f32 %v800, %v794
        %v802 = vadd.f32 %v787, %v801
        %s803 = sld [smem:[#allocation3 + $0x114]]
        %v804 = vstv %s803
        %v805 = vmul.f32 %v804, %v677
        %s806 = sld [smem:[#allocation3 + $0x134]]
        %v807 = vstv %s806
        %v808 = vadd.f32 %v805, %v807
        %v809 = vmax.f32 %v808, 0.0
        %s810 = sld [smem:[#allocation3 + $0x154]]
        %v811 = vstv %s810
        %v812 = vmul.f32 %v811, %v809
        %v813 = vadd.f32 %v798, %v812
        %s814 = sld [smem:[#allocation3 + $0x174]]
        %v815 = vstv %s814
        %v816 = vmul.f32 %v815, %v809
        %v817 = vadd.f32 %v802, %v816
        %s818 = sld [smem:[#allocation3 + $0x115]]
        %v819 = vstv %s818
        %v820 = vmul.f32 %v819, %v677
        %s821 = sld [smem:[#allocation3 + $0x135]]
        %v822 = vstv %s821
        %v823 = vadd.f32 %v820, %v822
        %v824 = vmax.f32 %v823, 0.0
        %s825 = sld [smem:[#allocation3 + $0x155]]
        %v826 = vstv %s825
        %v827 = vmul.f32 %v826, %v824
        %v828 = vadd.f32 %v813, %v827
        %s829 = sld [smem:[#allocation3 + $0x175]]
        %v830 = vstv %s829
        %v831 = vmul.f32 %v830, %v824
        %v832 = vadd.f32 %v817, %v831
        %s833 = sld [smem:[#allocation3 + $0x116]]
        %v834 = vstv %s833
        %v835 = vmul.f32 %v834, %v677
        %s836 = sld [smem:[#allocation3 + $0x136]]
        %v837 = vstv %s836
        %v838 = vadd.f32 %v835, %v837
        %v839 = vmax.f32 %v838, 0.0
        %s840 = sld [smem:[#allocation3 + $0x156]]
        %v841 = vstv %s840
        %v842 = vmul.f32 %v841, %v839
        %v843 = vadd.f32 %v828, %v842
        %s844 = sld [smem:[#allocation3 + $0x176]]
        %v845 = vstv %s844
        %v846 = vmul.f32 %v845, %v839
        %v847 = vadd.f32 %v832, %v846
        %s848 = sld [smem:[#allocation3 + $0x117]]
        %v849 = vstv %s848
        %v850 = vmul.f32 %v849, %v677
        %s851 = sld [smem:[#allocation3 + $0x137]]
        %v852 = vstv %s851
        %v853 = vadd.f32 %v850, %v852
        %v854 = vmax.f32 %v853, 0.0
        %s855 = sld [smem:[#allocation3 + $0x157]]
        %v856 = vstv %s855
        %v857 = vmul.f32 %v856, %v854
        %v858 = vadd.f32 %v843, %v857
        %s859 = sld [smem:[#allocation3 + $0x177]]
        %v860 = vstv %s859
        %v861 = vmul.f32 %v860, %v854
        %v862 = vadd.f32 %v847, %v861
        %s863 = sld [smem:[#allocation3 + $0x118]]
        %v864 = vstv %s863
        %v865 = vmul.f32 %v864, %v677
        %s866 = sld [smem:[#allocation3 + $0x138]]
        %v867 = vstv %s866
        %v868 = vadd.f32 %v865, %v867
        %v869 = vmax.f32 %v868, 0.0
        %s870 = sld [smem:[#allocation3 + $0x158]]
        %v871 = vstv %s870
        %v872 = vmul.f32 %v871, %v869
        %v873 = vadd.f32 %v858, %v872
        %s874 = sld [smem:[#allocation3 + $0x178]]
        %v875 = vstv %s874
        %v876 = vmul.f32 %v875, %v869
        %v877 = vadd.f32 %v862, %v876
        %s878 = sld [smem:[#allocation3 + $0x119]]
        %v879 = vstv %s878
        %v880 = vmul.f32 %v879, %v677
        %s881 = sld [smem:[#allocation3 + $0x139]]
        %v882 = vstv %s881
        %v883 = vadd.f32 %v880, %v882
        %v884 = vmax.f32 %v883, 0.0
        %s885 = sld [smem:[#allocation3 + $0x159]]
        %v886 = vstv %s885
        %v887 = vmul.f32 %v886, %v884
        %v888 = vadd.f32 %v873, %v887
        %s889 = sld [smem:[#allocation3 + $0x179]]
        %v890 = vstv %s889
        %v891 = vmul.f32 %v890, %v884
        %v892 = vadd.f32 %v877, %v891
        %s893 = sld [smem:[#allocation3 + $0x11a]]
        %v894 = vstv %s893
        %v895 = vmul.f32 %v894, %v677
        %s896 = sld [smem:[#allocation3 + $0x13a]]
        %v897 = vstv %s896
        %v898 = vadd.f32 %v895, %v897
        %v899 = vmax.f32 %v898, 0.0
        %s900 = sld [smem:[#allocation3 + $0x15a]]
        %v901 = vstv %s900
        %v902 = vmul.f32 %v901, %v899
        %v903 = vadd.f32 %v888, %v902
        %s904 = sld [smem:[#allocation3 + $0x17a]]
        %v905 = vstv %s904
        %v906 = vmul.f32 %v905, %v899
        %v907 = vadd.f32 %v892, %v906
        %s908 = sld [smem:[#allocation3 + $0x11b]]
        %v909 = vstv %s908
        %v910 = vmul.f32 %v909, %v677
        %s911 = sld [smem:[#allocation3 + $0x13b]]
        %v912 = vstv %s911
        %v913 = vadd.f32 %v910, %v912
        %v914 = vmax.f32 %v913, 0.0
        %s915 = sld [smem:[#allocation3 + $0x15b]]
        %v916 = vstv %s915
        %v917 = vmul.f32 %v916, %v914
        %v918 = vadd.f32 %v903, %v917
        %s919 = sld [smem:[#allocation3 + $0x17b]]
        %v920 = vstv %s919
        %v921 = vmul.f32 %v920, %v914
        %v922 = vadd.f32 %v907, %v921
        %s923 = sld [smem:[#allocation3 + $0x11c]]
        %v924 = vstv %s923
        %v925 = vmul.f32 %v924, %v677
        %s926 = sld [smem:[#allocation3 + $0x13c]]
        %v927 = vstv %s926
        %v928 = vadd.f32 %v925, %v927
        %v929 = vmax.f32 %v928, 0.0
        %s930 = sld [smem:[#allocation3 + $0x15c]]
        %v931 = vstv %s930
        %v932 = vmul.f32 %v931, %v929
        %v933 = vadd.f32 %v918, %v932
        %s934 = sld [smem:[#allocation3 + $0x17c]]
        %v935 = vstv %s934
        %v936 = vmul.f32 %v935, %v929
        %v937 = vadd.f32 %v922, %v936
        %s938 = sld [smem:[#allocation3 + $0x11d]]
        %v939 = vstv %s938
        %v940 = vmul.f32 %v939, %v677
        %s941 = sld [smem:[#allocation3 + $0x13d]]
        %v942 = vstv %s941
        %v943 = vadd.f32 %v940, %v942
        %v944 = vmax.f32 %v943, 0.0
        %s945 = sld [smem:[#allocation3 + $0x15d]]
        %v946 = vstv %s945
        %v947 = vmul.f32 %v946, %v944
        %v948 = vadd.f32 %v933, %v947
        %s949 = sld [smem:[#allocation3 + $0x17d]]
        %v950 = vstv %s949
        %v951 = vmul.f32 %v950, %v944
        %v952 = vadd.f32 %v937, %v951
        %s953 = sld [smem:[#allocation3 + $0x11e]]
        %v954 = vstv %s953
        %v955 = vmul.f32 %v954, %v677
        %s956 = sld [smem:[#allocation3 + $0x13e]]
        %v957 = vstv %s956
        %v958 = vadd.f32 %v955, %v957
        %v959 = vmax.f32 %v958, 0.0
        %s960 = sld [smem:[#allocation3 + $0x15e]]
        %v961 = vstv %s960
        %v962 = vmul.f32 %v961, %v959
        %v963 = vadd.f32 %v948, %v962
        %s964 = sld [smem:[#allocation3 + $0x17e]]
        %v965 = vstv %s964
        %v966 = vmul.f32 %v965, %v959
        %v967 = vadd.f32 %v952, %v966
        %s968 = sld [smem:[#allocation3 + $0x11f]]
        %v969 = vstv %s968
        %v970 = vmul.f32 %v969, %v677
        %s971 = sld [smem:[#allocation3 + $0x13f]]
        %v972 = vstv %s971
        %v973 = vadd.f32 %v970, %v972
        %v974 = vmax.f32 %v973, 0.0
        %s975 = sld [smem:[#allocation3 + $0x15f]]
        %v976 = vstv %s975
        %v977 = vmul.f32 %v976, %v974
        %v978 = vadd.f32 %v963, %v977
        %s979 = sld [smem:[#allocation3 + $0x17f]]
        %v980 = vstv %s979
        %v981 = vmul.f32 %v980, %v974
        %v982 = vadd.f32 %v967, %v981
        %s983 = sld [smem:[#allocation3 + $0x120]]
        %v984 = vstv %s983
        %v985 = vmul.f32 %v984, %v677
        %s986 = sld [smem:[#allocation3 + $0x140]]
        %v987 = vstv %s986
        %v988 = vadd.f32 %v985, %v987
        %v989 = vmax.f32 %v988, 0.0
        %s990 = sld [smem:[#allocation3 + $0x160]]
        %v991 = vstv %s990
        %v992 = vmul.f32 %v991, %v989
        %v993 = vadd.f32 %v978, %v992
        %s994 = sld [smem:[#allocation3 + $0x180]]
        %v995 = vstv %s994
        %v996 = vmul.f32 %v995, %v989
        %v997 = vadd.f32 %v982, %v996
        %s998 = sld [smem:[#allocation3 + $0x121]]
        %v999 = vstv %s998
        %v1000 = vmul.f32 %v999, %v677
        %s1001 = sld [smem:[#allocation3 + $0x141]]
        %v1002 = vstv %s1001
        %v1003 = vadd.f32 %v1000, %v1002
        %v1004 = vmax.f32 %v1003, 0.0
        %s1005 = sld [smem:[#allocation3 + $0x161]]
        %v1006 = vstv %s1005
        %v1007 = vmul.f32 %v1006, %v1004
        %v1008 = vadd.f32 %v993, %v1007
        %s1009 = sld [smem:[#allocation3 + $0x181]]
        %v1010 = vstv %s1009
        %v1011 = vmul.f32 %v1010, %v1004
        %v1012 = vadd.f32 %v997, %v1011
        %s1013 = sld [smem:[#allocation3 + $0x122]]
        %v1014 = vstv %s1013
        %v1015 = vmul.f32 %v1014, %v677
        %s1016 = sld [smem:[#allocation3 + $0x142]]
        %v1017 = vstv %s1016
        %v1018 = vadd.f32 %v1015, %v1017
        %v1019 = vmax.f32 %v1018, 0.0
        %s1020 = sld [smem:[#allocation3 + $0x162]]
        %v1021 = vstv %s1020
        %v1022 = vmul.f32 %v1021, %v1019
        %v1023 = vadd.f32 %v1008, %v1022
        %s1024 = sld [smem:[#allocation3 + $0x182]]
        %v1025 = vstv %s1024
        %v1026 = vmul.f32 %v1025, %v1019
        %v1027 = vadd.f32 %v1012, %v1026
        %s1028 = sld [smem:[#allocation3 + $0x123]]
        %v1029 = vstv %s1028
        %v1030 = vmul.f32 %v1029, %v677
        %s1031 = sld [smem:[#allocation3 + $0x143]]
        %v1032 = vstv %s1031
        %v1033 = vadd.f32 %v1030, %v1032
        %v1034 = vmax.f32 %v1033, 0.0
        %s1035 = sld [smem:[#allocation3 + $0x163]]
        %v1036 = vstv %s1035
        %v1037 = vmul.f32 %v1036, %v1034
        %v1038 = vadd.f32 %v1023, %v1037
        %s1039 = sld [smem:[#allocation3 + $0x183]]
        %v1040 = vstv %s1039
        %v1041 = vmul.f32 %v1040, %v1034
        %v1042 = vadd.f32 %v1027, %v1041
        %s1043 = sld [smem:[#allocation3 + $0x124]]
        %v1044 = vstv %s1043
        %v1045 = vmul.f32 %v1044, %v677
        %s1046 = sld [smem:[#allocation3 + $0x144]]
        %v1047 = vstv %s1046
        %v1048 = vadd.f32 %v1045, %v1047
        %v1049 = vmax.f32 %v1048, 0.0
        %s1050 = sld [smem:[#allocation3 + $0x164]]
        %v1051 = vstv %s1050
        %v1052 = vmul.f32 %v1051, %v1049
        %v1053 = vadd.f32 %v1038, %v1052
        %s1054 = sld [smem:[#allocation3 + $0x184]]
        %v1055 = vstv %s1054
        %v1056 = vmul.f32 %v1055, %v1049
        %v1057 = vadd.f32 %v1042, %v1056
        %s1058 = sld [smem:[#allocation3 + $0x125]]
        %v1059 = vstv %s1058
        %v1060 = vmul.f32 %v1059, %v677
        %s1061 = sld [smem:[#allocation3 + $0x145]]
        %v1062 = vstv %s1061
        %v1063 = vadd.f32 %v1060, %v1062
        %v1064 = vmax.f32 %v1063, 0.0
        %s1065 = sld [smem:[#allocation3 + $0x165]]
        %v1066 = vstv %s1065
        %v1067 = vmul.f32 %v1066, %v1064
        %v1068 = vadd.f32 %v1053, %v1067
        %s1069 = sld [smem:[#allocation3 + $0x185]]
        %v1070 = vstv %s1069
        %v1071 = vmul.f32 %v1070, %v1064
        %v1072 = vadd.f32 %v1057, %v1071
        %s1073 = sld [smem:[#allocation3 + $0x126]]
        %v1074 = vstv %s1073
        %v1075 = vmul.f32 %v1074, %v677
        %s1076 = sld [smem:[#allocation3 + $0x146]]
        %v1077 = vstv %s1076
        %v1078 = vadd.f32 %v1075, %v1077
        %v1079 = vmax.f32 %v1078, 0.0
        %s1080 = sld [smem:[#allocation3 + $0x166]]
        %v1081 = vstv %s1080
        %v1082 = vmul.f32 %v1081, %v1079
        %v1083 = vadd.f32 %v1068, %v1082
        %s1084 = sld [smem:[#allocation3 + $0x186]]
        %v1085 = vstv %s1084
        %v1086 = vmul.f32 %v1085, %v1079
        %v1087 = vadd.f32 %v1072, %v1086
        %s1088 = sld [smem:[#allocation3 + $0x127]]
        %v1089 = vstv %s1088
        %v1090 = vmul.f32 %v1089, %v677
        %s1091 = sld [smem:[#allocation3 + $0x147]]
        %v1092 = vstv %s1091
        %v1093 = vadd.f32 %v1090, %v1092
        %v1094 = vmax.f32 %v1093, 0.0
        %s1095 = sld [smem:[#allocation3 + $0x167]]
        %v1096 = vstv %s1095
        %v1097 = vmul.f32 %v1096, %v1094
        %v1098 = vadd.f32 %v1083, %v1097
        %s1099 = sld [smem:[#allocation3 + $0x187]]
        %v1100 = vstv %s1099
        %v1101 = vmul.f32 %v1100, %v1094
        %v1102 = vadd.f32 %v1087, %v1101
        %s1103 = sld [smem:[#allocation3 + $0x128]]
        %v1104 = vstv %s1103
        %v1105 = vmul.f32 %v1104, %v677
        %s1106 = sld [smem:[#allocation3 + $0x148]]
        %v1107 = vstv %s1106
        %v1108 = vadd.f32 %v1105, %v1107
        %v1109 = vmax.f32 %v1108, 0.0
        %s1110 = sld [smem:[#allocation3 + $0x168]]
        %v1111 = vstv %s1110
        %v1112 = vmul.f32 %v1111, %v1109
        %v1113 = vadd.f32 %v1098, %v1112
        %s1114 = sld [smem:[#allocation3 + $0x188]]
        %v1115 = vstv %s1114
        %v1116 = vmul.f32 %v1115, %v1109
        %v1117 = vadd.f32 %v1102, %v1116
        %s1118 = sld [smem:[#allocation3 + $0x129]]
        %v1119 = vstv %s1118
        %v1120 = vmul.f32 %v1119, %v677
        %s1121 = sld [smem:[#allocation3 + $0x149]]
        %v1122 = vstv %s1121
        %v1123 = vadd.f32 %v1120, %v1122
        %v1124 = vmax.f32 %v1123, 0.0
        %s1125 = sld [smem:[#allocation3 + $0x169]]
        %v1126 = vstv %s1125
        %v1127 = vmul.f32 %v1126, %v1124
        %v1128 = vadd.f32 %v1113, %v1127
        %s1129 = sld [smem:[#allocation3 + $0x189]]
        %v1130 = vstv %s1129
        %v1131 = vmul.f32 %v1130, %v1124
        %v1132 = vadd.f32 %v1117, %v1131
        %s1133 = sld [smem:[#allocation3 + $0x12a]]
        %v1134 = vstv %s1133
        %v1135 = vmul.f32 %v1134, %v677
        %s1136 = sld [smem:[#allocation3 + $0x14a]]
        %v1137 = vstv %s1136
        %v1138 = vadd.f32 %v1135, %v1137
        %v1139 = vmax.f32 %v1138, 0.0
        %s1140 = sld [smem:[#allocation3 + $0x16a]]
        %v1141 = vstv %s1140
        %v1142 = vmul.f32 %v1141, %v1139
        %v1143 = vadd.f32 %v1128, %v1142
        %s1144 = sld [smem:[#allocation3 + $0x18a]]
        %v1145 = vstv %s1144
        %v1146 = vmul.f32 %v1145, %v1139
        %v1147 = vadd.f32 %v1132, %v1146
        %s1148 = sld [smem:[#allocation3 + $0x12b]]
        %v1149 = vstv %s1148
        %v1150 = vmul.f32 %v1149, %v677
        %s1151 = sld [smem:[#allocation3 + $0x14b]]
        %v1152 = vstv %s1151
        %v1153 = vadd.f32 %v1150, %v1152
        %v1154 = vmax.f32 %v1153, 0.0
        %s1155 = sld [smem:[#allocation3 + $0x16b]]
        %v1156 = vstv %s1155
        %v1157 = vmul.f32 %v1156, %v1154
        %v1158 = vadd.f32 %v1143, %v1157
        %s1159 = sld [smem:[#allocation3 + $0x18b]]
        %v1160 = vstv %s1159
        %v1161 = vmul.f32 %v1160, %v1154
        %v1162 = vadd.f32 %v1147, %v1161
        %v1163 = vtanh.pop %v1158
        %v1164 = vmul.f32 %v1163, 0.8
        %v1165 = vmul.f32 %v1164, 1.442695
        %v1166 = vpow.pop %v1165
        %v1167 = vmul.f32 %v183, %v1166
        %v1168 = vtanh.pop %v1162
        %v1169 = vmul.f32 %v1168, 0.8
        %v1170 = vmul.f32 %v1169, 1.442695
        %v1171 = vpow.pop %v1170
        %v1172 = vmul.f32 %v194, %v1171
        %s1173 = sld [smem:[#allocation3 + $0x10a]]
        %v1174 = vstv %s1173
        %s1175 = sld [smem:[#allocation3 + $0x10b]]
        %v1176 = vstv %s1175
        %s1177 = sld [smem:[#allocation3 + $0x8a]]
        %v1178 = vstv %s1177
        %v1179 = vmul.f32 %v1178, %v677
        %s1180 = sld [smem:[#allocation3 + $0xaa]]
        %v1181 = vstv %s1180
        %v1182 = vadd.f32 %v1179, %v1181
        %v1183 = vmax.f32 %v1182, 0.0
        %s1184 = sld [smem:[#allocation3 + $0xca]]
        %v1185 = vstv %s1184
        %v1186 = vmul.f32 %v1185, %v1183
        %v1187 = vadd.f32 %v1174, %v1186
        %s1188 = sld [smem:[#allocation3 + $0xea]]
        %v1189 = vstv %s1188
        %v1190 = vmul.f32 %v1189, %v1183
        %v1191 = vadd.f32 %v1176, %v1190
        %s1192 = sld [smem:[#allocation3 + $0x8b]]
        %v1193 = vstv %s1192
        %v1194 = vmul.f32 %v1193, %v677
        %s1195 = sld [smem:[#allocation3 + $0xab]]
        %v1196 = vstv %s1195
        %v1197 = vadd.f32 %v1194, %v1196
        %v1198 = vmax.f32 %v1197, 0.0
        %s1199 = sld [smem:[#allocation3 + $0xcb]]
        %v1200 = vstv %s1199
        %v1201 = vmul.f32 %v1200, %v1198
        %v1202 = vadd.f32 %v1187, %v1201
        %s1203 = sld [smem:[#allocation3 + $0xeb]]
        %v1204 = vstv %s1203
        %v1205 = vmul.f32 %v1204, %v1198
        %v1206 = vadd.f32 %v1191, %v1205
        %s1207 = sld [smem:[#allocation3 + $0x8c]]
        %v1208 = vstv %s1207
        %v1209 = vmul.f32 %v1208, %v677
        %s1210 = sld [smem:[#allocation3 + $0xac]]
        %v1211 = vstv %s1210
        %v1212 = vadd.f32 %v1209, %v1211
        %v1213 = vmax.f32 %v1212, 0.0
        %s1214 = sld [smem:[#allocation3 + $0xcc]]
        %v1215 = vstv %s1214
        %v1216 = vmul.f32 %v1215, %v1213
        %v1217 = vadd.f32 %v1202, %v1216
        %s1218 = sld [smem:[#allocation3 + $0xec]]
        %v1219 = vstv %s1218
        %v1220 = vmul.f32 %v1219, %v1213
        %v1221 = vadd.f32 %v1206, %v1220
        %s1222 = sld [smem:[#allocation3 + $0x8d]]
        %v1223 = vstv %s1222
        %v1224 = vmul.f32 %v1223, %v677
        %s1225 = sld [smem:[#allocation3 + $0xad]]
        %v1226 = vstv %s1225
        %v1227 = vadd.f32 %v1224, %v1226
        %v1228 = vmax.f32 %v1227, 0.0
        %s1229 = sld [smem:[#allocation3 + $0xcd]]
        %v1230 = vstv %s1229
        %v1231 = vmul.f32 %v1230, %v1228
        %v1232 = vadd.f32 %v1217, %v1231
        %s1233 = sld [smem:[#allocation3 + $0xed]]
        %v1234 = vstv %s1233
        %v1235 = vmul.f32 %v1234, %v1228
        %v1236 = vadd.f32 %v1221, %v1235
        %s1237 = sld [smem:[#allocation3 + $0x8e]]
        %v1238 = vstv %s1237
        %v1239 = vmul.f32 %v1238, %v677
        %s1240 = sld [smem:[#allocation3 + $0xae]]
        %v1241 = vstv %s1240
        %v1242 = vadd.f32 %v1239, %v1241
        %v1243 = vmax.f32 %v1242, 0.0
        %s1244 = sld [smem:[#allocation3 + $0xce]]
        %v1245 = vstv %s1244
        %v1246 = vmul.f32 %v1245, %v1243
        %v1247 = vadd.f32 %v1232, %v1246
        %s1248 = sld [smem:[#allocation3 + $0xee]]
        %v1249 = vstv %s1248
        %v1250 = vmul.f32 %v1249, %v1243
        %v1251 = vadd.f32 %v1236, %v1250
        %s1252 = sld [smem:[#allocation3 + $0x8f]]
        %v1253 = vstv %s1252
        %v1254 = vmul.f32 %v1253, %v677
        %s1255 = sld [smem:[#allocation3 + $0xaf]]
        %v1256 = vstv %s1255
        %v1257 = vadd.f32 %v1254, %v1256
        %v1258 = vmax.f32 %v1257, 0.0
        %s1259 = sld [smem:[#allocation3 + $0xcf]]
        %v1260 = vstv %s1259
        %v1261 = vmul.f32 %v1260, %v1258
        %v1262 = vadd.f32 %v1247, %v1261
        %s1263 = sld [smem:[#allocation3 + $0xef]]
        %v1264 = vstv %s1263
        %v1265 = vmul.f32 %v1264, %v1258
        %v1266 = vadd.f32 %v1251, %v1265
        %s1267 = sld [smem:[#allocation3 + $0x90]]
        %v1268 = vstv %s1267
        %v1269 = vmul.f32 %v1268, %v677
        %s1270 = sld [smem:[#allocation3 + $0xb0]]
        %v1271 = vstv %s1270
        %v1272 = vadd.f32 %v1269, %v1271
        %v1273 = vmax.f32 %v1272, 0.0
        %s1274 = sld [smem:[#allocation3 + $0xd0]]
        %v1275 = vstv %s1274
        %v1276 = vmul.f32 %v1275, %v1273
        %v1277 = vadd.f32 %v1262, %v1276
        %s1278 = sld [smem:[#allocation3 + $0xf0]]
        %v1279 = vstv %s1278
        %v1280 = vmul.f32 %v1279, %v1273
        %v1281 = vadd.f32 %v1266, %v1280
        %s1282 = sld [smem:[#allocation3 + $0x91]]
        %v1283 = vstv %s1282
        %v1284 = vmul.f32 %v1283, %v677
        %s1285 = sld [smem:[#allocation3 + $0xb1]]
        %v1286 = vstv %s1285
        %v1287 = vadd.f32 %v1284, %v1286
        %v1288 = vmax.f32 %v1287, 0.0
        %s1289 = sld [smem:[#allocation3 + $0xd1]]
        %v1290 = vstv %s1289
        %v1291 = vmul.f32 %v1290, %v1288
        %v1292 = vadd.f32 %v1277, %v1291
        %s1293 = sld [smem:[#allocation3 + $0xf1]]
        %v1294 = vstv %s1293
        %v1295 = vmul.f32 %v1294, %v1288
        %v1296 = vadd.f32 %v1281, %v1295
        %s1297 = sld [smem:[#allocation3 + $0x92]]
        %v1298 = vstv %s1297
        %v1299 = vmul.f32 %v1298, %v677
        %s1300 = sld [smem:[#allocation3 + $0xb2]]
        %v1301 = vstv %s1300
        %v1302 = vadd.f32 %v1299, %v1301
        %v1303 = vmax.f32 %v1302, 0.0
        %s1304 = sld [smem:[#allocation3 + $0xd2]]
        %v1305 = vstv %s1304
        %v1306 = vmul.f32 %v1305, %v1303
        %v1307 = vadd.f32 %v1292, %v1306
        %s1308 = sld [smem:[#allocation3 + $0xf2]]
        %v1309 = vstv %s1308
        %v1310 = vmul.f32 %v1309, %v1303
        %v1311 = vadd.f32 %v1296, %v1310
        %s1312 = sld [smem:[#allocation3 + $0x93]]
        %v1313 = vstv %s1312
        %v1314 = vmul.f32 %v1313, %v677
        %s1315 = sld [smem:[#allocation3 + $0xb3]]
        %v1316 = vstv %s1315
        %v1317 = vadd.f32 %v1314, %v1316
        %v1318 = vmax.f32 %v1317, 0.0
        %s1319 = sld [smem:[#allocation3 + $0xd3]]
        %v1320 = vstv %s1319
        %v1321 = vmul.f32 %v1320, %v1318
        %v1322 = vadd.f32 %v1307, %v1321
        %s1323 = sld [smem:[#allocation3 + $0xf3]]
        %v1324 = vstv %s1323
        %v1325 = vmul.f32 %v1324, %v1318
        %v1326 = vadd.f32 %v1311, %v1325
        %s1327 = sld [smem:[#allocation3 + $0x94]]
        %v1328 = vstv %s1327
        %v1329 = vmul.f32 %v1328, %v677
        %s1330 = sld [smem:[#allocation3 + $0xb4]]
        %v1331 = vstv %s1330
        %v1332 = vadd.f32 %v1329, %v1331
        %v1333 = vmax.f32 %v1332, 0.0
        %s1334 = sld [smem:[#allocation3 + $0xd4]]
        %v1335 = vstv %s1334
        %v1336 = vmul.f32 %v1335, %v1333
        %v1337 = vadd.f32 %v1322, %v1336
        %s1338 = sld [smem:[#allocation3 + $0xf4]]
        %v1339 = vstv %s1338
        %v1340 = vmul.f32 %v1339, %v1333
        %v1341 = vadd.f32 %v1326, %v1340
        %s1342 = sld [smem:[#allocation3 + $0x95]]
        %v1343 = vstv %s1342
        %v1344 = vmul.f32 %v1343, %v677
        %s1345 = sld [smem:[#allocation3 + $0xb5]]
        %v1346 = vstv %s1345
        %v1347 = vadd.f32 %v1344, %v1346
        %v1348 = vmax.f32 %v1347, 0.0
        %s1349 = sld [smem:[#allocation3 + $0xd5]]
        %v1350 = vstv %s1349
        %v1351 = vmul.f32 %v1350, %v1348
        %v1352 = vadd.f32 %v1337, %v1351
        %s1353 = sld [smem:[#allocation3 + $0xf5]]
        %v1354 = vstv %s1353
        %v1355 = vmul.f32 %v1354, %v1348
        %v1356 = vadd.f32 %v1341, %v1355
        %s1357 = sld [smem:[#allocation3 + $0x96]]
        %v1358 = vstv %s1357
        %v1359 = vmul.f32 %v1358, %v677
        %s1360 = sld [smem:[#allocation3 + $0xb6]]
        %v1361 = vstv %s1360
        %v1362 = vadd.f32 %v1359, %v1361
        %v1363 = vmax.f32 %v1362, 0.0
        %s1364 = sld [smem:[#allocation3 + $0xd6]]
        %v1365 = vstv %s1364
        %v1366 = vmul.f32 %v1365, %v1363
        %v1367 = vadd.f32 %v1352, %v1366
        %s1368 = sld [smem:[#allocation3 + $0xf6]]
        %v1369 = vstv %s1368
        %v1370 = vmul.f32 %v1369, %v1363
        %v1371 = vadd.f32 %v1356, %v1370
        %s1372 = sld [smem:[#allocation3 + $0x97]]
        %v1373 = vstv %s1372
        %v1374 = vmul.f32 %v1373, %v677
        %s1375 = sld [smem:[#allocation3 + $0xb7]]
        %v1376 = vstv %s1375
        %v1377 = vadd.f32 %v1374, %v1376
        %v1378 = vmax.f32 %v1377, 0.0
        %s1379 = sld [smem:[#allocation3 + $0xd7]]
        %v1380 = vstv %s1379
        %v1381 = vmul.f32 %v1380, %v1378
        %v1382 = vadd.f32 %v1367, %v1381
        %s1383 = sld [smem:[#allocation3 + $0xf7]]
        %v1384 = vstv %s1383
        %v1385 = vmul.f32 %v1384, %v1378
        %v1386 = vadd.f32 %v1371, %v1385
        %s1387 = sld [smem:[#allocation3 + $0x98]]
        %v1388 = vstv %s1387
        %v1389 = vmul.f32 %v1388, %v677
        %s1390 = sld [smem:[#allocation3 + $0xb8]]
        %v1391 = vstv %s1390
        %v1392 = vadd.f32 %v1389, %v1391
        %v1393 = vmax.f32 %v1392, 0.0
        %s1394 = sld [smem:[#allocation3 + $0xd8]]
        %v1395 = vstv %s1394
        %v1396 = vmul.f32 %v1395, %v1393
        %v1397 = vadd.f32 %v1382, %v1396
        %s1398 = sld [smem:[#allocation3 + $0xf8]]
        %v1399 = vstv %s1398
        %v1400 = vmul.f32 %v1399, %v1393
        %v1401 = vadd.f32 %v1386, %v1400
        %s1402 = sld [smem:[#allocation3 + $0x99]]
        %v1403 = vstv %s1402
        %v1404 = vmul.f32 %v1403, %v677
        %s1405 = sld [smem:[#allocation3 + $0xb9]]
        %v1406 = vstv %s1405
        %v1407 = vadd.f32 %v1404, %v1406
        %v1408 = vmax.f32 %v1407, 0.0
        %s1409 = sld [smem:[#allocation3 + $0xd9]]
        %v1410 = vstv %s1409
        %v1411 = vmul.f32 %v1410, %v1408
        %v1412 = vadd.f32 %v1397, %v1411
        %s1413 = sld [smem:[#allocation3 + $0xf9]]
        %v1414 = vstv %s1413
        %v1415 = vmul.f32 %v1414, %v1408
        %v1416 = vadd.f32 %v1401, %v1415
        %s1417 = sld [smem:[#allocation3 + $0x9a]]
        %v1418 = vstv %s1417
        %v1419 = vmul.f32 %v1418, %v677
        %s1420 = sld [smem:[#allocation3 + $0xba]]
        %v1421 = vstv %s1420
        %v1422 = vadd.f32 %v1419, %v1421
        %v1423 = vmax.f32 %v1422, 0.0
        %s1424 = sld [smem:[#allocation3 + $0xda]]
        %v1425 = vstv %s1424
        %v1426 = vmul.f32 %v1425, %v1423
        %v1427 = vadd.f32 %v1412, %v1426
        %s1428 = sld [smem:[#allocation3 + $0xfa]]
        %v1429 = vstv %s1428
        %v1430 = vmul.f32 %v1429, %v1423
        %v1431 = vadd.f32 %v1416, %v1430
        %s1432 = sld [smem:[#allocation3 + $0x9b]]
        %v1433 = vstv %s1432
        %v1434 = vmul.f32 %v1433, %v677
        %s1435 = sld [smem:[#allocation3 + $0xbb]]
        %v1436 = vstv %s1435
        %v1437 = vadd.f32 %v1434, %v1436
        %v1438 = vmax.f32 %v1437, 0.0
        %s1439 = sld [smem:[#allocation3 + $0xdb]]
        %v1440 = vstv %s1439
        %v1441 = vmul.f32 %v1440, %v1438
        %v1442 = vadd.f32 %v1427, %v1441
        %s1443 = sld [smem:[#allocation3 + $0xfb]]
        %v1444 = vstv %s1443
        %v1445 = vmul.f32 %v1444, %v1438
        %v1446 = vadd.f32 %v1431, %v1445
        %s1447 = sld [smem:[#allocation3 + $0x9c]]
        %v1448 = vstv %s1447
        %v1449 = vmul.f32 %v1448, %v677
        %s1450 = sld [smem:[#allocation3 + $0xbc]]
        %v1451 = vstv %s1450
        %v1452 = vadd.f32 %v1449, %v1451
        %v1453 = vmax.f32 %v1452, 0.0
        %s1454 = sld [smem:[#allocation3 + $0xdc]]
        %v1455 = vstv %s1454
        %v1456 = vmul.f32 %v1455, %v1453
        %v1457 = vadd.f32 %v1442, %v1456
        %s1458 = sld [smem:[#allocation3 + $0xfc]]
        %v1459 = vstv %s1458
        %v1460 = vmul.f32 %v1459, %v1453
        %v1461 = vadd.f32 %v1446, %v1460
        %s1462 = sld [smem:[#allocation3 + $0x9d]]
        %v1463 = vstv %s1462
        %v1464 = vmul.f32 %v1463, %v677
        %s1465 = sld [smem:[#allocation3 + $0xbd]]
        %v1466 = vstv %s1465
        %v1467 = vadd.f32 %v1464, %v1466
        %v1468 = vmax.f32 %v1467, 0.0
        %s1469 = sld [smem:[#allocation3 + $0xdd]]
        %v1470 = vstv %s1469
        %v1471 = vmul.f32 %v1470, %v1468
        %v1472 = vadd.f32 %v1457, %v1471
        %s1473 = sld [smem:[#allocation3 + $0xfd]]
        %v1474 = vstv %s1473
        %v1475 = vmul.f32 %v1474, %v1468
        %v1476 = vadd.f32 %v1461, %v1475
        %s1477 = sld [smem:[#allocation3 + $0x9e]]
        %v1478 = vstv %s1477
        %v1479 = vmul.f32 %v1478, %v677
        %s1480 = sld [smem:[#allocation3 + $0xbe]]
        %v1481 = vstv %s1480
        %v1482 = vadd.f32 %v1479, %v1481
        %v1483 = vmax.f32 %v1482, 0.0
        %s1484 = sld [smem:[#allocation3 + $0xde]]
        %v1485 = vstv %s1484
        %v1486 = vmul.f32 %v1485, %v1483
        %v1487 = vadd.f32 %v1472, %v1486
        %s1488 = sld [smem:[#allocation3 + $0xfe]]
        %v1489 = vstv %s1488
        %v1490 = vmul.f32 %v1489, %v1483
        %v1491 = vadd.f32 %v1476, %v1490
        %s1492 = sld [smem:[#allocation3 + $0x9f]]
        %v1493 = vstv %s1492
        %v1494 = vmul.f32 %v1493, %v677
        %s1495 = sld [smem:[#allocation3 + $0xbf]]
        %v1496 = vstv %s1495
        %v1497 = vadd.f32 %v1494, %v1496
        %v1498 = vmax.f32 %v1497, 0.0
        %s1499 = sld [smem:[#allocation3 + $0xdf]]
        %v1500 = vstv %s1499
        %v1501 = vmul.f32 %v1500, %v1498
        %v1502 = vadd.f32 %v1487, %v1501
        %s1503 = sld [smem:[#allocation3 + $0xff]]
        %v1504 = vstv %s1503
        %v1505 = vmul.f32 %v1504, %v1498
        %v1506 = vadd.f32 %v1491, %v1505
        %s1507 = sld [smem:[#allocation3 + $0xa0]]
        %v1508 = vstv %s1507
        %v1509 = vmul.f32 %v1508, %v677
        %s1510 = sld [smem:[#allocation3 + $0xc0]]
        %v1511 = vstv %s1510
        %v1512 = vadd.f32 %v1509, %v1511
        %v1513 = vmax.f32 %v1512, 0.0
        %s1514 = sld [smem:[#allocation3 + $0xe0]]
        %v1515 = vstv %s1514
        %v1516 = vmul.f32 %v1515, %v1513
        %v1517 = vadd.f32 %v1502, %v1516
        %s1518 = sld [smem:[#allocation3 + $0x100]]
        %v1519 = vstv %s1518
        %v1520 = vmul.f32 %v1519, %v1513
        %v1521 = vadd.f32 %v1506, %v1520
        %s1522 = sld [smem:[#allocation3 + $0xa1]]
        %v1523 = vstv %s1522
        %v1524 = vmul.f32 %v1523, %v677
        %s1525 = sld [smem:[#allocation3 + $0xc1]]
        %v1526 = vstv %s1525
        %v1527 = vadd.f32 %v1524, %v1526
        %v1528 = vmax.f32 %v1527, 0.0
        %s1529 = sld [smem:[#allocation3 + $0xe1]]
        %v1530 = vstv %s1529
        %v1531 = vmul.f32 %v1530, %v1528
        %v1532 = vadd.f32 %v1517, %v1531
        %s1533 = sld [smem:[#allocation3 + $0x101]]
        %v1534 = vstv %s1533
        %v1535 = vmul.f32 %v1534, %v1528
        %v1536 = vadd.f32 %v1521, %v1535
        %s1537 = sld [smem:[#allocation3 + $0xa2]]
        %v1538 = vstv %s1537
        %v1539 = vmul.f32 %v1538, %v677
        %s1540 = sld [smem:[#allocation3 + $0xc2]]
        %v1541 = vstv %s1540
        %v1542 = vadd.f32 %v1539, %v1541
        %v1543 = vmax.f32 %v1542, 0.0
        %s1544 = sld [smem:[#allocation3 + $0xe2]]
        %v1545 = vstv %s1544
        %v1546 = vmul.f32 %v1545, %v1543
        %v1547 = vadd.f32 %v1532, %v1546
        %s1548 = sld [smem:[#allocation3 + $0x102]]
        %v1549 = vstv %s1548
        %v1550 = vmul.f32 %v1549, %v1543
        %v1551 = vadd.f32 %v1536, %v1550
        %s1552 = sld [smem:[#allocation3 + $0xa3]]
        %v1553 = vstv %s1552
        %v1554 = vmul.f32 %v1553, %v677
        %s1555 = sld [smem:[#allocation3 + $0xc3]]
        %v1556 = vstv %s1555
        %v1557 = vadd.f32 %v1554, %v1556
        %v1558 = vmax.f32 %v1557, 0.0
        %s1559 = sld [smem:[#allocation3 + $0xe3]]
        %v1560 = vstv %s1559
        %v1561 = vmul.f32 %v1560, %v1558
        %v1562 = vadd.f32 %v1547, %v1561
        %s1563 = sld [smem:[#allocation3 + $0x103]]
        %v1564 = vstv %s1563
        %v1565 = vmul.f32 %v1564, %v1558
        %v1566 = vadd.f32 %v1551, %v1565
        %s1567 = sld [smem:[#allocation3 + $0xa4]]
        %v1568 = vstv %s1567
        %v1569 = vmul.f32 %v1568, %v677
        %s1570 = sld [smem:[#allocation3 + $0xc4]]
        %v1571 = vstv %s1570
        %v1572 = vadd.f32 %v1569, %v1571
        %v1573 = vmax.f32 %v1572, 0.0
        %s1574 = sld [smem:[#allocation3 + $0xe4]]
        %v1575 = vstv %s1574
        %v1576 = vmul.f32 %v1575, %v1573
        %v1577 = vadd.f32 %v1562, %v1576
        %s1578 = sld [smem:[#allocation3 + $0x104]]
        %v1579 = vstv %s1578
        %v1580 = vmul.f32 %v1579, %v1573
        %v1581 = vadd.f32 %v1566, %v1580
        %s1582 = sld [smem:[#allocation3 + $0xa5]]
        %v1583 = vstv %s1582
        %v1584 = vmul.f32 %v1583, %v677
        %s1585 = sld [smem:[#allocation3 + $0xc5]]
        %v1586 = vstv %s1585
        %v1587 = vadd.f32 %v1584, %v1586
        %v1588 = vmax.f32 %v1587, 0.0
        %s1589 = sld [smem:[#allocation3 + $0xe5]]
        %v1590 = vstv %s1589
        %v1591 = vmul.f32 %v1590, %v1588
        %v1592 = vadd.f32 %v1577, %v1591
        %s1593 = sld [smem:[#allocation3 + $0x105]]
        %v1594 = vstv %s1593
        %v1595 = vmul.f32 %v1594, %v1588
        %v1596 = vadd.f32 %v1581, %v1595
        %s1597 = sld [smem:[#allocation3 + $0xa6]]
        %v1598 = vstv %s1597
        %v1599 = vmul.f32 %v1598, %v677
        %s1600 = sld [smem:[#allocation3 + $0xc6]]
        %v1601 = vstv %s1600
        %v1602 = vadd.f32 %v1599, %v1601
        %v1603 = vmax.f32 %v1602, 0.0
        %s1604 = sld [smem:[#allocation3 + $0xe6]]
        %v1605 = vstv %s1604
        %v1606 = vmul.f32 %v1605, %v1603
        %v1607 = vadd.f32 %v1592, %v1606
        %s1608 = sld [smem:[#allocation3 + $0x106]]
        %v1609 = vstv %s1608
        %v1610 = vmul.f32 %v1609, %v1603
        %v1611 = vadd.f32 %v1596, %v1610
        %s1612 = sld [smem:[#allocation3 + $0xa7]]
        %v1613 = vstv %s1612
        %v1614 = vmul.f32 %v1613, %v677
        %s1615 = sld [smem:[#allocation3 + $0xc7]]
        %v1616 = vstv %s1615
        %v1617 = vadd.f32 %v1614, %v1616
        %v1618 = vmax.f32 %v1617, 0.0
        %s1619 = sld [smem:[#allocation3 + $0xe7]]
        %v1620 = vstv %s1619
        %v1621 = vmul.f32 %v1620, %v1618
        %v1622 = vadd.f32 %v1607, %v1621
        %s1623 = sld [smem:[#allocation3 + $0x107]]
        %v1624 = vstv %s1623
        %v1625 = vmul.f32 %v1624, %v1618
        %v1626 = vadd.f32 %v1611, %v1625
        %s1627 = sld [smem:[#allocation3 + $0xa8]]
        %v1628 = vstv %s1627
        %v1629 = vmul.f32 %v1628, %v677
        %s1630 = sld [smem:[#allocation3 + $0xc8]]
        %v1631 = vstv %s1630
        %v1632 = vadd.f32 %v1629, %v1631
        %v1633 = vmax.f32 %v1632, 0.0
        %s1634 = sld [smem:[#allocation3 + $0xe8]]
        %v1635 = vstv %s1634
        %v1636 = vmul.f32 %v1635, %v1633
        %v1637 = vadd.f32 %v1622, %v1636
        %s1638 = sld [smem:[#allocation3 + $0x108]]
        %v1639 = vstv %s1638
        %v1640 = vmul.f32 %v1639, %v1633
        %v1641 = vadd.f32 %v1626, %v1640
        %s1642 = sld [smem:[#allocation3 + $0xa9]]
        %v1643 = vstv %s1642
        %v1644 = vmul.f32 %v1643, %v677
        %s1645 = sld [smem:[#allocation3 + $0xc9]]
        %v1646 = vstv %s1645
        %v1647 = vadd.f32 %v1644, %v1646
        %v1648 = vmax.f32 %v1647, 0.0
        %s1649 = sld [smem:[#allocation3 + $0xe9]]
        %v1650 = vstv %s1649
        %v1651 = vmul.f32 %v1650, %v1648
        %v1652 = vadd.f32 %v1637, %v1651
        %s1653 = sld [smem:[#allocation3 + $0x109]]
        %v1654 = vstv %s1653
        %v1655 = vmul.f32 %v1654, %v1648
        %v1656 = vadd.f32 %v1641, %v1655
        %v1657 = vadd.f32 %v1167, %v1652
        %s1658 = scalar_lea.vmem %s156, 2 [#allocation7]
        %1659 = vst [vmem:[%s1658] sm:$0x3] %v1657
        %v1660 = vadd.f32 %v1172, %v1656
        %s1661 = scalar_lea.vmem %s156, 4 [#allocation7]
        %1662 = vst [vmem:[%s1661] sm:$0x3] %v1660
        %s1663 = sand.u32 %s73, 1
        %s1664 = scalar_lea.sflag [#allocation6], %s1663
        %s1665 = sand.u32 %s73, 1
        %s1666 = smul.addr %s1665, 6
        %s1667 = scalar_lea.vmem [#allocation7], %s1666
        // Predicated region
        $region29: #{tpu_custom_call.1} parent=23 // pred_check
          %p1668 = pneg %p83
        $region30: #{tpu_custom_call.1} parent=23 // pred_check_branch
          %1670 = sbr.rel (%p1668) target = $region32
        $region31: #{tpu_custom_call.1} parent=23 // pred_region
          %s1672 = ssub.s32 96, 96
          %1673 = vsyncadd %s1664, %s1672
          %s1674 = smul.addr %s27, 3
          %s1675 = sadd.s32 %s28, %s1674
          %s1676 = smul.addr %s1675, 32
          %s1677 = scalar_lea.hbm %s2, %s1676
          %s1678 = sshll.u32 %s1667, 4
          %s1679 = int_to_ptr.vmem [resolvable:$true] %s1678
          %1684 = dma.vmem_to_hbm [thread:$0]  %s1679, 96, %s1677, %s1664, 32, 32, 2
        $region32: #{tpu_custom_call.1} parent=23 // pred_fallthru
          _
      $region24: #{tpu_custom_call.1} parent=5 // pred_fallthru
        _
      %p1685 = scmp.le.s32.totalorder 2, %s18
      // Predicated region
      $region33: #{tpu_custom_call.1} parent=5 // pred_check
        %p1686 = pneg %p1685
      $region34: #{tpu_custom_call.1} parent=5 // pred_check_branch
        %1688 = sbr.rel (%p1686) target = $region36
      $region35: #{tpu_custom_call.1} parent=5 // pred_region
        %s1689 = ssub.s32 %s18, 2
        // Predicated region
        $region37: #{tpu_custom_call.1} parent=35 // pred_check
          %p1690 = pneg %p89
        $region38: #{tpu_custom_call.1} parent=35 // pred_check_branch
          %1692 = sbr.rel (%p1690) target = $region40
        $region39: #{tpu_custom_call.1} parent=35 // pred_region
          %s1693 = sand.u32 %s74, 1
          %s1694 = scalar_lea.sflag [#allocation6], %s1693
          %s1695 = sand.u32 %s74, 1
          %s1696 = smul.addr %s1695, 6
          %s1697 = scalar_lea.vmem [#allocation7], %s1696
          %1698 = dma.done %s1694, 96
        $region40: #{tpu_custom_call.1} parent=35 // pred_fallthru
          _
      $region36: #{tpu_custom_call.1} parent=5 // pred_fallthru
        _
    $region6: #{tpu_custom_call.1} parent=1 // loop_footer
      %s22 = sadd.s32 1, %s18
    $region7: #{tpu_custom_call.1} parent=1 // loop_footer_branch
      %17 = sbr.rel target = $region3
    $region8: #{tpu_custom_call.1} parent=1 // loop_exit
      _
    %1699 = vsyncpa [#allocation5], 1
    %s1700 = scalar_lea.sflag [#allocation5], 1
    %1701 = vsyncpa %s1700, 1
    %1702 = vsyncpa [#allocation6], 1
    %s1703 = scalar_lea.sflag [#allocation6], 1
    %1704 = vsyncpa %s1703, 1

</llo_original>
